<compile_context>
chip_gen: v7x
topology: tpu7x:2x2x1
jax: 0.10.0
libtpu: 0.0.40
codegen_flags: <defaults>
</compile_context>

<pallas_src>
import functools

import jax
import jax.numpy as jnp
from jax.experimental import pallas as pl
from jax.experimental.pallas import tpu as pltpu


def _round_up(x, m):
    return ((x + m - 1) // m) * m


def _vmem_capacity_bytes():
    try:
        return int(pltpu.get_tpu_info().vmem_capacity_bytes)
    except Exception:
        return 64 * 1024 * 1024                       # conservative (v7x) fallback


def _vmem_limit(est_bytes, cap):
    lim = max(int(1.5 * est_bytes), 32 * 1024 * 1024)
    return int(min(lim, int(cap * 0.75)))


def _masked_layer_norm(xb, gamma, beta, c_true, eps):
    """Two-pass LayerNorm over the last dim; exact when lanes >= c_true are zero padding."""
    c_pad = xb.shape[-1]
    if c_pad != c_true:
        lane = jax.lax.broadcasted_iota(jnp.int32, xb.shape, xb.ndim - 1)
        valid = lane < c_true
        xz = jnp.where(valid, xb, 0.0)
    else:
        valid = None
        xz = xb
    inv_c = 1.0 / float(c_true)
    mu = jnp.sum(xz, axis=-1, keepdims=True) * inv_c
    diff = xb - mu
    if valid is not None:
        diff = jnp.where(valid, diff, 0.0)
    var = jnp.sum(diff * diff, axis=-1, keepdims=True) * inv_c   # two-pass variance
    xn = diff * jax.lax.rsqrt(var + eps)
    return xn * gamma + beta                                     # padded lanes stay 0


# --------------------------------------------------------------------------- #
# Kernel 1: y = x + MHA(LayerNorm(x))   (flash-style causal attention)
# --------------------------------------------------------------------------- #
def _ln_flash_mha_kernel(xq_ref, xk_ref, g_ref, beta_ref, wq_ref, wk_ref, wv_ref,
                         wp_ref, bp_ref, o_ref, qn_ref, m_ref, l_ref, acc_ref,
                         *, n_heads, head_size, c_true, tq, tk, eps):
    i = pl.program_id(1)          # query-tile index   (parallel)
    j = pl.program_id(2)          # key/value-tile idx (reduction)

    @pl.when(j == 0)
    def _init():
        # LN + fused full-width Q projection for this query tile, cached in VMEM.
        xqn = _masked_layer_norm(xq_ref[...].astype(jnp.float32),
                                 g_ref[...], beta_ref[...], c_true, eps)
        qn_ref[...] = jnp.dot(xqn.astype(wq_ref.dtype), wq_ref[...],
                              preferred_element_type=jnp.float32)
        m_ref[...] = jnp.full_like(m_ref, -jnp.inf)
        l_ref[...] = jnp.zeros_like(l_ref)
        acc_ref[...] = jnp.zeros_like(acc_ref)

    # Causal skip: kv tiles that lie entirely in the future contribute nothing.
    @pl.when(j * tk <= i * tq + (tq - 1))
    def _compute():
        xkn = _masked_layer_norm(xk_ref[...].astype(jnp.float32),
                                 g_ref[...], beta_ref[...], c_true, eps)
        xkn = xkn.astype(wk_ref.dtype)
        # Fused full-width K/V projections (MXU N-dim = C, not head_size).
        k_all = jnp.dot(xkn, wk_ref[...], preferred_element_type=jnp.float32)
        v_all = jnp.dot(xkn, wv_ref[...], preferred_element_type=jnp.float32)
        qn = qn_ref[...]

        row = i * tq + jax.lax.broadcasted_iota(jnp.int32, (tq, tk), 0)
        col = j * tk + jax.lax.broadcasted_iota(jnp.int32, (tq, tk), 1)
        causal = row >= col

        scale = float(head_size) ** -0.5
        # Static head loop covers only scores/softmax/PV; per-head state lives in
        # the m/l/acc scratch refs, so the unroll does not inflate live ranges.
        for h in range(n_heads):
            sl = slice(h * head_size, (h + 1) * head_size)
            s = jax.lax.dot_general(qn[:, sl], k_all[:, sl],
                                    (((1,), (1,)), ((), ())),
                                    preferred_element_type=jnp.float32) * scale
            # tq == tk guarantees every row of a processed tile has >= 1 valid col,
            # so the finite mask value never leaks through exp().
            s = jnp.where(causal, s, -1e30)
            m_prev = m_ref[h]
            m_new = jnp.maximum(m_prev, jnp.max(s, axis=-1, keepdims=True))
            alpha = jnp.exp(m_prev - m_new)
            p = jnp.exp(s - m_new)
            l_ref[h] = alpha * l_ref[h] + jnp.sum(p, axis=-1, keepdims=True)
            acc_ref[h] = alpha * acc_ref[h] + jnp.dot(
                p.astype(v_all.dtype), v_all[:, sl],
                preferred_element_type=jnp.float32)
            m_ref[h] = m_new

    @pl.when(j == pl.num_programs(2) - 1)
    def _finalize():
        att = jnp.zeros(o_ref.shape, jnp.float32)
        for h in range(n_heads):
            inv_l = pl.reciprocal(l_ref[h], approx=True)        # EUP, frees VALU
            oh = acc_ref[h] * inv_l
            # concat(heads) @ Wproj == sum_h head_h @ Wproj[h*hs:(h+1)*hs, :]
            att += jnp.dot(oh.astype(wp_ref.dtype), wp_ref[h],
                           preferred_element_type=jnp.float32)
        y = xq_ref[...].astype(jnp.float32) + att + bp_ref[...]
        o_ref[...] = y.astype(o_ref.dtype)      # residual; Dropout(eval) == identity


def mha_block(xp, g, beta, wq, wk, wv, w_proj, b_proj, *, c_true, tile_t, eps=1e-5):
    """y = x + MultiHeadAttention(LayerNorm(x)); causal mask, eval-mode dropout.

    `xp` is (B, T_pad, C_pad), zero-padded beyond (T, c_true); the padded lanes
    of the output stay exactly zero.
    """
    B, T_pad, C_pad = xp.shape
    C = c_true
    n_heads, cin, hs = wq.shape
    assert cin == C and n_heads * hs == C
    assert T_pad % tile_t == 0
    tq = tk = tile_t

    pad_c = ((0, 0), (0, C_pad - C))

    def fuse(w):   # (n_heads, C, hs) -> (C_pad, C_pad), heads concatenated on N
        wf = jnp.transpose(w, (1, 0, 2)).reshape(C, C)
        return jnp.pad(wf, ((0, C_pad - C), (0, C_pad - C)))

    wq_all, wk_all, wv_all = fuse(wq), fuse(wk), fuse(wv)
    wp_split = jnp.pad(w_proj.reshape(n_heads, hs, C),
                       ((0, 0), (0, 0), (0, C_pad - C)))
    g2 = jnp.pad(g.reshape(1, C), pad_c)
    beta2 = jnp.pad(beta.reshape(1, C), pad_c)
    bp2 = jnp.pad(b_proj.reshape(1, C), pad_c)

    cap = _vmem_capacity_bytes()
    itm = xp.dtype.itemsize
    witm = wq_all.dtype.itemsize
    est = ((2 * tq + 2 * tk + 2 * tq) * C_pad * itm           # xq/xk/out tiles (dbl buf)
           + (3 * C_pad + n_heads * hs) * C_pad * witm        # resident weights (Buffered(1))
           + 3 * C_pad * 4                                    # LN params + proj bias
           + tq * C_pad * 4                                   # Q-projection scratch
           + n_heads * tq * (hs + 2 * 128) * 4)               # acc + m + l scratch
    # TODO(synk): for very large C (resident QKV/proj weights > ~1/3 of VMEM on
    # v7x) stream the weights over a reduction grid axis like the FFN kernel,
    # or feed them in bf16 (matmuls already accumulate in f32).
    vmem_limit = _vmem_limit(est, cap)

    const = pl.Buffered(1)        # constant-index operands: single buffered
    kernel = functools.partial(_ln_flash_mha_kernel, n_heads=n_heads,
                               head_size=hs, c_true=C, tq=tq, tk=tk, eps=eps)
    return pl.pallas_call(
        kernel,
        out_shape=jax.ShapeDtypeStruct((B, T_pad, C_pad), xp.dtype),
        grid_spec=pltpu.PrefetchScalarGridSpec(
            num_scalar_prefetch=0,
            grid=(B, T_pad // tq, T_pad // tk),
            in_specs=[
                pl.BlockSpec((None, tq, C_pad), lambda b, i, j: (b, i, 0)),   # x (q rows)
                pl.BlockSpec((None, tk, C_pad), lambda b, i, j: (b, j, 0)),   # x (kv rows)
                pl.BlockSpec((1, C_pad), lambda b, i, j: (0, 0), pipeline_mode=const),
                pl.BlockSpec((1, C_pad), lambda b, i, j: (0, 0), pipeline_mode=const),
                pl.BlockSpec((C_pad, C_pad), lambda b, i, j: (0, 0), pipeline_mode=const),
                pl.BlockSpec((C_pad, C_pad), lambda b, i, j: (0, 0), pipeline_mode=const),
                pl.BlockSpec((C_pad, C_pad), lambda b, i, j: (0, 0), pipeline_mode=const),
                pl.BlockSpec((n_heads, hs, C_pad), lambda b, i, j: (0, 0, 0),
                             pipeline_mode=const),
                pl.BlockSpec((1, C_pad), lambda b, i, j: (0, 0), pipeline_mode=const),
            ],
            out_specs=pl.BlockSpec((None, tq, C_pad), lambda b, i, j: (b, i, 0)),
            scratch_shapes=[
                pltpu.VMEM((tq, C_pad), jnp.float32),        # Q projection cache
                pltpu.VMEM((n_heads, tq, 1), jnp.float32),   # running max  m
                pltpu.VMEM((n_heads, tq, 1), jnp.float32),   # running sum  l
                pltpu.VMEM((n_heads, tq, hs), jnp.float32),  # running numerator
            ],
        ),
        compiler_params=pltpu.CompilerParams(
            dimension_semantics=("parallel", "parallel", "arbitrary"),
            vmem_limit_bytes=vmem_limit,
        ),
    )(xp, xp, g2, beta2, wq_all, wk_all, wv_all, wp_split, bp2)


# --------------------------------------------------------------------------- #
# Kernel 2: y = x + FFN(LayerNorm(x))   (resident or hidden-dim-streamed MLP)
# --------------------------------------------------------------------------- #
def _ln_ffn_resident_kernel(x_ref, g_ref, beta_ref, w1_ref, b1_ref, w2_ref, b2_ref,
                            o_ref, *, c_true, eps):
    xb = x_ref[...].astype(jnp.float32)
    xn = _masked_layer_norm(xb, g_ref[...], beta_ref[...], c_true, eps)
    hid = jnp.dot(xn.astype(w1_ref.dtype), w1_ref[...],
                  preferred_element_type=jnp.float32) + b1_ref[...]
    hid = jnp.maximum(hid, 0.0)                              # ReLU
    y = xb + jnp.dot(hid.astype(w2_ref.dtype), w2_ref[...],
                     preferred_element_type=jnp.float32) + b2_ref[...]
    o_ref[...] = y.astype(o_ref.dtype)                       # Dropout(eval) == identity


def _ln_ffn_stream_kernel(x_ref, g_ref, beta_ref, w1_ref, b1_ref, w2_ref, b2_ref,
                          o_ref, xn_ref, acc_ref, *, c_true, eps):
    h = pl.program_id(1)

    @pl.when(h == 0)
    def _():
        xb = x_ref[...].astype(jnp.float32)
        xn = _masked_layer_norm(xb, g_ref[...], beta_ref[...], c_true, eps)
        xn_ref[...] = xn.astype(xn_ref.dtype)                # cached once in weight dtype
        acc_ref[...] = jnp.zeros_like(acc_ref)

    # Partial FFN for this hidden tile: relu(xn @ W1[:, ht] + b1[ht]) @ W2[ht, :]
    hid = jnp.dot(xn_ref[...], w1_ref[...],
                  preferred_element_type=jnp.float32) + b1_ref[...]
    hid = jnp.maximum(hid, 0.0)
    acc_ref[...] += jnp.dot(hid.astype(w2_ref.dtype), w2_ref[...],
                            preferred_element_type=jnp.float32)

    @pl.when(h == pl.num_programs(1) - 1)
    def _():
        y = x_ref[...].astype(jnp.float32) + acc_ref[...] + b2_ref[...]
        o_ref[...] = y.astype(o_ref.dtype)


def ffn_block(xp, g, beta, w1, b1, w2, b2, *, c_true, eps=1e-5, tm_max=512):
    """y = x + FeedForward(LayerNorm(x)); FFN = Linear -> ReLU -> Linear -> Dropout(eval)."""
    B, T_pad, C_pad = xp.shape
    C = c_true
    H = w1.shape[1]
    assert w1.shape == (C, H) and b1.shape == (H,)
    assert w2.shape == (H, C) and b2.shape == (C,)

    M = B * T_pad
    x2 = xp.reshape(M, C_pad)

    # Row tile: dtype-aware minimum (bf16 packs 16 sublanes), largest divisor of M.
    min_rows = 16 if xp.dtype.itemsize == 2 else 8
    tm = min(tm_max, _round_up(M, min_rows))
    tm = max(min_rows, (tm // min_rows) * min_rows)
    while tm > min_rows and M % tm != 0:
        tm -= min_rows
    M_pad = _round_up(M, tm)
    if M_pad != M:
        x2 = jnp.pad(x2, ((0, M_pad - M), (0, 0)))

    H_pad = _round_up(H, 128)
    pad_c = ((0, 0), (0, C_pad - C))
    g2 = jnp.pad(g.reshape(1, C), pad_c)
    beta2 = jnp.pad(beta.reshape(1, C), pad_c)
    w1p = jnp.pad(w1, ((0, C_pad - C), (0, H_pad - H)))
    b1p = jnp.pad(b1.reshape(1, H), ((0, 0), (0, H_pad - H)))
    w2p = jnp.pad(w2, ((0, H_pad - H), (0, C_pad - C)))
    b2p = jnp.pad(b2.reshape(1, C), pad_c)

    cap = _vmem_capacity_bytes()
    itm = xp.dtype.itemsize
    witm = w1p.dtype.itemsize
    resident_w_bytes = (2 * C_pad * H_pad + H_pad + C_pad) * witm
    const = pl.Buffered(1)
    kernel_args = (x2, g2, beta2, w1p, b1p, w2p, b2p)

    if resident_w_bytes <= cap // 3:
        # ---- Path A: W1/W2 fully resident -> compute-bound, no re-streaming. ----
        est = (resident_w_bytes + 4 * tm * C_pad * itm
               + 2 * tm * H_pad * 4 + 4 * C_pad * 4)
        grid_spec = pltpu.PrefetchScalarGridSpec(
            num_scalar_prefetch=0,
            grid=(M_pad // tm,),
            in_specs=[
                pl.BlockSpec((tm, C_pad), lambda i: (i, 0)),                  # x rows
                pl.BlockSpec((1, C_pad), lambda i: (0, 0), pipeline_mode=const),
                pl.BlockSpec((1, C_pad), lambda i: (0, 0), pipeline_mode=const),
                pl.BlockSpec((C_pad, H_pad), lambda i: (0, 0), pipeline_mode=const),
                pl.BlockSpec((1, H_pad), lambda i: (0, 0), pipeline_mode=const),
                pl.BlockSpec((H_pad, C_pad), lambda i: (0, 0), pipeline_mode=const),
                pl.BlockSpec((1, C_pad), lambda i: (0, 0), pipeline_mode=const),
            ],
            out_specs=pl.BlockSpec((tm, C_pad), lambda i: (i, 0)),
        )
        kernel = functools.partial(_ln_ffn_resident_kernel, c_true=C, eps=eps)
        dims = ("parallel",)
    else:
        # ---- Path B: stream W1/W2 over a hidden-dim reduction grid axis. ----
        th_max = 1024 if cap >= 96 * 1024 * 1024 else 256     # generation-aware tile
        th = next(t for t in (th_max, 512, 256, 128) if t <= H_pad and H_pad % t == 0)
        wbuf = pl.Buffered(3) if cap >= 96 * 1024 * 1024 else pl.Buffered(2)
        est = (4 * tm * C_pad * itm                           # x + out tiles (dbl buf)
               + 3 * (C_pad * th + th * C_pad) * witm         # streamed weight tiles
               + (th + 3 * C_pad) * 4                         # biases + LN params
               + tm * C_pad * (witm + 4))                     # xn + acc scratch
        grid_spec = pltpu.PrefetchScalarGridSpec(
            num_scalar_prefetch=0,
            grid=(M_pad // tm, H_pad // th),
            in_specs=[
                pl.BlockSpec((tm, C_pad), lambda i, h: (i, 0)),               # x rows
                pl.BlockSpec((1, C_pad), lambda i, h: (0, 0), pipeline_mode=const),
                pl.BlockSpec((1, C_pad), lambda i, h: (0, 0), pipeline_mode=const),
                pl.BlockSpec((C_pad, th), lambda i, h: (0, h), pipeline_mode=wbuf),
                pl.BlockSpec((1, th), lambda i, h: (0, h)),
                pl.BlockSpec((th, C_pad), lambda i, h: (h, 0), pipeline_mode=wbuf),
                pl.BlockSpec((1, C_pad), lambda i, h: (0, 0), pipeline_mode=const),
            ],
            out_specs=pl.BlockSpec((tm, C_pad), lambda i, h: (i, 0)),
            scratch_shapes=[
                pltpu.VMEM((tm, C_pad), w1p.dtype),       # cached LayerNorm(x)
                pltpu.VMEM((tm, C_pad), jnp.float32),     # f32 accumulator
            ],
        )
        kernel = functools.partial(_ln_ffn_stream_kernel, c_true=C, eps=eps)
        dims = ("parallel", "arbitrary")

    out = pl.pallas_call(
        kernel,
        out_shape=jax.ShapeDtypeStruct((M_pad, C_pad), xp.dtype),
        grid_spec=grid_spec,
        compiler_params=pltpu.CompilerParams(
            dimension_semantics=dims,
            vmem_limit_bytes=_vmem_limit(est, cap),
        ),
    )(*kernel_args)

    if M_pad != M:
        out = out[:M]
    return out.reshape(B, T_pad, C_pad)


# --------------------------------------------------------------------------- #
# Full Block forward
# --------------------------------------------------------------------------- #
@functools.partial(jax.jit, static_argnames=("attn_tile", "ffn_tm"))
def block_forward(x, p, *, attn_tile=128, ffn_tm=512):
    B, T, C = x.shape
    # Pad once for the whole Block: channels to a lane-dense multiple of 128 and
    # the sequence to a multiple of the attention tile.  Both kernels keep the
    # padded lanes exactly zero, so a single slice at the end suffices (no
    # per-kernel HBM pad/slice passes).
    tile_t = max(8, (min(attn_tile, _round_up(T, 8)) // 8) * 8)
    T_pad = _round_up(T, tile_t)
    C_pad = _round_up(C, 128)
    xp = x
    if (T_pad, C_pad) != (T, C):
        xp = jnp.pad(x, ((0, 0), (0, T_pad - T), (0, C_pad - C)))

    h = mha_block(xp, p["g_sa"], p["b_sa"], p["wq"], p["wk"], p["wv"],
                  p["wp"], p["bp"], c_true=C, tile_t=tile_t)
    out = ffn_block(h, p["g_ff"], p["b_ff"], p["w1"], p["b1"], p["w2"], p["b2"],
                    c_true=C, tm_max=ffn_tm)
    if (T_pad, C_pad) != (T, C):
        out = out[:, :T, :C]
    return out


# --------------------------------------------------------------------------- #
# Pure-JAX reference (mirrors the PyTorch Block in eval mode)
# --------------------------------------------------------------------------- #
def _layer_norm_ref(x, g, b, eps=1e-5):
    mu = jnp.mean(x, axis=-1, keepdims=True)
    var = jnp.mean(jnp.square(x - mu), axis=-1, keepdims=True)
    return (x - mu) / jnp.sqrt(var + eps) * g + b


def ref_block(x, p, eps=1e-5):
    B, T, C = x.shape
    n_heads, _, hs = p["wq"].shape
    xn = _layer_norm_ref(x, p["g_sa"], p["b_sa"], eps)
    mask = jnp.tril(jnp.ones((T, T), dtype=bool))
    heads = []
    for h in range(n_heads):
        q = xn @ p["wq"][h]
        k = xn @ p["wk"][h]
        v = xn @ p["wv"][h]
        s = jnp.einsum("btd,bsd->bts", q, k) * (hs ** -0.5)
        s = jnp.where(mask, s, -jnp.inf)
        a = jax.nn.softmax(s, axis=-1)
        heads.append(jnp.einsum("bts,bsd->btd", a, v))
    att = jnp.concatenate(heads, axis=-1) @ p["wp"] + p["bp"]
    x = x + att
    xn = _layer_norm_ref(x, p["g_ff"], p["b_ff"], eps)
    ff = jnp.maximum(xn @ p["w1"] + p["b1"], 0.0) @ p["w2"] + p["b2"]
    return x + ff


if __name__ == "__main__":
    key = jax.random.PRNGKey(0)
    B, T, C, n_heads = 2, 16, 32, 4          # block_size = T = 16, head_size = 8
    hs = C // n_heads
    H = 4 * C

    ks = jax.random.split(key, 14)

    def uni(k, shape, fan_in):
        bound = 1.0 / (fan_in ** 0.5)
        return jax.random.uniform(k, shape, jnp.float32, -bound, bound)

    x = jax.random.normal(ks[0], (B, T, C), jnp.float32)
    params = {
        "g_sa": 1.0 + 0.1 * jax.random.normal(ks[1], (C,), jnp.float32),
        "b_sa": 0.1 * jax.random.normal(ks[2], (C,), jnp.float32),
        "wq": uni(ks[3], (n_heads, C, hs), C),
        "wk": uni(ks[4], (n_heads, C, hs), C),
        "wv": uni(ks[5], (n_heads, C, hs), C),
        "wp": uni(ks[6], (C, C), C),
        "bp": uni(ks[7], (C,), C),
        "g_ff": 1.0 + 0.1 * jax.random.normal(ks[8], (C,), jnp.float32),
        "b_ff": 0.1 * jax.random.normal(ks[9], (C,), jnp.float32),
        "w1": uni(ks[10], (C, H), C),
        "b1": uni(ks[11], (H,), C),
        "w2": uni(ks[12], (H, C), H),
        "b2": uni(ks[13], (C,), H),
    }

    # attn_tile=8 -> attention grid (B, 2, 2): exercises the multi-tile online
    # softmax, the causal kv-tile skip, and the channel-padding (32 -> 128) path.
    y = block_forward(x, params, attn_tile=8)
    y = jax.block_until_ready(y)

    y_ref = ref_block(x, params)
    assert y.shape == (B, T, C)
    err = float(jnp.max(jnp.abs(y - y_ref)))
    # Slightly looser tolerance: pl.reciprocal(approx=True) in the softmax.
    assert jnp.allclose(y, y_ref, atol=2e-3, rtol=2e-3), f"max abs err = {err}"

    print("KERNEL_OK")
</pallas_src>

<mosaic_0001>
module attributes {stable_mosaic.version = 11 : i64} {
  func.func @_ln_ffn_resident_kernel(%arg0: i32, %arg1: memref<32x128xf32, #tpu.memory_space<vmem>>, %arg2: memref<1x128xf32, #tpu.memory_space<vmem>>, %arg3: memref<1x128xf32, #tpu.memory_space<vmem>>, %arg4: memref<128x128xf32, #tpu.memory_space<vmem>>, %arg5: memref<1x128xf32, #tpu.memory_space<vmem>>, %arg6: memref<128x128xf32, #tpu.memory_space<vmem>>, %arg7: memref<1x128xf32, #tpu.memory_space<vmem>>, %arg8: memref<32x128xf32, #tpu.memory_space<vmem>>) attributes {dimension_semantics = [#tpu.dimension_semantics<parallel>], iteration_bounds = array<i64: 1>, scalar_prefetch = 0 : i64, scratch_operands = 0 : i64, tpu.core_type = #tpu.core_type<tc>, window_params = [{transform_indices = @transform_0, window_bounds = array<i64: 32, 128>}, {pipeline_mode = #tpu.pipeline_mode<synchronous>, transform_indices = @transform_1, window_bounds = array<i64: 1, 128>}, {pipeline_mode = #tpu.pipeline_mode<synchronous>, transform_indices = @transform_2, window_bounds = array<i64: 1, 128>}, {pipeline_mode = #tpu.pipeline_mode<synchronous>, transform_indices = @transform_3, window_bounds = array<i64: 128, 128>}, {pipeline_mode = #tpu.pipeline_mode<synchronous>, transform_indices = @transform_4, window_bounds = array<i64: 1, 128>}, {pipeline_mode = #tpu.pipeline_mode<synchronous>, transform_indices = @transform_5, window_bounds = array<i64: 128, 128>}, {pipeline_mode = #tpu.pipeline_mode<synchronous>, transform_indices = @transform_6, window_bounds = array<i64: 1, 128>}, {transform_indices = @transform_7, window_bounds = array<i64: 32, 128>}]} {
    %c0 = arith.constant 0 : index
    %c0_0 = arith.constant 0 : index
    %0 = vector.load %arg1[%c0, %c0_0] : memref<32x128xf32, #tpu.memory_space<vmem>>, vector<32x128xf32>
    %c0_1 = arith.constant 0 : index
    %c0_2 = arith.constant 0 : index
    %1 = vector.load %arg2[%c0_1, %c0_2] : memref<1x128xf32, #tpu.memory_space<vmem>>, vector<1x128xf32>
    %c0_3 = arith.constant 0 : index
    %c0_4 = arith.constant 0 : index
    %2 = vector.load %arg3[%c0_3, %c0_4] : memref<1x128xf32, #tpu.memory_space<vmem>>, vector<1x128xf32>
    %3 = tpu.iota {dimensions = array<i32: 1>} : vector<32x128xi32>
    %c32_i32 = arith.constant 32 : i32
    %4 = vector.broadcast %c32_i32 : i32 to vector<32x128xi32>
    %5 = arith.cmpi slt, %3, %4 : vector<32x128xi32>
    %cst = arith.constant 0.000000e+00 : f32
    %6 = vector.broadcast %cst : f32 to vector<32x128xf32>
    %7 = arith.select %5, %0, %6 : vector<32x128xi1>, vector<32x128xf32>
    %cst_5 = arith.constant dense<0.000000e+00> : vector<32xf32>
    %8 = vector.multi_reduction <add>, %7, %cst_5 [1] : vector<32x128xf32> to vector<32xf32>
    %9 = vector.shape_cast %8 : vector<32xf32> to vector<32x1xf32>
    %cst_6 = arith.constant 3.125000e-02 : f32
    %10 = vector.broadcast %cst_6 : f32 to vector<32x1xf32>
    %11 = arith.mulf %9, %10 : vector<32x1xf32>
    %12 = vector.broadcast %11 : vector<32x1xf32> to vector<32x128xf32>
    %13 = arith.subf %0, %12 : vector<32x128xf32>
    %cst_7 = arith.constant 0.000000e+00 : f32
    %14 = vector.broadcast %cst_7 : f32 to vector<32x128xf32>
    %15 = arith.select %5, %13, %14 : vector<32x128xi1>, vector<32x128xf32>
    %16 = arith.mulf %15, %15 : vector<32x128xf32>
    %cst_8 = arith.constant dense<0.000000e+00> : vector<32xf32>
    %17 = vector.multi_reduction <add>, %16, %cst_8 [1] : vector<32x128xf32> to vector<32xf32>
    %18 = vector.shape_cast %17 : vector<32xf32> to vector<32x1xf32>
    %cst_9 = arith.constant 3.125000e-02 : f32
    %19 = vector.broadcast %cst_9 : f32 to vector<32x1xf32>
    %20 = arith.mulf %18, %19 : vector<32x1xf32>
    %cst_10 = arith.constant 9.99999974E-6 : f32
    %21 = vector.broadcast %cst_10 : f32 to vector<32x1xf32>
    %22 = arith.addf %20, %21 : vector<32x1xf32>
    %23 = math.rsqrt %22 : vector<32x1xf32>
    %24 = vector.broadcast %23 : vector<32x1xf32> to vector<32x128xf32>
    %25 = arith.mulf %15, %24 : vector<32x128xf32>
    %26 = vector.broadcast %1 : vector<1x128xf32> to vector<32x128xf32>
    %27 = arith.mulf %25, %26 : vector<32x128xf32>
    %28 = vector.broadcast %2 : vector<1x128xf32> to vector<32x128xf32>
    %29 = arith.addf %27, %28 : vector<32x128xf32>
    %c0_11 = arith.constant 0 : index
    %c0_12 = arith.constant 0 : index
    %30 = vector.load %arg4[%c0_11, %c0_12] : memref<128x128xf32, #tpu.memory_space<vmem>>, vector<128x128xf32>
    %cst_13 = arith.constant dense<0.000000e+00> : vector<32x128xf32>
    %31 = tpu.matmul %29, %30, %cst_13 {dimension_numbers = #tpu.dot_dimension_numbers<[1], [0], [0], [1], [0, 0, 1, 1], [], []>} : vector<32x128xf32>, vector<128x128xf32>, vector<32x128xf32> -> vector<32x128xf32>
    %c0_14 = arith.constant 0 : index
    %c0_15 = arith.constant 0 : index
    %32 = vector.load %arg5[%c0_14, %c0_15] : memref<1x128xf32, #tpu.memory_space<vmem>>, vector<1x128xf32>
    %33 = vector.broadcast %32 : vector<1x128xf32> to vector<32x128xf32>
    %34 = arith.addf %31, %33 : vector<32x128xf32>
    %cst_16 = arith.constant 0.000000e+00 : f32
    %35 = vector.broadcast %cst_16 : f32 to vector<32x128xf32>
    %36 = arith.maximumf %34, %35 : vector<32x128xf32>
    %c0_17 = arith.constant 0 : index
    %c0_18 = arith.constant 0 : index
    %37 = vector.load %arg6[%c0_17, %c0_18] : memref<128x128xf32, #tpu.memory_space<vmem>>, vector<128x128xf32>
    %cst_19 = arith.constant dense<0.000000e+00> : vector<32x128xf32>
    %38 = tpu.matmul %36, %37, %cst_19 {dimension_numbers = #tpu.dot_dimension_numbers<[1], [0], [0], [1], [0, 0, 1, 1], [], []>} : vector<32x128xf32>, vector<128x128xf32>, vector<32x128xf32> -> vector<32x128xf32>
    %39 = arith.addf %0, %38 : vector<32x128xf32>
    %c0_20 = arith.constant 0 : index
    %c0_21 = arith.constant 0 : index
    %40 = vector.load %arg7[%c0_20, %c0_21] : memref<1x128xf32, #tpu.memory_space<vmem>>, vector<1x128xf32>
    %41 = vector.broadcast %40 : vector<1x128xf32> to vector<32x128xf32>
    %42 = arith.addf %39, %41 : vector<32x128xf32>
    %c0_22 = arith.constant 0 : index
    %c0_23 = arith.constant 0 : index
    %43 = vector.load %arg8[%c0_22, %c0_23] : memref<32x128xf32, #tpu.memory_space<vmem>>, vector<32x128xf32>
    tpu.vector_store %arg8[%c0_22, %c0_23], %42 {strides = array<i32>} : memref<32x128xf32, #tpu.memory_space<vmem>>, vector<32x128xf32>,
    return
  }
  func.func @transform_0(%arg0: i32) -> (i32, i32) {
    %c0_i32 = arith.constant 0 : i32
    %c0_i32_0 = arith.constant 0 : i32
    return %arg0, %c0_i32 : i32, i32
  }
  func.func @transform_1(%arg0: i32) -> (i32, i32) {
    %c0_i32 = arith.constant 0 : i32
    %c0_i32_0 = arith.constant 0 : i32
    %c0_i32_1 = arith.constant 0 : i32
    return %c0_i32, %c0_i32_0 : i32, i32
  }
  func.func @transform_2(%arg0: i32) -> (i32, i32) {
    %c0_i32 = arith.constant 0 : i32
    %c0_i32_0 = arith.constant 0 : i32
    %c0_i32_1 = arith.constant 0 : i32
    return %c0_i32, %c0_i32_0 : i32, i32
  }
  func.func @transform_3(%arg0: i32) -> (i32, i32) {
    %c0_i32 = arith.constant 0 : i32
    %c0_i32_0 = arith.constant 0 : i32
    %c0_i32_1 = arith.constant 0 : i32
    return %c0_i32, %c0_i32_0 : i32, i32
  }
  func.func @transform_4(%arg0: i32) -> (i32, i32) {
    %c0_i32 = arith.constant 0 : i32
    %c0_i32_0 = arith.constant 0 : i32
    %c0_i32_1 = arith.constant 0 : i32
    return %c0_i32, %c0_i32_0 : i32, i32
  }
  func.func @transform_5(%arg0: i32) -> (i32, i32) {
    %c0_i32 = arith.constant 0 : i32
    %c0_i32_0 = arith.constant 0 : i32
    %c0_i32_1 = arith.constant 0 : i32
    return %c0_i32, %c0_i32_0 : i32, i32
  }
  func.func @transform_6(%arg0: i32) -> (i32, i32) {
    %c0_i32 = arith.constant 0 : i32
    %c0_i32_0 = arith.constant 0 : i32
    %c0_i32_1 = arith.constant 0 : i32
    return %c0_i32, %c0_i32_0 : i32, i32
  }
  func.func @transform_7(%arg0: i32) -> (i32, i32) {
    %c0_i32 = arith.constant 0 : i32
    %c0_i32_0 = arith.constant 0 : i32
    return %arg0, %c0_i32 : i32, i32
  }
}

module attributes {stable_mosaic.version = 11 : i64} {
  func.func @_ln_flash_mha_kernel(%arg0: i32, %arg1: i32, %arg2: i32, %arg3: memref<1x8x128xf32, #tpu.memory_space<vmem>>, %arg4: memref<1x8x128xf32, #tpu.memory_space<vmem>>, %arg5: memref<1x128xf32, #tpu.memory_space<vmem>>, %arg6: memref<1x128xf32, #tpu.memory_space<vmem>>, %arg7: memref<128x128xf32, #tpu.memory_space<vmem>>, %arg8: memref<128x128xf32, #tpu.memory_space<vmem>>, %arg9: memref<128x128xf32, #tpu.memory_space<vmem>>, %arg10: memref<4x8x128xf32, #tpu.memory_space<vmem>>, %arg11: memref<1x128xf32, #tpu.memory_space<vmem>>, %arg12: memref<1x8x128xf32, #tpu.memory_space<vmem>>, %arg13: memref<8x128xf32, #tpu.memory_space<vmem>>, %arg14: memref<4x8x1xf32, #tpu.memory_space<vmem>>, %arg15: memref<4x8x1xf32, #tpu.memory_space<vmem>>, %arg16: memref<4x8x8xf32, #tpu.memory_space<vmem>>) attributes {dimension_semantics = [#tpu.dimension_semantics<parallel>, #tpu.dimension_semantics<parallel>, #tpu.dimension_semantics<arbitrary>], iteration_bounds = array<i64: 2, 2, 2>, scalar_prefetch = 0 : i64, scratch_operands = 4 : i64, tpu.core_type = #tpu.core_type<tc>, window_params = [{transform_indices = @transform_0, window_bounds = array<i64: 1, 8, 128>}, {transform_indices = @transform_1, window_bounds = array<i64: 1, 8, 128>}, {pipeline_mode = #tpu.pipeline_mode<synchronous>, transform_indices = @transform_2, window_bounds = array<i64: 1, 128>}, {pipeline_mode = #tpu.pipeline_mode<synchronous>, transform_indices = @transform_3, window_bounds = array<i64: 1, 128>}, {pipeline_mode = #tpu.pipeline_mode<synchronous>, transform_indices = @transform_4, window_bounds = array<i64: 128, 128>}, {pipeline_mode = #tpu.pipeline_mode<synchronous>, transform_indices = @transform_5, window_bounds = array<i64: 128, 128>}, {pipeline_mode = #tpu.pipeline_mode<synchronous>, transform_indices = @transform_6, window_bounds = array<i64: 128, 128>}, {pipeline_mode = #tpu.pipeline_mode<synchronous>, transform_indices = @transform_7, window_bounds = array<i64: 4, 8, 128>}, {pipeline_mode = #tpu.pipeline_mode<synchronous>, transform_indices = @transform_8, window_bounds = array<i64: 1, 128>}, {transform_indices = @transform_9, window_bounds = array<i64: 1, 8, 128>}]} {
    %c0_i32 = arith.constant 0 : i32
    %0 = arith.cmpi eq, %arg2, %c0_i32 : i32
    %1 = arith.extui %0 : i1 to i32
    %c0_i32_0 = arith.constant 0 : i32
    %2 = arith.cmpi ne, %1, %c0_i32_0 : i32
    scf.if %2 {
      %c0 = arith.constant 0 : index
      %c0_4 = arith.constant 0 : index
      %c0_5 = arith.constant 0 : index
      %12 = vector.load %arg3[%c0, %c0_4, %c0_5] : memref<1x8x128xf32, #tpu.memory_space<vmem>>, vector<1x8x128xf32>
      %13 = vector.shape_cast %12 : vector<1x8x128xf32> to vector<8x128xf32>
      %c0_6 = arith.constant 0 : index
      %c0_7 = arith.constant 0 : index
      %14 = vector.load %arg5[%c0_6, %c0_7] : memref<1x128xf32, #tpu.memory_space<vmem>>, vector<1x128xf32>
      %c0_8 = arith.constant 0 : index
      %c0_9 = arith.constant 0 : index
      %15 = vector.load %arg6[%c0_8, %c0_9] : memref<1x128xf32, #tpu.memory_space<vmem>>, vector<1x128xf32>
      %16 = tpu.iota {dimensions = array<i32: 1>} : vector<8x128xi32>
      %c32_i32 = arith.constant 32 : i32
      %17 = vector.broadcast %c32_i32 : i32 to vector<8x128xi32>
      %18 = arith.cmpi slt, %16, %17 : vector<8x128xi32>
      %cst = arith.constant 0.000000e+00 : f32
      %19 = vector.broadcast %cst : f32 to vector<8x128xf32>
      %20 = arith.select %18, %13, %19 : vector<8x128xi1>, vector<8x128xf32>
      %cst_10 = arith.constant dense<0.000000e+00> : vector<8xf32>
      %21 = vector.multi_reduction <add>, %20, %cst_10 [1] : vector<8x128xf32> to vector<8xf32>
      %22 = vector.shape_cast %21 : vector<8xf32> to vector<8x1xf32>
      %cst_11 = arith.constant 3.125000e-02 : f32
      %23 = vector.broadcast %cst_11 : f32 to vector<8x1xf32>
      %24 = arith.mulf %22, %23 : vector<8x1xf32>
      %25 = vector.broadcast %24 : vector<8x1xf32> to vector<8x128xf32>
      %26 = arith.subf %13, %25 : vector<8x128xf32>
      %cst_12 = arith.constant 0.000000e+00 : f32
      %27 = vector.broadcast %cst_12 : f32 to vector<8x128xf32>
      %28 = arith.select %18, %26, %27 : vector<8x128xi1>, vector<8x128xf32>
      %29 = arith.mulf %28, %28 : vector<8x128xf32>
      %cst_13 = arith.constant dense<0.000000e+00> : vector<8xf32>
      %30 = vector.multi_reduction <add>, %29, %cst_13 [1] : vector<8x128xf32> to vector<8xf32>
      %31 = vector.shape_cast %30 : vector<8xf32> to vector<8x1xf32>
      %cst_14 = arith.constant 3.125000e-02 : f32
      %32 = vector.broadcast %cst_14 : f32 to vector<8x1xf32>
      %33 = arith.mulf %31, %32 : vector<8x1xf32>
      %cst_15 = arith.constant 9.99999974E-6 : f32
      %34 = vector.broadcast %cst_15 : f32 to vector<8x1xf32>
      %35 = arith.addf %33, %34 : vector<8x1xf32>
      %36 = math.rsqrt %35 : vector<8x1xf32>
      %37 = vector.broadcast %36 : vector<8x1xf32> to vector<8x128xf32>
      %38 = arith.mulf %28, %37 : vector<8x128xf32>
      %39 = vector.broadcast %14 : vector<1x128xf32> to vector<8x128xf32>
      %40 = arith.mulf %38, %39 : vector<8x128xf32>
      %41 = vector.broadcast %15 : vector<1x128xf32> to vector<8x128xf32>
      %42 = arith.addf %40, %41 : vector<8x128xf32>
      %c0_16 = arith.constant 0 : index
      %c0_17 = arith.constant 0 : index
      %43 = vector.load %arg7[%c0_16, %c0_17] : memref<128x128xf32, #tpu.memory_space<vmem>>, vector<128x128xf32>
      %cst_18 = arith.constant dense<0.000000e+00> : vector<8x128xf32>
      %44 = tpu.matmul %42, %43, %cst_18 {dimension_numbers = #tpu.dot_dimension_numbers<[1], [0], [0], [1], [0, 0, 1, 1], [], []>} : vector<8x128xf32>, vector<128x128xf32>, vector<8x128xf32> -> vector<8x128xf32>
      %c0_19 = arith.constant 0 : index
      %c0_20 = arith.constant 0 : index
      %45 = vector.load %arg13[%c0_19, %c0_20] : memref<8x128xf32, #tpu.memory_space<vmem>>, vector<8x128xf32>
      tpu.vector_store %arg13[%c0_19, %c0_20], %44 {strides = array<i32>} : memref<8x128xf32, #tpu.memory_space<vmem>>, vector<8x128xf32>,
      %cst_21 = arith.constant 0xFF800000 : f32
      %46 = vector.broadcast %cst_21 : f32 to vector<4x8x1xf32>
      %c0_22 = arith.constant 0 : index
      %c0_23 = arith.constant 0 : index
      %c0_24 = arith.constant 0 : index
      %47 = vector.load %arg14[%c0_22, %c0_23, %c0_24] : memref<4x8x1xf32, #tpu.memory_space<vmem>>, vector<4x8x1xf32>
      tpu.vector_store %arg14[%c0_22, %c0_23, %c0_24], %46 {strides = array<i32>} : memref<4x8x1xf32, #tpu.memory_space<vmem>>, vector<4x8x1xf32>,
      %cst_25 = arith.constant 0.000000e+00 : f32
      %48 = vector.broadcast %cst_25 : f32 to vector<4x8x1xf32>
      %c0_26 = arith.constant 0 : index
      %c0_27 = arith.constant 0 : index
      %c0_28 = arith.constant 0 : index
      %49 = vector.load %arg15[%c0_26, %c0_27, %c0_28] : memref<4x8x1xf32, #tpu.memory_space<vmem>>, vector<4x8x1xf32>
      tpu.vector_store %arg15[%c0_26, %c0_27, %c0_28], %48 {strides = array<i32>} : memref<4x8x1xf32, #tpu.memory_space<vmem>>, vector<4x8x1xf32>,
      %cst_29 = arith.constant 0.000000e+00 : f32
      %50 = vector.broadcast %cst_29 : f32 to vector<4x8x8xf32>
      %c0_30 = arith.constant 0 : index
      %c0_31 = arith.constant 0 : index
      %c0_32 = arith.constant 0 : index
      %51 = vector.load %arg16[%c0_30, %c0_31, %c0_32] : memref<4x8x8xf32, #tpu.memory_space<vmem>>, vector<4x8x8xf32>
      tpu.vector_store %arg16[%c0_30, %c0_31, %c0_32], %50 {strides = array<i32>} : memref<4x8x8xf32, #tpu.memory_space<vmem>>, vector<4x8x8xf32>,
    } else {
    }
    %c8_i32 = arith.constant 8 : i32
    %3 = arith.muli %arg2, %c8_i32 : i32
    %c8_i32_1 = arith.constant 8 : i32
    %4 = arith.muli %arg1, %c8_i32_1 : i32
    %c7_i32 = arith.constant 7 : i32
    %5 = arith.addi %4, %c7_i32 : i32
    %6 = arith.cmpi sle, %3, %5 : i32
    %7 = arith.extui %6 : i1 to i32
    %c0_i32_2 = arith.constant 0 : i32
    %8 = arith.cmpi ne, %7, %c0_i32_2 : i32
    scf.if %8 {
      %c0 = arith.constant 0 : index
      %c0_4 = arith.constant 0 : index
      %c0_5 = arith.constant 0 : index
      %12 = vector.load %arg4[%c0, %c0_4, %c0_5] : memref<1x8x128xf32, #tpu.memory_space<vmem>>, vector<1x8x128xf32>
      %13 = vector.shape_cast %12 : vector<1x8x128xf32> to vector<8x128xf32>
      %c0_6 = arith.constant 0 : index
      %c0_7 = arith.constant 0 : index
      %14 = vector.load %arg5[%c0_6, %c0_7] : memref<1x128xf32, #tpu.memory_space<vmem>>, vector<1x128xf32>
      %c0_8 = arith.constant 0 : index
      %c0_9 = arith.constant 0 : index
      %15 = vector.load %arg6[%c0_8, %c0_9] : memref<1x128xf32, #tpu.memory_space<vmem>>, vector<1x128xf32>
      %16 = tpu.iota {dimensions = array<i32: 1>} : vector<8x128xi32>
      %c32_i32 = arith.constant 32 : i32
      %17 = vector.broadcast %c32_i32 : i32 to vector<8x128xi32>
      %18 = arith.cmpi slt, %16, %17 : vector<8x128xi32>
      %cst = arith.constant 0.000000e+00 : f32
      %19 = vector.broadcast %cst : f32 to vector<8x128xf32>
      %20 = arith.select %18, %13, %19 : vector<8x128xi1>, vector<8x128xf32>
      %cst_10 = arith.constant dense<0.000000e+00> : vector<8xf32>
      %21 = vector.multi_reduction <add>, %20, %cst_10 [1] : vector<8x128xf32> to vector<8xf32>
      %22 = vector.shape_cast %21 : vector<8xf32> to vector<8x1xf32>
      %cst_11 = arith.constant 3.125000e-02 : f32
      %23 = vector.broadcast %cst_11 : f32 to vector<8x1xf32>
      %24 = arith.mulf %22, %23 : vector<8x1xf32>
      %25 = vector.broadcast %24 : vector<8x1xf32> to vector<8x128xf32>
      %26 = arith.subf %13, %25 : vector<8x128xf32>
      %cst_12 = arith.constant 0.000000e+00 : f32
      %27 = vector.broadcast %cst_12 : f32 to vector<8x128xf32>
      %28 = arith.select %18, %26, %27 : vector<8x128xi1>, vector<8x128xf32>
      %29 = arith.mulf %28, %28 : vector<8x128xf32>
      %cst_13 = arith.constant dense<0.000000e+00> : vector<8xf32>
      %30 = vector.multi_reduction <add>, %29, %cst_13 [1] : vector<8x128xf32> to vector<8xf32>
      %31 = vector.shape_cast %30 : vector<8xf32> to vector<8x1xf32>
      %cst_14 = arith.constant 3.125000e-02 : f32
      %32 = vector.broadcast %cst_14 : f32 to vector<8x1xf32>
      %33 = arith.mulf %31, %32 : vector<8x1xf32>
      %cst_15 = arith.constant 9.99999974E-6 : f32
      %34 = vector.broadcast %cst_15 : f32 to vector<8x1xf32>
      %35 = arith.addf %33, %34 : vector<8x1xf32>
      %36 = math.rsqrt %35 : vector<8x1xf32>
      %37 = vector.broadcast %36 : vector<8x1xf32> to vector<8x128xf32>
      %38 = arith.mulf %28, %37 : vector<8x128xf32>
      %39 = vector.broadcast %14 : vector<1x128xf32> to vector<8x128xf32>
      %40 = arith.mulf %38, %39 : vector<8x128xf32>
      %41 = vector.broadcast %15 : vector<1x128xf32> to vector<8x128xf32>
      %42 = arith.addf %40, %41 : vector<8x128xf32>
      %c0_16 = arith.constant 0 : index
      %c0_17 = arith.constant 0 : index
      %43 = vector.load %arg8[%c0_16, %c0_17] : memref<128x128xf32, #tpu.memory_space<vmem>>, vector<128x128xf32>
      %cst_18 = arith.constant dense<0.000000e+00> : vector<8x128xf32>
      %44 = tpu.matmul %42, %43, %cst_18 {dimension_numbers = #tpu.dot_dimension_numbers<[1], [0], [0], [1], [0, 0, 1, 1], [], []>} : vector<8x128xf32>, vector<128x128xf32>, vector<8x128xf32> -> vector<8x128xf32>
      %c0_19 = arith.constant 0 : index
      %c0_20 = arith.constant 0 : index
      %45 = vector.load %arg9[%c0_19, %c0_20] : memref<128x128xf32, #tpu.memory_space<vmem>>, vector<128x128xf32>
      %cst_21 = arith.constant dense<0.000000e+00> : vector<8x128xf32>
      %46 = tpu.matmul %42, %45, %cst_21 {dimension_numbers = #tpu.dot_dimension_numbers<[1], [0], [0], [1], [0, 0, 1, 1], [], []>} : vector<8x128xf32>, vector<128x128xf32>, vector<8x128xf32> -> vector<8x128xf32>
      %c0_22 = arith.constant 0 : index
      %c0_23 = arith.constant 0 : index
      %47 = vector.load %arg13[%c0_22, %c0_23] : memref<8x128xf32, #tpu.memory_space<vmem>>, vector<8x128xf32>
      %c8_i32_24 = arith.constant 8 : i32
      %48 = arith.muli %arg1, %c8_i32_24 : i32
      %49 = tpu.iota {dimensions = array<i32: 0>} : vector<8x8xi32>
      %50 = vector.broadcast %48 : i32 to vector<8x8xi32>
      %51 = arith.addi %50, %49 : vector<8x8xi32>
      %c8_i32_25 = arith.constant 8 : i32
      %52 = arith.muli %arg2, %c8_i32_25 : i32
      %53 = tpu.iota {dimensions = array<i32: 1>} : vector<8x8xi32>
      %54 = vector.broadcast %52 : i32 to vector<8x8xi32>
      %55 = arith.addi %54, %53 : vector<8x8xi32>
      %56 = arith.cmpi sge, %51, %55 : vector<8x8xi32>
      %57 = vector.extract_strided_slice %47 {offsets = [0, 0], sizes = [8, 8], strides = [1, 1]} : vector<8x128xf32> to vector<8x8xf32>
      %58 = vector.extract_strided_slice %44 {offsets = [0, 0], sizes = [8, 8], strides = [1, 1]} : vector<8x128xf32> to vector<8x8xf32>
      %cst_26 = arith.constant dense<0.000000e+00> : vector<8x8xf32>
      %59 = tpu.matmul %57, %58, %cst_26 {dimension_numbers = #tpu.dot_dimension_numbers<[1], [1], [0], [0], [0, 0, 1, 0], [], []>} : vector<8x8xf32>, vector<8x8xf32>, vector<8x8xf32> -> vector<8x8xf32>
      %cst_27 = arith.constant 0.353553385 : f32
      %60 = vector.broadcast %cst_27 : f32 to vector<8x8xf32>
      %61 = arith.mulf %59, %60 : vector<8x8xf32>
      %cst_28 = arith.constant -1.000000e+30 : f32
      %62 = vector.broadcast %cst_28 : f32 to vector<8x8xf32>
      %63 = arith.select %56, %61, %62 : vector<8x8xi1>, vector<8x8xf32>
      %c0_29 = arith.constant 0 : index
      %c0_30 = arith.constant 0 : index
      %c0_31 = arith.constant 0 : index
      %64 = vector.load %arg14[%c0_29, %c0_30, %c0_31] : memref<4x8x1xf32, #tpu.memory_space<vmem>>, vector<1x8x1xf32>
      %65 = vector.shape_cast %64 : vector<1x8x1xf32> to vector<8x1xf32>
      %cst_32 = arith.constant dense<0xFF800000> : vector<8xf32>
      %66 = vector.multi_reduction <maximumf>, %63, %cst_32 [1] : vector<8x8xf32> to vector<8xf32>
      %67 = vector.shape_cast %66 : vector<8xf32> to vector<8x1xf32>
      %68 = arith.maximumf %65, %67 : vector<8x1xf32>
      %69 = arith.subf %65, %68 : vector<8x1xf32>
      %70 = math.exp %69 : vector<8x1xf32>
      %71 = vector.broadcast %68 : vector<8x1xf32> to vector<8x8xf32>
      %72 = arith.subf %63, %71 : vector<8x8xf32>
      %73 = math.exp %72 : vector<8x8xf32>
      %c0_33 = arith.constant 0 : index
      %c0_34 = arith.constant 0 : index
      %c0_35 = arith.constant 0 : index
      %74 = vector.load %arg15[%c0_33, %c0_34, %c0_35] : memref<4x8x1xf32, #tpu.memory_space<vmem>>, vector<1x8x1xf32>
      %75 = vector.shape_cast %74 : vector<1x8x1xf32> to vector<8x1xf32>
      %76 = arith.mulf %70, %75 : vector<8x1xf32>
      %cst_36 = arith.constant dense<0.000000e+00> : vector<8xf32>
      %77 = vector.multi_reduction <add>, %73, %cst_36 [1] : vector<8x8xf32> to vector<8xf32>
      %78 = vector.shape_cast %77 : vector<8xf32> to vector<8x1xf32>
      %79 = arith.addf %76, %78 : vector<8x1xf32>
      %c0_37 = arith.constant 0 : index
      %c0_38 = arith.constant 0 : index
      %c0_39 = arith.constant 0 : index
      %80 = vector.load %arg15[%c0_37, %c0_38, %c0_39] : memref<4x8x1xf32, #tpu.memory_space<vmem>>, vector<1x8x1xf32>
      %81 = vector.shape_cast %80 : vector<1x8x1xf32> to vector<8x1xf32>
      %82 = vector.shape_cast %79 : vector<8x1xf32> to vector<1x8x1xf32>
      tpu.vector_store %arg15[%c0_37, %c0_38, %c0_39], %82 {strides = array<i32>} : memref<4x8x1xf32, #tpu.memory_space<vmem>>, vector<1x8x1xf32>,
      %c0_40 = arith.constant 0 : index
      %c0_41 = arith.constant 0 : index
      %c0_42 = arith.constant 0 : index
      %83 = vector.load %arg16[%c0_40, %c0_41, %c0_42] : memref<4x8x8xf32, #tpu.memory_space<vmem>>, vector<1x8x8xf32>
      %84 = vector.shape_cast %83 : vector<1x8x8xf32> to vector<8x8xf32>
      %85 = vector.broadcast %70 : vector<8x1xf32> to vector<8x8xf32>
      %86 = arith.mulf %85, %84 : vector<8x8xf32>
      %87 = vector.extract_strided_slice %46 {offsets = [0, 0], sizes = [8, 8], strides = [1, 1]} : vector<8x128xf32> to vector<8x8xf32>
      %cst_43 = arith.constant dense<0.000000e+00> : vector<8x8xf32>
      %88 = tpu.matmul %73, %87, %cst_43 {dimension_numbers = #tpu.dot_dimension_numbers<[1], [0], [0], [1], [0, 0, 1, 1], [], []>} : vector<8x8xf32>, vector<8x8xf32>, vector<8x8xf32> -> vector<8x8xf32>
      %89 = arith.addf %86, %88 : vector<8x8xf32>
      %c0_44 = arith.constant 0 : index
      %c0_45 = arith.constant 0 : index
      %c0_46 = arith.constant 0 : index
      %90 = vector.load %arg16[%c0_44, %c0_45, %c0_46] : memref<4x8x8xf32, #tpu.memory_space<vmem>>, vector<1x8x8xf32>
      %91 = vector.shape_cast %90 : vector<1x8x8xf32> to vector<8x8xf32>
      %92 = vector.shape_cast %89 : vector<8x8xf32> to vector<1x8x8xf32>
      tpu.vector_store %arg16[%c0_44, %c0_45, %c0_46], %92 {strides = array<i32>} : memref<4x8x8xf32, #tpu.memory_space<vmem>>, vector<1x8x8xf32>,
      %c0_47 = arith.constant 0 : index
      %c0_48 = arith.constant 0 : index
      %c0_49 = arith.constant 0 : index
      %93 = vector.load %arg14[%c0_47, %c0_48, %c0_49] : memref<4x8x1xf32, #tpu.memory_space<vmem>>, vector<1x8x1xf32>
      %94 = vector.shape_cast %93 : vector<1x8x1xf32> to vector<8x1xf32>
      %95 = vector.shape_cast %68 : vector<8x1xf32> to vector<1x8x1xf32>
      tpu.vector_store %arg14[%c0_47, %c0_48, %c0_49], %95 {strides = array<i32>} : memref<4x8x1xf32, #tpu.memory_space<vmem>>, vector<1x8x1xf32>,
      %96 = vector.extract_strided_slice %47 {offsets = [0, 8], sizes = [8, 8], strides = [1, 1]} : vector<8x128xf32> to vector<8x8xf32>
      %97 = vector.extract_strided_slice %44 {offsets = [0, 8], sizes = [8, 8], strides = [1, 1]} : vector<8x128xf32> to vector<8x8xf32>
      %cst_50 = arith.constant dense<0.000000e+00> : vector<8x8xf32>
      %98 = tpu.matmul %96, %97, %cst_50 {dimension_numbers = #tpu.dot_dimension_numbers<[1], [1], [0], [0], [0, 0, 1, 0], [], []>} : vector<8x8xf32>, vector<8x8xf32>, vector<8x8xf32> -> vector<8x8xf32>
      %cst_51 = arith.constant 0.353553385 : f32
      %99 = vector.broadcast %cst_51 : f32 to vector<8x8xf32>
      %100 = arith.mulf %98, %99 : vector<8x8xf32>
      %cst_52 = arith.constant -1.000000e+30 : f32
      %101 = vector.broadcast %cst_52 : f32 to vector<8x8xf32>
      %102 = arith.select %56, %100, %101 : vector<8x8xi1>, vector<8x8xf32>
      %c1 = arith.constant 1 : index
      %c0_53 = arith.constant 0 : index
      %c0_54 = arith.constant 0 : index
      %103 = vector.load %arg14[%c1, %c0_53, %c0_54] : memref<4x8x1xf32, #tpu.memory_space<vmem>>, vector<1x8x1xf32>
      %104 = vector.shape_cast %103 : vector<1x8x1xf32> to vector<8x1xf32>
      %cst_55 = arith.constant dense<0xFF800000> : vector<8xf32>
      %105 = vector.multi_reduction <maximumf>, %102, %cst_55 [1] : vector<8x8xf32> to vector<8xf32>
      %106 = vector.shape_cast %105 : vector<8xf32> to vector<8x1xf32>
      %107 = arith.maximumf %104, %106 : vector<8x1xf32>
      %108 = arith.subf %104, %107 : vector<8x1xf32>
      %109 = math.exp %108 : vector<8x1xf32>
      %110 = vector.broadcast %107 : vector<8x1xf32> to vector<8x8xf32>
      %111 = arith.subf %102, %110 : vector<8x8xf32>
      %112 = math.exp %111 : vector<8x8xf32>
      %c1_56 = arith.constant 1 : index
      %c0_57 = arith.constant 0 : index
      %c0_58 = arith.constant 0 : index
      %113 = vector.load %arg15[%c1_56, %c0_57, %c0_58] : memref<4x8x1xf32, #tpu.memory_space<vmem>>, vector<1x8x1xf32>
      %114 = vector.shape_cast %113 : vector<1x8x1xf32> to vector<8x1xf32>
      %115 = arith.mulf %109, %114 : vector<8x1xf32>
      %cst_59 = arith.constant dense<0.000000e+00> : vector<8xf32>
      %116 = vector.multi_reduction <add>, %112, %cst_59 [1] : vector<8x8xf32> to vector<8xf32>
      %117 = vector.shape_cast %116 : vector<8xf32> to vector<8x1xf32>
      %118 = arith.addf %115, %117 : vector<8x1xf32>
      %c1_60 = arith.constant 1 : index
      %c0_61 = arith.constant 0 : index
      %c0_62 = arith.constant 0 : index
      %119 = vector.load %arg15[%c1_60, %c0_61, %c0_62] : memref<4x8x1xf32, #tpu.memory_space<vmem>>, vector<1x8x1xf32>
      %120 = vector.shape_cast %119 : vector<1x8x1xf32> to vector<8x1xf32>
      %121 = vector.shape_cast %118 : vector<8x1xf32> to vector<1x8x1xf32>
      tpu.vector_store %arg15[%c1_60, %c0_61, %c0_62], %121 {strides = array<i32>} : memref<4x8x1xf32, #tpu.memory_space<vmem>>, vector<1x8x1xf32>,
      %c1_63 = arith.constant 1 : index
      %c0_64 = arith.constant 0 : index
      %c0_65 = arith.constant 0 : index
      %122 = vector.load %arg16[%c1_63, %c0_64, %c0_65] : memref<4x8x8xf32, #tpu.memory_space<vmem>>, vector<1x8x8xf32>
      %123 = vector.shape_cast %122 : vector<1x8x8xf32> to vector<8x8xf32>
      %124 = vector.broadcast %109 : vector<8x1xf32> to vector<8x8xf32>
      %125 = arith.mulf %124, %123 : vector<8x8xf32>
      %126 = vector.extract_strided_slice %46 {offsets = [0, 8], sizes = [8, 8], strides = [1, 1]} : vector<8x128xf32> to vector<8x8xf32>
      %cst_66 = arith.constant dense<0.000000e+00> : vector<8x8xf32>
      %127 = tpu.matmul %112, %126, %cst_66 {dimension_numbers = #tpu.dot_dimension_numbers<[1], [0], [0], [1], [0, 0, 1, 1], [], []>} : vector<8x8xf32>, vector<8x8xf32>, vector<8x8xf32> -> vector<8x8xf32>
      %128 = arith.addf %125, %127 : vector<8x8xf32>
      %c1_67 = arith.constant 1 : index
      %c0_68 = arith.constant 0 : index
      %c0_69 = arith.constant 0 : index
      %129 = vector.load %arg16[%c1_67, %c0_68, %c0_69] : memref<4x8x8xf32, #tpu.memory_space<vmem>>, vector<1x8x8xf32>
      %130 = vector.shape_cast %129 : vector<1x8x8xf32> to vector<8x8xf32>
      %131 = vector.shape_cast %128 : vector<8x8xf32> to vector<1x8x8xf32>
      tpu.vector_store %arg16[%c1_67, %c0_68, %c0_69], %131 {strides = array<i32>} : memref<4x8x8xf32, #tpu.memory_space<vmem>>, vector<1x8x8xf32>,
      %c1_70 = arith.constant 1 : index
      %c0_71 = arith.constant 0 : index
      %c0_72 = arith.constant 0 : index
      %132 = vector.load %arg14[%c1_70, %c0_71, %c0_72] : memref<4x8x1xf32, #tpu.memory_space<vmem>>, vector<1x8x1xf32>
      %133 = vector.shape_cast %132 : vector<1x8x1xf32> to vector<8x1xf32>
      %134 = vector.shape_cast %107 : vector<8x1xf32> to vector<1x8x1xf32>
      tpu.vector_store %arg14[%c1_70, %c0_71, %c0_72], %134 {strides = array<i32>} : memref<4x8x1xf32, #tpu.memory_space<vmem>>, vector<1x8x1xf32>,
      %135 = vector.extract_strided_slice %47 {offsets = [0, 16], sizes = [8, 8], strides = [1, 1]} : vector<8x128xf32> to vector<8x8xf32>
      %136 = vector.extract_strided_slice %44 {offsets = [0, 16], sizes = [8, 8], strides = [1, 1]} : vector<8x128xf32> to vector<8x8xf32>
      %cst_73 = arith.constant dense<0.000000e+00> : vector<8x8xf32>
      %137 = tpu.matmul %135, %136, %cst_73 {dimension_numbers = #tpu.dot_dimension_numbers<[1], [1], [0], [0], [0, 0, 1, 0], [], []>} : vector<8x8xf32>, vector<8x8xf32>, vector<8x8xf32> -> vector<8x8xf32>
      %cst_74 = arith.constant 0.353553385 : f32
      %138 = vector.broadcast %cst_74 : f32 to vector<8x8xf32>
      %139 = arith.mulf %137, %138 : vector<8x8xf32>
      %cst_75 = arith.constant -1.000000e+30 : f32
      %140 = vector.broadcast %cst_75 : f32 to vector<8x8xf32>
      %141 = arith.select %56, %139, %140 : vector<8x8xi1>, vector<8x8xf32>
      %c2 = arith.constant 2 : index
      %c0_76 = arith.constant 0 : index
      %c0_77 = arith.constant 0 : index
      %142 = vector.load %arg14[%c2, %c0_76, %c0_77] : memref<4x8x1xf32, #tpu.memory_space<vmem>>, vector<1x8x1xf32>
      %143 = vector.shape_cast %142 : vector<1x8x1xf32> to vector<8x1xf32>
      %cst_78 = arith.constant dense<0xFF800000> : vector<8xf32>
      %144 = vector.multi_reduction <maximumf>, %141, %cst_78 [1] : vector<8x8xf32> to vector<8xf32>
      %145 = vector.shape_cast %144 : vector<8xf32> to vector<8x1xf32>
      %146 = arith.maximumf %143, %145 : vector<8x1xf32>
      %147 = arith.subf %143, %146 : vector<8x1xf32>
      %148 = math.exp %147 : vector<8x1xf32>
      %149 = vector.broadcast %146 : vector<8x1xf32> to vector<8x8xf32>
      %150 = arith.subf %141, %149 : vector<8x8xf32>
      %151 = math.exp %150 : vector<8x8xf32>
      %c2_79 = arith.constant 2 : index
      %c0_80 = arith.constant 0 : index
      %c0_81 = arith.constant 0 : index
      %152 = vector.load %arg15[%c2_79, %c0_80, %c0_81] : memref<4x8x1xf32, #tpu.memory_space<vmem>>, vector<1x8x1xf32>
      %153 = vector.shape_cast %152 : vector<1x8x1xf32> to vector<8x1xf32>
      %154 = arith.mulf %148, %153 : vector<8x1xf32>
      %cst_82 = arith.constant dense<0.000000e+00> : vector<8xf32>
      %155 = vector.multi_reduction <add>, %151, %cst_82 [1] : vector<8x8xf32> to vector<8xf32>
      %156 = vector.shape_cast %155 : vector<8xf32> to vector<8x1xf32>
      %157 = arith.addf %154, %156 : vector<8x1xf32>
      %c2_83 = arith.constant 2 : index
      %c0_84 = arith.constant 0 : index
      %c0_85 = arith.constant 0 : index
      %158 = vector.load %arg15[%c2_83, %c0_84, %c0_85] : memref<4x8x1xf32, #tpu.memory_space<vmem>>, vector<1x8x1xf32>
      %159 = vector.shape_cast %158 : vector<1x8x1xf32> to vector<8x1xf32>
      %160 = vector.shape_cast %157 : vector<8x1xf32> to vector<1x8x1xf32>
      tpu.vector_store %arg15[%c2_83, %c0_84, %c0_85], %160 {strides = array<i32>} : memref<4x8x1xf32, #tpu.memory_space<vmem>>, vector<1x8x1xf32>,
      %c2_86 = arith.constant 2 : index
      %c0_87 = arith.constant 0 : index
      %c0_88 = arith.constant 0 : index
      %161 = vector.load %arg16[%c2_86, %c0_87, %c0_88] : memref<4x8x8xf32, #tpu.memory_space<vmem>>, vector<1x8x8xf32>
      %162 = vector.shape_cast %161 : vector<1x8x8xf32> to vector<8x8xf32>
      %163 = vector.broadcast %148 : vector<8x1xf32> to vector<8x8xf32>
      %164 = arith.mulf %163, %162 : vector<8x8xf32>
      %165 = vector.extract_strided_slice %46 {offsets = [0, 16], sizes = [8, 8], strides = [1, 1]} : vector<8x128xf32> to vector<8x8xf32>
      %cst_89 = arith.constant dense<0.000000e+00> : vector<8x8xf32>
      %166 = tpu.matmul %151, %165, %cst_89 {dimension_numbers = #tpu.dot_dimension_numbers<[1], [0], [0], [1], [0, 0, 1, 1], [], []>} : vector<8x8xf32>, vector<8x8xf32>, vector<8x8xf32> -> vector<8x8xf32>
      %167 = arith.addf %164, %166 : vector<8x8xf32>
      %c2_90 = arith.constant 2 : index
      %c0_91 = arith.constant 0 : index
      %c0_92 = arith.constant 0 : index
      %168 = vector.load %arg16[%c2_90, %c0_91, %c0_92] : memref<4x8x8xf32, #tpu.memory_space<vmem>>, vector<1x8x8xf32>
      %169 = vector.shape_cast %168 : vector<1x8x8xf32> to vector<8x8xf32>
      %170 = vector.shape_cast %167 : vector<8x8xf32> to vector<1x8x8xf32>
      tpu.vector_store %arg16[%c2_90, %c0_91, %c0_92], %170 {strides = array<i32>} : memref<4x8x8xf32, #tpu.memory_space<vmem>>, vector<1x8x8xf32>,
      %c2_93 = arith.constant 2 : index
      %c0_94 = arith.constant 0 : index
      %c0_95 = arith.constant 0 : index
      %171 = vector.load %arg14[%c2_93, %c0_94, %c0_95] : memref<4x8x1xf32, #tpu.memory_space<vmem>>, vector<1x8x1xf32>
      %172 = vector.shape_cast %171 : vector<1x8x1xf32> to vector<8x1xf32>
      %173 = vector.shape_cast %146 : vector<8x1xf32> to vector<1x8x1xf32>
      tpu.vector_store %arg14[%c2_93, %c0_94, %c0_95], %173 {strides = array<i32>} : memref<4x8x1xf32, #tpu.memory_space<vmem>>, vector<1x8x1xf32>,
      %174 = vector.extract_strided_slice %47 {offsets = [0, 24], sizes = [8, 8], strides = [1, 1]} : vector<8x128xf32> to vector<8x8xf32>
      %175 = vector.extract_strided_slice %44 {offsets = [0, 24], sizes = [8, 8], strides = [1, 1]} : vector<8x128xf32> to vector<8x8xf32>
      %cst_96 = arith.constant dense<0.000000e+00> : vector<8x8xf32>
      %176 = tpu.matmul %174, %175, %cst_96 {dimension_numbers = #tpu.dot_dimension_numbers<[1], [1], [0], [0], [0, 0, 1, 0], [], []>} : vector<8x8xf32>, vector<8x8xf32>, vector<8x8xf32> -> vector<8x8xf32>
      %cst_97 = arith.constant 0.353553385 : f32
      %177 = vector.broadcast %cst_97 : f32 to vector<8x8xf32>
      %178 = arith.mulf %176, %177 : vector<8x8xf32>
      %cst_98 = arith.constant -1.000000e+30 : f32
      %179 = vector.broadcast %cst_98 : f32 to vector<8x8xf32>
      %180 = arith.select %56, %178, %179 : vector<8x8xi1>, vector<8x8xf32>
      %c3 = arith.constant 3 : index
      %c0_99 = arith.constant 0 : index
      %c0_100 = arith.constant 0 : index
      %181 = vector.load %arg14[%c3, %c0_99, %c0_100] : memref<4x8x1xf32, #tpu.memory_space<vmem>>, vector<1x8x1xf32>
      %182 = vector.shape_cast %181 : vector<1x8x1xf32> to vector<8x1xf32>
      %cst_101 = arith.constant dense<0xFF800000> : vector<8xf32>
      %183 = vector.multi_reduction <maximumf>, %180, %cst_101 [1] : vector<8x8xf32> to vector<8xf32>
      %184 = vector.shape_cast %183 : vector<8xf32> to vector<8x1xf32>
      %185 = arith.maximumf %182, %184 : vector<8x1xf32>
      %186 = arith.subf %182, %185 : vector<8x1xf32>
      %187 = math.exp %186 : vector<8x1xf32>
      %188 = vector.broadcast %185 : vector<8x1xf32> to vector<8x8xf32>
      %189 = arith.subf %180, %188 : vector<8x8xf32>
      %190 = math.exp %189 : vector<8x8xf32>
      %c3_102 = arith.constant 3 : index
      %c0_103 = arith.constant 0 : index
      %c0_104 = arith.constant 0 : index
      %191 = vector.load %arg15[%c3_102, %c0_103, %c0_104] : memref<4x8x1xf32, #tpu.memory_space<vmem>>, vector<1x8x1xf32>
      %192 = vector.shape_cast %191 : vector<1x8x1xf32> to vector<8x1xf32>
      %193 = arith.mulf %187, %192 : vector<8x1xf32>
      %cst_105 = arith.constant dense<0.000000e+00> : vector<8xf32>
      %194 = vector.multi_reduction <add>, %190, %cst_105 [1] : vector<8x8xf32> to vector<8xf32>
      %195 = vector.shape_cast %194 : vector<8xf32> to vector<8x1xf32>
      %196 = arith.addf %193, %195 : vector<8x1xf32>
      %c3_106 = arith.constant 3 : index
      %c0_107 = arith.constant 0 : index
      %c0_108 = arith.constant 0 : index
      %197 = vector.load %arg15[%c3_106, %c0_107, %c0_108] : memref<4x8x1xf32, #tpu.memory_space<vmem>>, vector<1x8x1xf32>
      %198 = vector.shape_cast %197 : vector<1x8x1xf32> to vector<8x1xf32>
      %199 = vector.shape_cast %196 : vector<8x1xf32> to vector<1x8x1xf32>
      tpu.vector_store %arg15[%c3_106, %c0_107, %c0_108], %199 {strides = array<i32>} : memref<4x8x1xf32, #tpu.memory_space<vmem>>, vector<1x8x1xf32>,
      %c3_109 = arith.constant 3 : index
      %c0_110 = arith.constant 0 : index
      %c0_111 = arith.constant 0 : index
      %200 = vector.load %arg16[%c3_109, %c0_110, %c0_111] : memref<4x8x8xf32, #tpu.memory_space<vmem>>, vector<1x8x8xf32>
      %201 = vector.shape_cast %200 : vector<1x8x8xf32> to vector<8x8xf32>
      %202 = vector.broadcast %187 : vector<8x1xf32> to vector<8x8xf32>
      %203 = arith.mulf %202, %201 : vector<8x8xf32>
      %204 = vector.extract_strided_slice %46 {offsets = [0, 24], sizes = [8, 8], strides = [1, 1]} : vector<8x128xf32> to vector<8x8xf32>
      %cst_112 = arith.constant dense<0.000000e+00> : vector<8x8xf32>
      %205 = tpu.matmul %190, %204, %cst_112 {dimension_numbers = #tpu.dot_dimension_numbers<[1], [0], [0], [1], [0, 0, 1, 1], [], []>} : vector<8x8xf32>, vector<8x8xf32>, vector<8x8xf32> -> vector<8x8xf32>
      %206 = arith.addf %203, %205 : vector<8x8xf32>
      %c3_113 = arith.constant 3 : index
      %c0_114 = arith.constant 0 : index
      %c0_115 = arith.constant 0 : index
      %207 = vector.load %arg16[%c3_113, %c0_114, %c0_115] : memref<4x8x8xf32, #tpu.memory_space<vmem>>, vector<1x8x8xf32>
      %208 = vector.shape_cast %207 : vector<1x8x8xf32> to vector<8x8xf32>
      %209 = vector.shape_cast %206 : vector<8x8xf32> to vector<1x8x8xf32>
      tpu.vector_store %arg16[%c3_113, %c0_114, %c0_115], %209 {strides = array<i32>} : memref<4x8x8xf32, #tpu.memory_space<vmem>>, vector<1x8x8xf32>,
      %c3_116 = arith.constant 3 : index
      %c0_117 = arith.constant 0 : index
      %c0_118 = arith.constant 0 : index
      %210 = vector.load %arg14[%c3_116, %c0_117, %c0_118] : memref<4x8x1xf32, #tpu.memory_space<vmem>>, vector<1x8x1xf32>
      %211 = vector.shape_cast %210 : vector<1x8x1xf32> to vector<8x1xf32>
      %212 = vector.shape_cast %185 : vector<8x1xf32> to vector<1x8x1xf32>
      tpu.vector_store %arg14[%c3_116, %c0_117, %c0_118], %212 {strides = array<i32>} : memref<4x8x1xf32, #tpu.memory_space<vmem>>, vector<1x8x1xf32>,
    } else {
    }
    %c1_i32 = arith.constant 1 : i32
    %9 = arith.cmpi eq, %arg2, %c1_i32 : i32
    %10 = arith.extui %9 : i1 to i32
    %c0_i32_3 = arith.constant 0 : i32
    %11 = arith.cmpi ne, %10, %c0_i32_3 : i32
    scf.if %11 {
      %cst = arith.constant 0.000000e+00 : f32
      %12 = vector.broadcast %cst : f32 to vector<8x128xf32>
      %c0 = arith.constant 0 : index
      %c0_4 = arith.constant 0 : index
      %c0_5 = arith.constant 0 : index
      %13 = vector.load %arg15[%c0, %c0_4, %c0_5] : memref<4x8x1xf32, #tpu.memory_space<vmem>>, vector<1x8x1xf32>
      %14 = vector.shape_cast %13 : vector<1x8x1xf32> to vector<8x1xf32>
      %15 = tpu.reciprocal %14 {approx = true} : vector<8x1xf32> -> vector<8x1xf32>
      %c0_6 = arith.constant 0 : index
      %c0_7 = arith.constant 0 : index
      %c0_8 = arith.constant 0 : index
      %16 = vector.load %arg16[%c0_6, %c0_7, %c0_8] : memref<4x8x8xf32, #tpu.memory_space<vmem>>, vector<1x8x8xf32>
      %17 = vector.shape_cast %16 : vector<1x8x8xf32> to vector<8x8xf32>
      %18 = vector.broadcast %15 : vector<8x1xf32> to vector<8x8xf32>
      %19 = arith.mulf %17, %18 : vector<8x8xf32>
      %c0_9 = arith.constant 0 : index
      %c0_10 = arith.constant 0 : index
      %c0_11 = arith.constant 0 : index
      %20 = vector.load %arg10[%c0_9, %c0_10, %c0_11] : memref<4x8x128xf32, #tpu.memory_space<vmem>>, vector<1x8x128xf32>
      %21 = vector.shape_cast %20 : vector<1x8x128xf32> to vector<8x128xf32>
      %cst_12 = arith.constant dense<0.000000e+00> : vector<8x128xf32>
      %22 = tpu.matmul %19, %21, %cst_12 {dimension_numbers = #tpu.dot_dimension_numbers<[1], [0], [0], [1], [0, 0, 1, 1], [], []>} : vector<8x8xf32>, vector<8x128xf32>, vector<8x128xf32> -> vector<8x128xf32>
      %23 = arith.addf %12, %22 : vector<8x128xf32>
      %c1 = arith.constant 1 : index
      %c0_13 = arith.constant 0 : index
      %c0_14 = arith.constant 0 : index
      %24 = vector.load %arg15[%c1, %c0_13, %c0_14] : memref<4x8x1xf32, #tpu.memory_space<vmem>>, vector<1x8x1xf32>
      %25 = vector.shape_cast %24 : vector<1x8x1xf32> to vector<8x1xf32>
      %26 = tpu.reciprocal %25 {approx = true} : vector<8x1xf32> -> vector<8x1xf32>
      %c1_15 = arith.constant 1 : index
      %c0_16 = arith.constant 0 : index
      %c0_17 = arith.constant 0 : index
      %27 = vector.load %arg16[%c1_15, %c0_16, %c0_17] : memref<4x8x8xf32, #tpu.memory_space<vmem>>, vector<1x8x8xf32>
      %28 = vector.shape_cast %27 : vector<1x8x8xf32> to vector<8x8xf32>
      %29 = vector.broadcast %26 : vector<8x1xf32> to vector<8x8xf32>
      %30 = arith.mulf %28, %29 : vector<8x8xf32>
      %c1_18 = arith.constant 1 : index
      %c0_19 = arith.constant 0 : index
      %c0_20 = arith.constant 0 : index
      %31 = vector.load %arg10[%c1_18, %c0_19, %c0_20] : memref<4x8x128xf32, #tpu.memory_space<vmem>>, vector<1x8x128xf32>
      %32 = vector.shape_cast %31 : vector<1x8x128xf32> to vector<8x128xf32>
      %cst_21 = arith.constant dense<0.000000e+00> : vector<8x128xf32>
      %33 = tpu.matmul %30, %32, %cst_21 {dimension_numbers = #tpu.dot_dimension_numbers<[1], [0], [0], [1], [0, 0, 1, 1], [], []>} : vector<8x8xf32>, vector<8x128xf32>, vector<8x128xf32> -> vector<8x128xf32>
      %34 = arith.addf %23, %33 : vector<8x128xf32>
      %c2 = arith.constant 2 : index
      %c0_22 = arith.constant 0 : index
      %c0_23 = arith.constant 0 : index
      %35 = vector.load %arg15[%c2, %c0_22, %c0_23] : memref<4x8x1xf32, #tpu.memory_space<vmem>>, vector<1x8x1xf32>
      %36 = vector.shape_cast %35 : vector<1x8x1xf32> to vector<8x1xf32>
      %37 = tpu.reciprocal %36 {approx = true} : vector<8x1xf32> -> vector<8x1xf32>
      %c2_24 = arith.constant 2 : index
      %c0_25 = arith.constant 0 : index
      %c0_26 = arith.constant 0 : index
      %38 = vector.load %arg16[%c2_24, %c0_25, %c0_26] : memref<4x8x8xf32, #tpu.memory_space<vmem>>, vector<1x8x8xf32>
      %39 = vector.shape_cast %38 : vector<1x8x8xf32> to vector<8x8xf32>
      %40 = vector.broadcast %37 : vector<8x1xf32> to vector<8x8xf32>
      %41 = arith.mulf %39, %40 : vector<8x8xf32>
      %c2_27 = arith.constant 2 : index
      %c0_28 = arith.constant 0 : index
      %c0_29 = arith.constant 0 : index
      %42 = vector.load %arg10[%c2_27, %c0_28, %c0_29] : memref<4x8x128xf32, #tpu.memory_space<vmem>>, vector<1x8x128xf32>
      %43 = vector.shape_cast %42 : vector<1x8x128xf32> to vector<8x128xf32>
      %cst_30 = arith.constant dense<0.000000e+00> : vector<8x128xf32>
      %44 = tpu.matmul %41, %43, %cst_30 {dimension_numbers = #tpu.dot_dimension_numbers<[1], [0], [0], [1], [0, 0, 1, 1], [], []>} : vector<8x8xf32>, vector<8x128xf32>, vector<8x128xf32> -> vector<8x128xf32>
      %45 = arith.addf %34, %44 : vector<8x128xf32>
      %c3 = arith.constant 3 : index
      %c0_31 = arith.constant 0 : index
      %c0_32 = arith.constant 0 : index
      %46 = vector.load %arg15[%c3, %c0_31, %c0_32] : memref<4x8x1xf32, #tpu.memory_space<vmem>>, vector<1x8x1xf32>
      %47 = vector.shape_cast %46 : vector<1x8x1xf32> to vector<8x1xf32>
      %48 = tpu.reciprocal %47 {approx = true} : vector<8x1xf32> -> vector<8x1xf32>
      %c3_33 = arith.constant 3 : index
      %c0_34 = arith.constant 0 : index
      %c0_35 = arith.constant 0 : index
      %49 = vector.load %arg16[%c3_33, %c0_34, %c0_35] : memref<4x8x8xf32, #tpu.memory_space<vmem>>, vector<1x8x8xf32>
      %50 = vector.shape_cast %49 : vector<1x8x8xf32> to vector<8x8xf32>
      %51 = vector.broadcast %48 : vector<8x1xf32> to vector<8x8xf32>
      %52 = arith.mulf %50, %51 : vector<8x8xf32>
      %c3_36 = arith.constant 3 : index
      %c0_37 = arith.constant 0 : index
      %c0_38 = arith.constant 0 : index
      %53 = vector.load %arg10[%c3_36, %c0_37, %c0_38] : memref<4x8x128xf32, #tpu.memory_space<vmem>>, vector<1x8x128xf32>
      %54 = vector.shape_cast %53 : vector<1x8x128xf32> to vector<8x128xf32>
      %cst_39 = arith.constant dense<0.000000e+00> : vector<8x128xf32>
      %55 = tpu.matmul %52, %54, %cst_39 {dimension_numbers = #tpu.dot_dimension_numbers<[1], [0], [0], [1], [0, 0, 1, 1], [], []>} : vector<8x8xf32>, vector<8x128xf32>, vector<8x128xf32> -> vector<8x128xf32>
      %56 = arith.addf %45, %55 : vector<8x128xf32>
      %c0_40 = arith.constant 0 : index
      %c0_41 = arith.constant 0 : index
      %c0_42 = arith.constant 0 : index
      %57 = vector.load %arg3[%c0_40, %c0_41, %c0_42] : memref<1x8x128xf32, #tpu.memory_space<vmem>>, vector<1x8x128xf32>
      %58 = vector.shape_cast %57 : vector<1x8x128xf32> to vector<8x128xf32>
      %59 = arith.addf %58, %56 : vector<8x128xf32>
      %c0_43 = arith.constant 0 : index
      %c0_44 = arith.constant 0 : index
      %60 = vector.load %arg11[%c0_43, %c0_44] : memref<1x128xf32, #tpu.memory_space<vmem>>, vector<1x128xf32>
      %61 = vector.broadcast %60 : vector<1x128xf32> to vector<8x128xf32>
      %62 = arith.addf %59, %61 : vector<8x128xf32>
      %c0_45 = arith.constant 0 : index
      %c0_46 = arith.constant 0 : index
      %c0_47 = arith.constant 0 : index
      %63 = vector.load %arg12[%c0_45, %c0_46, %c0_47] : memref<1x8x128xf32, #tpu.memory_space<vmem>>, vector<1x8x128xf32>
      %64 = vector.shape_cast %63 : vector<1x8x128xf32> to vector<8x128xf32>
      %65 = vector.shape_cast %62 : vector<8x128xf32> to vector<1x8x128xf32>
      tpu.vector_store %arg12[%c0_45, %c0_46, %c0_47], %65 {strides = array<i32>} : memref<1x8x128xf32, #tpu.memory_space<vmem>>, vector<1x8x128xf32>,
    } else {
    }
    return
  }
  func.func @transform_0(%arg0: i32, %arg1: i32, %arg2: i32) -> (i32, i32, i32) {
    %c0_i32 = arith.constant 0 : i32
    %c0_i32_0 = arith.constant 0 : i32
    return %arg0, %arg1, %c0_i32 : i32, i32, i32
  }
  func.func @transform_1(%arg0: i32, %arg1: i32, %arg2: i32) -> (i32, i32, i32) {
    %c0_i32 = arith.constant 0 : i32
    %c0_i32_0 = arith.constant 0 : i32
    return %arg0, %arg2, %c0_i32 : i32, i32, i32
  }
  func.func @transform_2(%arg0: i32, %arg1: i32, %arg2: i32) -> (i32, i32) {
    %c0_i32 = arith.constant 0 : i32
    %c0_i32_0 = arith.constant 0 : i32
    %c0_i32_1 = arith.constant 0 : i32
    return %c0_i32, %c0_i32_0 : i32, i32
  }
  func.func @transform_3(%arg0: i32, %arg1: i32, %arg2: i32) -> (i32, i32) {
    %c0_i32 = arith.constant 0 : i32
    %c0_i32_0 = arith.constant 0 : i32
    %c0_i32_1 = arith.constant 0 : i32
    return %c0_i32, %c0_i32_0 : i32, i32
  }
  func.func @transform_4(%arg0: i32, %arg1: i32, %arg2: i32) -> (i32, i32) {
    %c0_i32 = arith.constant 0 : i32
    %c0_i32_0 = arith.constant 0 : i32
    %c0_i32_1 = arith.constant 0 : i32
    return %c0_i32, %c0_i32_0 : i32, i32
  }
  func.func @transform_5(%arg0: i32, %arg1: i32, %arg2: i32) -> (i32, i32) {
    %c0_i32 = arith.constant 0 : i32
    %c0_i32_0 = arith.constant 0 : i32
    %c0_i32_1 = arith.constant 0 : i32
    return %c0_i32, %c0_i32_0 : i32, i32
  }
  func.func @transform_6(%arg0: i32, %arg1: i32, %arg2: i32) -> (i32, i32) {
    %c0_i32 = arith.constant 0 : i32
    %c0_i32_0 = arith.constant 0 : i32
    %c0_i32_1 = arith.constant 0 : i32
    return %c0_i32, %c0_i32_0 : i32, i32
  }
  func.func @transform_7(%arg0: i32, %arg1: i32, %arg2: i32) -> (i32, i32, i32) {
    %c0_i32 = arith.constant 0 : i32
    %c0_i32_0 = arith.constant 0 : i32
    %c0_i32_1 = arith.constant 0 : i32
    %c0_i32_2 = arith.constant 0 : i32
    return %c0_i32, %c0_i32_0, %c0_i32_1 : i32, i32, i32
  }
  func.func @transform_8(%arg0: i32, %arg1: i32, %arg2: i32) -> (i32, i32) {
    %c0_i32 = arith.constant 0 : i32
    %c0_i32_0 = arith.constant 0 : i32
    %c0_i32_1 = arith.constant 0 : i32
    return %c0_i32, %c0_i32_0 : i32, i32
  }
  func.func @transform_9(%arg0: i32, %arg1: i32, %arg2: i32) -> (i32, i32, i32) {
    %c0_i32 = arith.constant 0 : i32
    %c0_i32_0 = arith.constant 0 : i32
    return %arg0, %arg1, %c0_i32 : i32, i32, i32
  }
}

</mosaic_0001>

<llo_original>
// kernel: block_forward.3
$region0: #{block_forward.3}
  #allocation0 [shape = 'u32[]', space=smem, size = 0x4, offset = 0x4, fixed_abs, tag = 'smem constant byte address 0x4 - core index']
  #allocation1 [shape = 'u32[144,128]{1,0:T(1,128)}', space=vmem, size = 0x12000, scoped, tag = 'internal scratch']
  %s0 = inlined_call_operand.vmem [shape: f32[32,128], index: 0, kind: input, shape index: {}]
  %s1 = inlined_call_operand.vmem [shape: f32[1,128], index: 1, kind: input, shape index: {}]
  %s2 = inlined_call_operand.vmem [shape: f32[1,128], index: 2, kind: input, shape index: {}]
  %s3 = inlined_call_operand.vmem [shape: f32[128,128], index: 3, kind: input, shape index: {}]
  %s4 = inlined_call_operand.vmem [shape: f32[1,128], index: 4, kind: input, shape index: {}]
  %s5 = inlined_call_operand.vmem [shape: f32[128,128], index: 5, kind: input, shape index: {}]
  %s6 = inlined_call_operand.vmem [shape: f32[1,128], index: 6, kind: input, shape index: {}]
  %s7 = inlined_call_operand.hbm [shape: f32[32,128], index: 7, kind: output, shape index: {}]
  %s8 = sld [smem:[#allocation0]]
  $region38: #{block_forward.3} parent=0
    _
  %s10 = ssub.s32 1, %s8
  %s11 = scalar_select 0, %s10, %s8
  $region1: #{block_forward.3} parent=0
    #allocation2 [shape = 'u8[16384]{0}', space=vmem, size = 0x4000, scoped, tag = 'output window, operand 0, single buffered']
    #allocation3 [shape = 's32[1]{0}', space=sflag, size = 0x4, scoped, tag = 'scoped memory for block_forward.3']
    %12 = vsyncpa [#allocation3], 0
    // Predicated region
    $region2: #{block_forward.3} parent=1 // pred_check
      _
    $region3: #{block_forward.3} parent=1 // pred_check_branch
      %14 = sbr.rel (0) target = $region5
    $region4: #{block_forward.3} parent=1 // pred_region
      _
    $region5: #{block_forward.3} parent=1 // pred_fallthru
      _
    // Predicated region
    $region6: #{block_forward.3} parent=1 // pred_check
      _
    $region7: #{block_forward.3} parent=1 // pred_check_branch
      %16 = sbr.rel (0) target = $region9
    $region8: #{block_forward.3} parent=1 // pred_region
      _
    $region9: #{block_forward.3} parent=1 // pred_fallthru
      _
    // Predicated region
    $region10: #{block_forward.3} parent=1 // pred_check
      _
    $region11: #{block_forward.3} parent=1 // pred_check_branch
      %18 = sbr.rel (0) target = $region13
    $region12: #{block_forward.3} parent=1 // pred_region
      _
    $region13: #{block_forward.3} parent=1 // pred_fallthru
      _
    // Predicated region
    $region14: #{block_forward.3} parent=1 // pred_check
      _
    $region15: #{block_forward.3} parent=1 // pred_check_branch
      %20 = sbr.rel (0) target = $region17
    $region16: #{block_forward.3} parent=1 // pred_region
      _
    $region17: #{block_forward.3} parent=1 // pred_fallthru
      _
    // Predicated region
    $region18: #{block_forward.3} parent=1 // pred_check
      _
    $region19: #{block_forward.3} parent=1 // pred_check_branch
      %22 = sbr.rel (0) target = $region21
    $region20: #{block_forward.3} parent=1 // pred_region
      _
    $region21: #{block_forward.3} parent=1 // pred_fallthru
      _
    // Predicated region
    $region22: #{block_forward.3} parent=1 // pred_check
      _
    $region23: #{block_forward.3} parent=1 // pred_check_branch
      %24 = sbr.rel (0) target = $region25
    $region24: #{block_forward.3} parent=1 // pred_region
      _
    $region25: #{block_forward.3} parent=1 // pred_fallthru
      _
    // Predicated region
    $region26: #{block_forward.3} parent=1 // pred_check
      _
    $region27: #{block_forward.3} parent=1 // pred_check_branch
      %26 = sbr.rel (0) target = $region29
    $region28: #{block_forward.3} parent=1 // pred_region
      _
    $region29: #{block_forward.3} parent=1 // pred_fallthru
      _
    %v27 = vld [vmem:[%s0] sm:$0xff]
    %v28 = vld [vmem:[%s0 + $0x8] sm:$0xff]
    %v29 = vld [vmem:[%s0 + $0x10] sm:$0xff]
    %v30 = vld [vmem:[%s0 + $0x18] sm:$0xff]
    %v31 = vld [vmem:[%s1] sm:$0x1]
    %v32 = vld [vmem:[%s2] sm:$0x1]
    %v33 = vlaneseq
    %v34 = vand.u32 %v33, 127
    %vm35 = vcmp.lt.s32.totalorder %v34, 32
    %v36 = vsel %vm35, %v27, 0.0
    %v37 = vsel %vm35, %v28, 0.0
    %v38 = vsel %vm35, %v29, 0.0
    %v39 = vsel %vm35, %v30, 0.0
    %40 = vadd.xlane.f32.xlu0 %v36
    %v41 = vpop.xlane.xlu0 %40
    %42 = vadd.xlane.f32.xlu0 %v37
    %v43 = vpop.xlane.xlu0 %42
    %44 = vadd.xlane.f32.xlu0 %v38
    %v45 = vpop.xlane.xlu0 %44
    %46 = vadd.xlane.f32.xlu0 %v39
    %v47 = vpop.xlane.xlu0 %46
    %v48 = vmul.f32 %v41, 0.03125
    %v49 = vmul.f32 %v43, 0.03125
    %v50 = vmul.f32 %v45, 0.03125
    %v51 = vmul.f32 %v47, 0.03125
    %v52 = vsub.f32 %v27, %v48
    %v53 = vsub.f32 %v28, %v49
    %v54 = vsub.f32 %v29, %v50
    %v55 = vsub.f32 %v30, %v51
    %v56 = vsel %vm35, %v52, 0.0
    %v57 = vsel %vm35, %v53, 0.0
    %v58 = vsel %vm35, %v54, 0.0
    %v59 = vsel %vm35, %v55, 0.0
    %v60 = vmul.f32 %v56, %v56
    %v61 = vmul.f32 %v57, %v57
    %v62 = vmul.f32 %v58, %v58
    %v63 = vmul.f32 %v59, %v59
    %64 = vadd.xlane.f32.xlu0 %v60
    %v65 = vpop.xlane.xlu0 %64
    %66 = vadd.xlane.f32.xlu0 %v61
    %v67 = vpop.xlane.xlu0 %66
    %68 = vadd.xlane.f32.xlu0 %v62
    %v69 = vpop.xlane.xlu0 %68
    %70 = vadd.xlane.f32.xlu0 %v63
    %v71 = vpop.xlane.xlu0 %70
    %v72 = vmul.f32 %v65, 0.03125
    %v73 = vmul.f32 %v67, 0.03125
    %v74 = vmul.f32 %v69, 0.03125
    %v75 = vmul.f32 %v71, 0.03125
    %v76 = vadd.f32 %v72, 1e-05
    %v77 = vadd.f32 %v73, 1e-05
    %v78 = vadd.f32 %v74, 1e-05
    %v79 = vadd.f32 %v75, 1e-05
    %v80 = vrsqrt.pop %v76
    %v81 = vrsqrt.pop %v77
    %v82 = vrsqrt.pop %v78
    %v83 = vrsqrt.pop %v79
    %v84 = vmul.f32 %v56, %v80
    %v85 = vmul.f32 %v57, %v81
    %v86 = vmul.f32 %v58, %v82
    %v87 = vmul.f32 %v59, %v83
    %v89 = vlaneseq
    %v90 = vshrl.u32 %v89, 7
    %v91 = vsub.s32 0, %v90
    %v92 = vrot.slane %v31, %v91
    %v94 = vmul.f32 %v84, %v92
    %v95 = vmul.f32 %v85, %v92
    %v96 = vmul.f32 %v86, %v92
    %v97 = vmul.f32 %v87, %v92
    %v99 = vlaneseq
    %v100 = vshrl.u32 %v99, 7
    %v101 = vsub.s32 0, %v100
    %v102 = vrot.slane %v32, %v101
    %v104 = vadd.f32 %v94, %v102
    %v105 = vadd.f32 %v95, %v102
    %v106 = vadd.f32 %v96, %v102
    %v107 = vadd.f32 %v97, %v102
    %v108 = vld [vmem:[%s3] sm:$0xff]
    %v109 = vld [vmem:[%s3 + $0x8] sm:$0xff]
    %v110 = vld [vmem:[%s3 + $0x10] sm:$0xff]
    %v111 = vld [vmem:[%s3 + $0x18] sm:$0xff]
    %v112 = vld [vmem:[%s3 + $0x20] sm:$0xff]
    %v113 = vld [vmem:[%s3 + $0x28] sm:$0xff]
    %v114 = vld [vmem:[%s3 + $0x30] sm:$0xff]
    %v115 = vld [vmem:[%s3 + $0x38] sm:$0xff]
    %v116 = vld [vmem:[%s3 + $0x40] sm:$0xff]
    %v117 = vld [vmem:[%s3 + $0x48] sm:$0xff]
    %v118 = vld [vmem:[%s3 + $0x50] sm:$0xff]
    %v119 = vld [vmem:[%s3 + $0x58] sm:$0xff]
    %v120 = vld [vmem:[%s3 + $0x60] sm:$0xff]
    %v121 = vld [vmem:[%s3 + $0x68] sm:$0xff]
    %v122 = vld [vmem:[%s3 + $0x70] sm:$0xff]
    %v123 = vld [vmem:[%s3 + $0x78] sm:$0xff]
    %v124 = vld [vmem:[%s4] sm:$0x1]
    %v126 = vlaneseq
    %v127 = vshrl.u32 %v126, 7
    %v128 = vsub.s32 0, %v127
    %v129 = vrot.slane %v124, %v128
    %131 = vmatprep.subr.mxu0 0.0
    %132 = vmatpush1.msra.mxu0 %v108
    %133 = vmatprep.subr.mxu0 0.0
    %134 = vmatpush1.msra.mxu0 %v109
    %135 = vmatprep.subr.mxu0 0.0
    %136 = vmatpush1.msra.mxu0 %v110
    %137 = vmatprep.subr.mxu0 0.0
    %138 = vmatpush1.msra.mxu0 %v111
    %139 = vmatprep.subr.mxu0 0.0
    %140 = vmatpush1.msra.mxu0 %v112
    %141 = vmatprep.subr.mxu0 0.0
    %142 = vmatpush1.msra.mxu0 %v113
    %143 = vmatprep.subr.mxu0 0.0
    %144 = vmatpush1.msra.mxu0 %v114
    %145 = vmatprep.subr.mxu0 0.0
    %146 = vmatpush1.msra.mxu0 %v115
    %147 = vmatprep.subr.mxu0 0.0
    %148 = vmatpush1.msra.mxu0 %v116
    %149 = vmatprep.subr.mxu0 0.0
    %150 = vmatpush1.msra.mxu0 %v117
    %151 = vmatprep.subr.mxu0 0.0
    %152 = vmatpush1.msra.mxu0 %v118
    %153 = vmatprep.subr.mxu0 0.0
    %154 = vmatpush1.msra.mxu0 %v119
    %155 = vmatprep.subr.mxu0 0.0
    %156 = vmatpush1.msra.mxu0 %v120
    %157 = vmatprep.subr.mxu0 0.0
    %158 = vmatpush1.msra.mxu0 %v121
    %159 = vmatprep.subr.mxu0 0.0
    %160 = vmatpush1.msra.mxu0 %v122
    %161 = vmatprep.subr.mxu0 0.0
    %162 = vmatpush1.msra.mxu0 %v123
    %163 = vmatprep.subr.mxu0 0.0
    %164 = vmatpush1.msra.mxu0 0.0
    %165 = vmatprep.subr.mxu0 0.0
    %166 = vmatpush1.msra.mxu0 0.0
    %167 = vmatprep.subr.mxu0 0.0
    %168 = vmatpush1.msra.mxu0 0.0
    %169 = vmatprep.subr.mxu0 0.0
    %170 = vmatpush1.msra.mxu0 0.0
    %171 = vmatprep.subr.mxu0 0.0
    %172 = vmatpush1.msra.mxu0 0.0
    %173 = vmatprep.subr.mxu0 0.0
    %174 = vmatpush1.msra.mxu0 0.0
    %175 = vmatprep.subr.mxu0 0.0
    %176 = vmatpush1.msra.mxu0 0.0
    %177 = vmatprep.subr.mxu0 0.0
    %178 = vmatpush1.msra.mxu0 0.0
    %179 = vmatprep.subr.mxu0 0.0
    %180 = vmatpush1.msra.mxu0 0.0
    %181 = vmatprep.subr.mxu0 0.0
    %182 = vmatpush1.msra.mxu0 0.0
    %183 = vmatprep.subr.mxu0 0.0
    %184 = vmatpush1.msra.mxu0 0.0
    %185 = vmatprep.subr.mxu0 0.0
    %186 = vmatpush1.msra.mxu0 0.0
    %187 = vmatprep.subr.mxu0 0.0
    %188 = vmatpush1.msra.mxu0 0.0
    %189 = vmatprep.subr.mxu0 0.0
    %190 = vmatpush1.msra.mxu0 0.0
    %191 = vmatprep.subr.mxu0 0.0
    %192 = vmatpush1.msra.mxu0 0.0
    %193 = vmatprep.subr.mxu0 0.0
    %194 = vmatpush1.msra.mxu0 0.0
    %195 = vmatprep.mubr.f32.mxu0 0.0
    %196 = vmatmul.mubr.f32.gmra.mrb[0].mxu0 %v104
    %v197 = vpop.f32.mrb[0].mxu0
    %v198 = vadd.f32 %v129, %v197
    %v199 = vpop.f32.mrb[0].mxu0
    %200 = vmatprep.mubr.f32.mxu0 0.0
    %201 = vmatmul.mubr.f32.gmra.mrb[0].mxu0 %v105
    %v202 = vpop.f32.mrb[0].mxu0
    %v203 = vadd.f32 %v129, %v202
    %v204 = vpop.f32.mrb[0].mxu0
    %205 = vmatprep.mubr.f32.mxu0 0.0
    %206 = vmatmul.mubr.f32.gmra.mrb[0].mxu0 %v106
    %v207 = vpop.f32.mrb[0].mxu0
    %v208 = vadd.f32 %v129, %v207
    %v209 = vpop.f32.mrb[0].mxu0
    %210 = vmatprep.mubr.f32.mxu0 0.0
    %211 = vmatmul.mubr.f32.gmra.mrb[0].mxu0 %v107
    %v212 = vpop.f32.mrb[0].mxu0
    %v213 = vadd.f32 %v129, %v212
    %v214 = vpop.f32.mrb[0].mxu0
    %215 = vdwg.mxu0
    %v216 = vmax.f32 %v198, 0.0
    %v217 = vmax.f32 %v203, 0.0
    %v218 = vmax.f32 %v208, 0.0
    %v219 = vmax.f32 %v213, 0.0
    %v220 = vld [vmem:[%s5] sm:$0xff]
    %v221 = vld [vmem:[%s5 + $0x8] sm:$0xff]
    %v222 = vld [vmem:[%s5 + $0x10] sm:$0xff]
    %v223 = vld [vmem:[%s5 + $0x18] sm:$0xff]
    %v224 = vld [vmem:[%s5 + $0x20] sm:$0xff]
    %v225 = vld [vmem:[%s5 + $0x28] sm:$0xff]
    %v226 = vld [vmem:[%s5 + $0x30] sm:$0xff]
    %v227 = vld [vmem:[%s5 + $0x38] sm:$0xff]
    %v228 = vld [vmem:[%s5 + $0x40] sm:$0xff]
    %v229 = vld [vmem:[%s5 + $0x48] sm:$0xff]
    %v230 = vld [vmem:[%s5 + $0x50] sm:$0xff]
    %v231 = vld [vmem:[%s5 + $0x58] sm:$0xff]
    %v232 = vld [vmem:[%s5 + $0x60] sm:$0xff]
    %v233 = vld [vmem:[%s5 + $0x68] sm:$0xff]
    %v234 = vld [vmem:[%s5 + $0x70] sm:$0xff]
    %v235 = vld [vmem:[%s5 + $0x78] sm:$0xff]
    %236 = vmatprep.subr.mxu0 0.0
    %237 = vmatpush1.msra.mxu0 %v220
    %238 = vmatprep.subr.mxu0 0.0
    %239 = vmatpush1.msra.mxu0 %v221
    %240 = vmatprep.subr.mxu0 0.0
    %241 = vmatpush1.msra.mxu0 %v222
    %242 = vmatprep.subr.mxu0 0.0
    %243 = vmatpush1.msra.mxu0 %v223
    %244 = vmatprep.subr.mxu0 0.0
    %245 = vmatpush1.msra.mxu0 %v224
    %246 = vmatprep.subr.mxu0 0.0
    %247 = vmatpush1.msra.mxu0 %v225
    %248 = vmatprep.subr.mxu0 0.0
    %249 = vmatpush1.msra.mxu0 %v226
    %250 = vmatprep.subr.mxu0 0.0
    %251 = vmatpush1.msra.mxu0 %v227
    %252 = vmatprep.subr.mxu0 0.0
    %253 = vmatpush1.msra.mxu0 %v228
    %254 = vmatprep.subr.mxu0 0.0
    %255 = vmatpush1.msra.mxu0 %v229
    %256 = vmatprep.subr.mxu0 0.0
    %257 = vmatpush1.msra.mxu0 %v230
    %258 = vmatprep.subr.mxu0 0.0
    %259 = vmatpush1.msra.mxu0 %v231
    %260 = vmatprep.subr.mxu0 0.0
    %261 = vmatpush1.msra.mxu0 %v232
    %262 = vmatprep.subr.mxu0 0.0
    %263 = vmatpush1.msra.mxu0 %v233
    %264 = vmatprep.subr.mxu0 0.0
    %265 = vmatpush1.msra.mxu0 %v234
    %266 = vmatprep.subr.mxu0 0.0
    %267 = vmatpush1.msra.mxu0 %v235
    %268 = vmatprep.subr.mxu0 0.0
    %269 = vmatpush1.msra.mxu0 0.0
    %270 = vmatprep.subr.mxu0 0.0
    %271 = vmatpush1.msra.mxu0 0.0
    %272 = vmatprep.subr.mxu0 0.0
    %273 = vmatpush1.msra.mxu0 0.0
    %274 = vmatprep.subr.mxu0 0.0
    %275 = vmatpush1.msra.mxu0 0.0
    %276 = vmatprep.subr.mxu0 0.0
    %277 = vmatpush1.msra.mxu0 0.0
    %278 = vmatprep.subr.mxu0 0.0
    %279 = vmatpush1.msra.mxu0 0.0
    %280 = vmatprep.subr.mxu0 0.0
    %281 = vmatpush1.msra.mxu0 0.0
    %282 = vmatprep.subr.mxu0 0.0
    %283 = vmatpush1.msra.mxu0 0.0
    %284 = vmatprep.subr.mxu0 0.0
    %285 = vmatpush1.msra.mxu0 0.0
    %286 = vmatprep.subr.mxu0 0.0
    %287 = vmatpush1.msra.mxu0 0.0
    %288 = vmatprep.subr.mxu0 0.0
    %289 = vmatpush1.msra.mxu0 0.0
    %290 = vmatprep.subr.mxu0 0.0
    %291 = vmatpush1.msra.mxu0 0.0
    %292 = vmatprep.subr.mxu0 0.0
    %293 = vmatpush1.msra.mxu0 0.0
    %294 = vmatprep.subr.mxu0 0.0
    %295 = vmatpush1.msra.mxu0 0.0
    %296 = vmatprep.subr.mxu0 0.0
    %297 = vmatpush1.msra.mxu0 0.0
    %298 = vmatprep.subr.mxu0 0.0
    %299 = vmatpush1.msra.mxu0 0.0
    %300 = vmatprep.mubr.f32.mxu0 0.0
    %301 = vmatmul.mubr.f32.gmra.mrb[0].mxu0 %v216
    %v302 = vpop.f32.mrb[0].mxu0
    %v303 = vadd.f32 0.0, %v302
    %v304 = vpop.f32.mrb[0].mxu0
    %305 = vmatprep.mubr.f32.mxu0 0.0
    %306 = vmatmul.mubr.f32.gmra.mrb[0].mxu0 %v217
    %v307 = vpop.f32.mrb[0].mxu0
    %v308 = vadd.f32 0.0, %v307
    %v309 = vpop.f32.mrb[0].mxu0
    %310 = vmatprep.mubr.f32.mxu0 0.0
    %311 = vmatmul.mubr.f32.gmra.mrb[0].mxu0 %v218
    %v312 = vpop.f32.mrb[0].mxu0
    %v313 = vadd.f32 0.0, %v312
    %v314 = vpop.f32.mrb[0].mxu0
    %315 = vmatprep.mubr.f32.mxu0 0.0
    %316 = vmatmul.mubr.f32.gmra.mrb[0].mxu0 %v219
    %v317 = vpop.f32.mrb[0].mxu0
    %v318 = vadd.f32 0.0, %v317
    %v319 = vpop.f32.mrb[0].mxu0
    %320 = vdwg.mxu0
    %v321 = vadd.f32 %v27, %v303
    %v322 = vadd.f32 %v28, %v308
    %v323 = vadd.f32 %v29, %v313
    %v324 = vadd.f32 %v30, %v318
    %v325 = vld [vmem:[%s6] sm:$0x1]
    %v327 = vlaneseq
    %v328 = vshrl.u32 %v327, 7
    %v329 = vsub.s32 0, %v328
    %v330 = vrot.slane %v325, %v329
    %v332 = vadd.f32 %v321, %v330
    %v333 = vadd.f32 %v322, %v330
    %v334 = vadd.f32 %v323, %v330
    %v335 = vadd.f32 %v324, %v330
    %336 = vst [vmem:[#allocation2] sm:$0xff] %v332
    %337 = vst [vmem:[#allocation2 + $0x8] sm:$0xff] %v333
    %338 = vst [vmem:[#allocation2 + $0x10] sm:$0xff] %v334
    %339 = vst [vmem:[#allocation2 + $0x18] sm:$0xff] %v335
    // Predicated region
    $region30: #{block_forward.3} parent=1 // pred_check
      _
    $region31: #{block_forward.3} parent=1 // pred_check_branch
      %341 = sbr.rel (0) target = $region33
    $region32: #{block_forward.3} parent=1 // pred_region
      %s343 = ssub.s32 512, 512
      %344 = vsyncadd [#allocation3], %s343
      %s345 = sshll.u32 [#allocation2], 4
      %s346 = int_to_ptr.vmem [resolvable:$true] %s345
      %351 = dma.vmem_to_hbm [thread:$0]  %s346, 512, %s7, [#allocation3], 128, 128, 8
    $region33: #{block_forward.3} parent=1 // pred_fallthru
      _
    // Predicated region
    $region34: #{block_forward.3} parent=1 // pred_check
      _
    $region35: #{block_forward.3} parent=1 // pred_check_branch
      %353 = sbr.rel (0) target = $region37
    $region36: #{block_forward.3} parent=1 // pred_region
      %354 = dma.done [#allocation3], 512
    $region37: #{block_forward.3} parent=1 // pred_fallthru
      _
    %355 = vsyncpa [#allocation3], 1

// kernel: block_forward.2
$region0: #{block_forward.2}
  #allocation0 [shape = 'u32[]', space=smem, size = 0x4, offset = 0x4, fixed_abs, tag = 'smem constant byte address 0x4 - core index']
  #allocation1 [shape = 'u32[144,128]{1,0:T(1,128)}', space=vmem, size = 0x12000, scoped, tag = 'internal scratch']
  #allocation2 [shape = 'f32[8,128]{1,0:T(8,128)}', space=vmem, size = 0x1000, scoped, tag = 'scratch operand']
  #allocation3 [shape = 'f32[4,8,1]{2,1,0:T(8,128)}', space=vmem, size = 0x4000, scoped, tag = 'scratch operand']
  #allocation4 [shape = 'f32[4,8,1]{2,1,0:T(8,128)}', space=vmem, size = 0x4000, scoped, tag = 'scratch operand']
  #allocation5 [shape = 'f32[4,8,8]{2,1,0:T(8,128)}', space=vmem, size = 0x4000, scoped, tag = 'scratch operand']
  %s0 = inlined_call_operand.vmem [shape: f32[2,16,128], index: 0, kind: input, shape index: {}, may-alias: {0,1}]
  %s1 = inlined_call_operand.vmem [shape: f32[2,16,128], index: 1, kind: input, shape index: {}, may-alias: {0,1}]
  %s2 = inlined_call_operand.vmem [shape: f32[1,128], index: 2, kind: input, shape index: {}]
  %s3 = inlined_call_operand.vmem [shape: f32[1,128], index: 3, kind: input, shape index: {}]
  %s4 = inlined_call_operand.vmem [shape: f32[128,128], index: 4, kind: input, shape index: {}]
  %s5 = inlined_call_operand.vmem [shape: f32[128,128], index: 5, kind: input, shape index: {}]
  %s6 = inlined_call_operand.vmem [shape: f32[128,128], index: 6, kind: input, shape index: {}]
  %s7 = inlined_call_operand.vmem [shape: f32[4,8,128], index: 7, kind: input, shape index: {}]
  %s8 = inlined_call_operand.vmem [shape: f32[1,128], index: 8, kind: input, shape index: {}]
  %s9 = inlined_call_operand.vmem [shape: f32[2,16,128], index: 9, kind: output, shape index: {}]
  %s10 = sld [smem:[#allocation0]]
  $region81: #{block_forward.2} parent=0
    _
  %s12 = ssub.s32 1, %s10
  %s13 = scalar_select 0, %s12, %s10
  loop: start=0, step=1, limit=10
  $region2: #{block_forward.2} parent=0 // loop_pre_header
    _
  $region3: #{block_forward.2} parent=0 // loop_header
    %s15 = sphi 0, %s19
    %p16 = scmp.ge.s32.totalorder %s15, 10
    %s22 = sphi 0, %s41
    %s23 = sphi 0, %s37
    %s24 = sphi 0, %s33
    %s25 = sphi 0, %s22
    %s26 = sphi 0, %s23
    %s27 = sphi 0, %s24
    %s28 = sphi 0, %s25
    %s29 = sphi 0, %s26
    %s30 = sphi 0, %s27
    %s46 = sphi 0, %s48
    %s49 = sphi 0, %s46
    %s50 = sphi 0, %s49
    %s66 = sphi 0, %s50
    %s74 = sphi 0, %s76
    %s77 = sphi 0, %s74
    %s78 = sphi 0, %s77
    %s94 = sphi 0, %s78
    %s98 = sphi 0, %s98
    %s100 = sphi 0, %s98
    %s101 = sphi 0, %s100
    %s115 = sphi 0, %s101
    %s119 = sphi 0, %s119
    %s121 = sphi 0, %s119
    %s122 = sphi 0, %s121
    %s136 = sphi 0, %s122
    %s140 = sphi 0, %s140
    %s142 = sphi 0, %s140
    %s143 = sphi 0, %s142
    %s157 = sphi 0, %s143
    %s161 = sphi 0, %s161
    %s163 = sphi 0, %s161
    %s164 = sphi 0, %s163
    %s178 = sphi 0, %s164
    %s182 = sphi 0, %s182
    %s184 = sphi 0, %s182
    %s185 = sphi 0, %s184
    %s199 = sphi 0, %s185
    %s203 = sphi 0, %s203
    %s205 = sphi 0, %s203
    %s206 = sphi 0, %s205
    %s220 = sphi 0, %s206
    %s224 = sphi 0, %s224
    %s226 = sphi 0, %s224
    %s227 = sphi 0, %s226
    %s241 = sphi 0, %s227
    %s249 = sphi 0, %s251
    %s252 = sphi 0, %s249
    %s253 = sphi 0, %s252
    %s269 = sphi 0, %s253
  $region4: #{block_forward.2} parent=0 // loop_header_branch
    %18 = sbr.rel (%p16) target = $region8
  $region5: #{block_forward.2} parent=0 // loop_body
    %s20 = ssub.s32 %s15, 1
    %s21 = ssub.s32 %s15, 2
    %s31 = sadd.s32 1, %s24
    %p32 = scmp.ge.s32.totalorder %s31, 2
    %s33 = scalar_select %p32, 0, %s31
    %s34 = sadd.s32 1, %s23
    %s35 = scalar_select %p32, %s34, %s23
    %p36 = scmp.ge.s32.totalorder %s35, 2
    %s37 = scalar_select %p36, 0, %s35
    %s38 = sadd.s32 1, %s22
    %s39 = scalar_select %p36, %s38, %s22
    %p40 = scmp.ge.s32.totalorder %s39, 2
    %s41 = scalar_select %p40, 0, %s39
    %s42 = ssub.s32 %s22, %s41
    %s43 = ssub.s32 %s23, %s37
    %s44 = sor.u32 %s42, %s43
    %p45 = scmp.eq.s32.totalorder %s44, 0
    %s47 = sadd.s32 %s46, 1
    %s48 = scalar_select %p45, %s46, %s47
    %p51 = pneg %p45
    %p52 = scmp.eq.s32.totalorder %s15, 7
    %p53 = por %p51, %p52
    %p54 = scmp.ne.s32.totalorder %s46, %s49
    %p55 = scmp.eq.s32.totalorder %s15, 0
    %p56 = por %p54, %p55
    %p57 = scmp.ne.s32.totalorder %s46, %s49
    %p58 = scmp.eq.s32.totalorder %s20, 7
    %p59 = por %p57, %p58
    %p60 = scmp.ne.s32.totalorder %s49, %s50
    %p61 = scmp.eq.s32.totalorder %s20, 0
    %p62 = por %p60, %p61
    %p63 = scmp.ne.s32.totalorder %s49, %s50
    %p64 = scmp.eq.s32.totalorder %s21, 7
    %p65 = por %p63, %p64
    %p67 = scmp.ne.s32.totalorder %s50, %s66
    %p68 = scmp.eq.s32.totalorder %s21, 0
    %p69 = por %p67, %p68
    %s70 = ssub.s32 %s22, %s41
    %s71 = ssub.s32 %s24, %s33
    %s72 = sor.u32 %s70, %s71
    %p73 = scmp.eq.s32.totalorder %s72, 0
    %s75 = sadd.s32 %s74, 1
    %s76 = scalar_select %p73, %s74, %s75
    %p79 = pneg %p73
    %p80 = scmp.eq.s32.totalorder %s15, 7
    %p81 = por %p79, %p80
    %p82 = scmp.ne.s32.totalorder %s74, %s77
    %p83 = scmp.eq.s32.totalorder %s15, 0
    %p84 = por %p82, %p83
    %p85 = scmp.ne.s32.totalorder %s74, %s77
    %p86 = scmp.eq.s32.totalorder %s20, 7
    %p87 = por %p85, %p86
    %p88 = scmp.ne.s32.totalorder %s77, %s78
    %p89 = scmp.eq.s32.totalorder %s20, 0
    %p90 = por %p88, %p89
    %p91 = scmp.ne.s32.totalorder %s77, %s78
    %p92 = scmp.eq.s32.totalorder %s21, 7
    %p93 = por %p91, %p92
    %p95 = scmp.ne.s32.totalorder %s78, %s94
    %p96 = scmp.eq.s32.totalorder %s21, 0
    %p97 = por %p95, %p96
    %s99 = sadd.s32 %s98, 1
    %p102 = scmp.eq.s32.totalorder %s15, 7
    %p103 = scmp.ne.s32.totalorder %s98, %s100
    %p104 = scmp.eq.s32.totalorder %s15, 0
    %p105 = por %p103, %p104
    %p106 = scmp.ne.s32.totalorder %s98, %s100
    %p107 = scmp.eq.s32.totalorder %s20, 7
    %p108 = por %p106, %p107
    %p109 = scmp.ne.s32.totalorder %s100, %s101
    %p110 = scmp.eq.s32.totalorder %s20, 0
    %p111 = por %p109, %p110
    %p112 = scmp.ne.s32.totalorder %s100, %s101
    %p113 = scmp.eq.s32.totalorder %s21, 7
    %p114 = por %p112, %p113
    %p116 = scmp.ne.s32.totalorder %s101, %s115
    %p117 = scmp.eq.s32.totalorder %s21, 0
    %p118 = por %p116, %p117
    %s120 = sadd.s32 %s119, 1
    %p123 = scmp.eq.s32.totalorder %s15, 7
    %p124 = scmp.ne.s32.totalorder %s119, %s121
    %p125 = scmp.eq.s32.totalorder %s15, 0
    %p126 = por %p124, %p125
    %p127 = scmp.ne.s32.totalorder %s119, %s121
    %p128 = scmp.eq.s32.totalorder %s20, 7
    %p129 = por %p127, %p128
    %p130 = scmp.ne.s32.totalorder %s121, %s122
    %p131 = scmp.eq.s32.totalorder %s20, 0
    %p132 = por %p130, %p131
    %p133 = scmp.ne.s32.totalorder %s121, %s122
    %p134 = scmp.eq.s32.totalorder %s21, 7
    %p135 = por %p133, %p134
    %p137 = scmp.ne.s32.totalorder %s122, %s136
    %p138 = scmp.eq.s32.totalorder %s21, 0
    %p139 = por %p137, %p138
    %s141 = sadd.s32 %s140, 1
    %p144 = scmp.eq.s32.totalorder %s15, 7
    %p145 = scmp.ne.s32.totalorder %s140, %s142
    %p146 = scmp.eq.s32.totalorder %s15, 0
    %p147 = por %p145, %p146
    %p148 = scmp.ne.s32.totalorder %s140, %s142
    %p149 = scmp.eq.s32.totalorder %s20, 7
    %p150 = por %p148, %p149
    %p151 = scmp.ne.s32.totalorder %s142, %s143
    %p152 = scmp.eq.s32.totalorder %s20, 0
    %p153 = por %p151, %p152
    %p154 = scmp.ne.s32.totalorder %s142, %s143
    %p155 = scmp.eq.s32.totalorder %s21, 7
    %p156 = por %p154, %p155
    %p158 = scmp.ne.s32.totalorder %s143, %s157
    %p159 = scmp.eq.s32.totalorder %s21, 0
    %p160 = por %p158, %p159
    %s162 = sadd.s32 %s161, 1
    %p165 = scmp.eq.s32.totalorder %s15, 7
    %p166 = scmp.ne.s32.totalorder %s161, %s163
    %p167 = scmp.eq.s32.totalorder %s15, 0
    %p168 = por %p166, %p167
    %p169 = scmp.ne.s32.totalorder %s161, %s163
    %p170 = scmp.eq.s32.totalorder %s20, 7
    %p171 = por %p169, %p170
    %p172 = scmp.ne.s32.totalorder %s163, %s164
    %p173 = scmp.eq.s32.totalorder %s20, 0
    %p174 = por %p172, %p173
    %p175 = scmp.ne.s32.totalorder %s163, %s164
    %p176 = scmp.eq.s32.totalorder %s21, 7
    %p177 = por %p175, %p176
    %p179 = scmp.ne.s32.totalorder %s164, %s178
    %p180 = scmp.eq.s32.totalorder %s21, 0
    %p181 = por %p179, %p180
    %s183 = sadd.s32 %s182, 1
    %p186 = scmp.eq.s32.totalorder %s15, 7
    %p187 = scmp.ne.s32.totalorder %s182, %s184
    %p188 = scmp.eq.s32.totalorder %s15, 0
    %p189 = por %p187, %p188
    %p190 = scmp.ne.s32.totalorder %s182, %s184
    %p191 = scmp.eq.s32.totalorder %s20, 7
    %p192 = por %p190, %p191
    %p193 = scmp.ne.s32.totalorder %s184, %s185
    %p194 = scmp.eq.s32.totalorder %s20, 0
    %p195 = por %p193, %p194
    %p196 = scmp.ne.s32.totalorder %s184, %s185
    %p197 = scmp.eq.s32.totalorder %s21, 7
    %p198 = por %p196, %p197
    %p200 = scmp.ne.s32.totalorder %s185, %s199
    %p201 = scmp.eq.s32.totalorder %s21, 0
    %p202 = por %p200, %p201
    %s204 = sadd.s32 %s203, 1
    %p207 = scmp.eq.s32.totalorder %s15, 7
    %p208 = scmp.ne.s32.totalorder %s203, %s205
    %p209 = scmp.eq.s32.totalorder %s15, 0
    %p210 = por %p208, %p209
    %p211 = scmp.ne.s32.totalorder %s203, %s205
    %p212 = scmp.eq.s32.totalorder %s20, 7
    %p213 = por %p211, %p212
    %p214 = scmp.ne.s32.totalorder %s205, %s206
    %p215 = scmp.eq.s32.totalorder %s20, 0
    %p216 = por %p214, %p215
    %p217 = scmp.ne.s32.totalorder %s205, %s206
    %p218 = scmp.eq.s32.totalorder %s21, 7
    %p219 = por %p217, %p218
    %p221 = scmp.ne.s32.totalorder %s206, %s220
    %p222 = scmp.eq.s32.totalorder %s21, 0
    %p223 = por %p221, %p222
    %s225 = sadd.s32 %s224, 1
    %p228 = scmp.eq.s32.totalorder %s15, 7
    %p229 = scmp.ne.s32.totalorder %s224, %s226
    %p230 = scmp.eq.s32.totalorder %s15, 0
    %p231 = por %p229, %p230
    %p232 = scmp.ne.s32.totalorder %s224, %s226
    %p233 = scmp.eq.s32.totalorder %s20, 7
    %p234 = por %p232, %p233
    %p235 = scmp.ne.s32.totalorder %s226, %s227
    %p236 = scmp.eq.s32.totalorder %s20, 0
    %p237 = por %p235, %p236
    %p238 = scmp.ne.s32.totalorder %s226, %s227
    %p239 = scmp.eq.s32.totalorder %s21, 7
    %p240 = por %p238, %p239
    %p242 = scmp.ne.s32.totalorder %s227, %s241
    %p243 = scmp.eq.s32.totalorder %s21, 0
    %p244 = por %p242, %p243
    %s245 = ssub.s32 %s22, %s41
    %s246 = ssub.s32 %s23, %s37
    %s247 = sor.u32 %s245, %s246
    %p248 = scmp.eq.s32.totalorder %s247, 0
    %s250 = sadd.s32 %s249, 1
    %s251 = scalar_select %p248, %s249, %s250
    %p254 = pneg %p248
    %p255 = scmp.eq.s32.totalorder %s15, 7
    %p256 = por %p254, %p255
    %p257 = scmp.ne.s32.totalorder %s249, %s252
    %p258 = scmp.eq.s32.totalorder %s15, 0
    %p259 = por %p257, %p258
    %p260 = scmp.ne.s32.totalorder %s249, %s252
    %p261 = scmp.eq.s32.totalorder %s20, 7
    %p262 = por %p260, %p261
    %p263 = scmp.ne.s32.totalorder %s252, %s253
    %p264 = scmp.eq.s32.totalorder %s20, 0
    %p265 = por %p263, %p264
    %p266 = scmp.ne.s32.totalorder %s252, %s253
    %p267 = scmp.eq.s32.totalorder %s21, 7
    %p268 = por %p266, %p267
    %p270 = scmp.ne.s32.totalorder %s253, %s269
    %p271 = scmp.eq.s32.totalorder %s21, 0
    %p272 = por %p270, %p271
    %p273 = scmp.le.s32.totalorder 1, %s15
    %p274 = scmp.lt.s32.totalorder %s15, 9
    %p275 = pnand %p273, %p274
    %p276 = pneg %p275
    // Predicated region
    $region9: #{block_forward.2} parent=5 // pred_check
      _
    $region10: #{block_forward.2} parent=5 // pred_check_branch
      %278 = sbr.rel (%p275) target = $region12
    $region11: #{block_forward.2} parent=5 // pred_region
      %s279 = ssub.s32 %s15, 1
      // Predicated region
      $region13: #{block_forward.2} parent=11 // pred_check
        %p280 = pneg %p111
      $region14: #{block_forward.2} parent=11 // pred_check_branch
        %282 = sbr.rel (%p280) target = $region16
      $region15: #{block_forward.2} parent=11 // pred_region
        _
      $region16: #{block_forward.2} parent=11 // pred_fallthru
        _
      // Predicated region
      $region17: #{block_forward.2} parent=11 // pred_check
        %p283 = pneg %p132
      $region18: #{block_forward.2} parent=11 // pred_check_branch
        %285 = sbr.rel (%p283) target = $region20
      $region19: #{block_forward.2} parent=11 // pred_region
        _
      $region20: #{block_forward.2} parent=11 // pred_fallthru
        _
      // Predicated region
      $region21: #{block_forward.2} parent=11 // pred_check
        %p286 = pneg %p153
      $region22: #{block_forward.2} parent=11 // pred_check_branch
        %288 = sbr.rel (%p286) target = $region24
      $region23: #{block_forward.2} parent=11 // pred_region
        _
      $region24: #{block_forward.2} parent=11 // pred_fallthru
        _
      // Predicated region
      $region25: #{block_forward.2} parent=11 // pred_check
        %p289 = pneg %p174
      $region26: #{block_forward.2} parent=11 // pred_check_branch
        %291 = sbr.rel (%p289) target = $region28
      $region27: #{block_forward.2} parent=11 // pred_region
        _
      $region28: #{block_forward.2} parent=11 // pred_fallthru
        _
      // Predicated region
      $region29: #{block_forward.2} parent=11 // pred_check
        %p292 = pneg %p195
      $region30: #{block_forward.2} parent=11 // pred_check_branch
        %294 = sbr.rel (%p292) target = $region32
      $region31: #{block_forward.2} parent=11 // pred_region
        _
      $region32: #{block_forward.2} parent=11 // pred_fallthru
        _
      // Predicated region
      $region33: #{block_forward.2} parent=11 // pred_check
        %p295 = pneg %p216
      $region34: #{block_forward.2} parent=11 // pred_check_branch
        %297 = sbr.rel (%p295) target = $region36
      $region35: #{block_forward.2} parent=11 // pred_region
        _
      $region36: #{block_forward.2} parent=11 // pred_fallthru
        _
      // Predicated region
      $region37: #{block_forward.2} parent=11 // pred_check
        %p298 = pneg %p237
      $region38: #{block_forward.2} parent=11 // pred_check_branch
        %300 = sbr.rel (%p298) target = $region40
      $region39: #{block_forward.2} parent=11 // pred_region
        _
      $region40: #{block_forward.2} parent=11 // pred_fallthru
        _
    $region12: #{block_forward.2} parent=5 // pred_fallthru
      _
    %p301 = scmp.lt.s32.totalorder %s15, 8
    // Predicated region
    $region41: #{block_forward.2} parent=5 // pred_check
      %p302 = pneg %p301
    $region42: #{block_forward.2} parent=5 // pred_check_branch
      %304 = sbr.rel (%p302) target = $region44
    $region43: #{block_forward.2} parent=5 // pred_region
      // Predicated region
      $region45: #{block_forward.2} parent=43 // pred_check
        %p305 = pneg %p56
      $region46: #{block_forward.2} parent=43 // pred_check_branch
        %307 = sbr.rel (%p305) target = $region48
      $region47: #{block_forward.2} parent=43 // pred_region
        %p308 = scmp.lt.s32.totalorder %s22, 1
        %s309 = scalar_select %p308, %s22, 1
        %p310 = scmp.lt.s32.totalorder %s23, 1
        %s311 = scalar_select %p310, %s23, 1
        %s312 = smul.addr %s309, 2
        %s313 = sadd.s32 %s311, %s312
        %s314 = smul.addr %s313, 8
        %s315 = scalar_lea.vmem %s0, %s314
      $region48: #{block_forward.2} parent=43 // pred_fallthru
        _
      // Predicated region
      $region49: #{block_forward.2} parent=43 // pred_check
        %p316 = pneg %p84
      $region50: #{block_forward.2} parent=43 // pred_check_branch
        %318 = sbr.rel (%p316) target = $region52
      $region51: #{block_forward.2} parent=43 // pred_region
        %p319 = scmp.lt.s32.totalorder %s22, 1
        %s320 = scalar_select %p319, %s22, 1
        %p321 = scmp.lt.s32.totalorder %s24, 1
        %s322 = scalar_select %p321, %s24, 1
        %s323 = smul.addr %s320, 2
        %s324 = sadd.s32 %s322, %s323
        %s325 = smul.addr %s324, 8
        %s326 = scalar_lea.vmem %s1, %s325
      $region52: #{block_forward.2} parent=43 // pred_fallthru
        _
    $region44: #{block_forward.2} parent=5 // pred_fallthru
      _
    %p327 = scmp.le.s32.totalorder 1, %s15
    %p328 = scmp.lt.s32.totalorder %s15, 9
    %p329 = pnand %p327, %p328
    %p330 = pneg %p329
    // Predicated region
    $region53: #{block_forward.2} parent=5 // pred_check
      _
    $region54: #{block_forward.2} parent=5 // pred_check_branch
      %332 = sbr.rel (%p329) target = $region56
    $region55: #{block_forward.2} parent=5 // pred_region
      %s333 = ssub.s32 %s15, 1
      %p334 = scmp.lt.s32.totalorder %s25, 1
      %s335 = scalar_select %p334, %s25, 1
      %p336 = scmp.lt.s32.totalorder %s26, 1
      %s337 = scalar_select %p336, %s26, 1
      %s338 = smul.addr %s335, 2
      %s339 = sadd.s32 %s337, %s338
      %s340 = smul.addr %s339, 8
      %s341 = scalar_lea.vmem %s0, %s340
      %p342 = pneg %p62
      %p343 = pneg %p59
      %p344 = scmp.lt.s32.totalorder %s25, 1
      %s345 = scalar_select %p344, %s25, 1
      %p346 = scmp.lt.s32.totalorder %s27, 1
      %s347 = scalar_select %p346, %s27, 1
      %s348 = smul.addr %s345, 2
      %s349 = sadd.s32 %s347, %s348
      %s350 = smul.addr %s349, 8
      %s351 = scalar_lea.vmem %s1, %s350
      %p352 = pneg %p90
      %p353 = pneg %p87
      %p354 = pneg %p111
      %p355 = pneg %p108
      %p356 = pneg %p132
      %p357 = pneg %p129
      %p358 = pneg %p153
      %p359 = pneg %p150
      %p360 = pneg %p174
      %p361 = pneg %p171
      %p362 = pneg %p195
      %p363 = pneg %p192
      %p364 = pneg %p216
      %p365 = pneg %p213
      %p366 = pneg %p237
      %p367 = pneg %p234
      %p368 = pneg %p265
      %p369 = pneg %p262
      %p370 = scmp.lt.s32.totalorder %s25, 1
      %s371 = scalar_select %p370, %s25, 1
      %p372 = scmp.lt.s32.totalorder %s26, 1
      %s373 = scalar_select %p372, %s26, 1
      %s374 = smul.addr %s371, 2
      %s375 = sadd.s32 %s373, %s374
      %s376 = smul.addr %s375, 8
      %s377 = scalar_lea.vmem %s9, %s376
      %p378 = scmp.lt.s32.totalorder %s25, 1
      %s379 = scalar_select %p378, %s25, 1
      %p380 = scmp.lt.s32.totalorder %s26, 1
      %s381 = scalar_select %p380, %s26, 1
      %s382 = smul.addr %s379, 2
      %s383 = sadd.s32 %s381, %s382
      %s384 = smul.addr %s383, 8
      %s385 = scalar_lea.vmem %s0, %s384
      %p386 = scmp.lt.s32.totalorder %s25, 1
      %s387 = scalar_select %p386, %s25, 1
      %p388 = scmp.lt.s32.totalorder %s27, 1
      %s389 = scalar_select %p388, %s27, 1
      %s390 = smul.addr %s387, 2
      %s391 = sadd.s32 %s389, %s390
      %s392 = smul.addr %s391, 8
      %s393 = scalar_lea.vmem %s1, %s392
      %p394 = scmp.lt.s32.totalorder %s25, 1
      %s395 = scalar_select %p394, %s25, 1
      %p396 = scmp.lt.s32.totalorder %s26, 1
      %s397 = scalar_select %p396, %s26, 1
      %s398 = smul.addr %s395, 2
      %s399 = sadd.s32 %s397, %s398
      %s400 = smul.addr %s399, 8
      %s401 = scalar_lea.vmem %s9, %s400
      %p402 = scmp.eq.s32.totalorder %s27, 0
      // Predicated region
      $region57: #{block_forward.2} parent=55 // pred_check
        %p403 = pneg %p402
      $region58: #{block_forward.2} parent=55 // pred_check_branch
        %405 = sbr.rel (%p403) target = $region60
      $region59: #{block_forward.2} parent=55 // pred_region
        %v406 = vld [vmem:[%s385] sm:$0xff]
        %v407 = vld [vmem:[%s2] sm:$0x1]
        %v408 = vld [vmem:[%s3] sm:$0x1]
        %v409 = vlaneseq
        %v410 = vand.u32 %v409, 127
        %vm411 = vcmp.lt.s32.totalorder %v410, 32
        %v412 = vsel %vm411, %v406, 0.0
        %413 = vadd.xlane.f32.xlu0 %v412
        %v414 = vpop.xlane.xlu0 %413
        %v415 = vmul.f32 %v414, 0.03125
        %v416 = vsub.f32 %v406, %v415
        %v417 = vsel %vm411, %v416, 0.0
        %v418 = vmul.f32 %v417, %v417
        %419 = vadd.xlane.f32.xlu0 %v418
        %v420 = vpop.xlane.xlu0 %419
        %v421 = vmul.f32 %v420, 0.03125
        %v422 = vadd.f32 %v421, 1e-05
        %v423 = vrsqrt.pop %v422
        %v424 = vmul.f32 %v417, %v423
        %v426 = vlaneseq
        %v427 = vshrl.u32 %v426, 7
        %v428 = vsub.s32 0, %v427
        %v429 = vrot.slane %v407, %v428
        %v431 = vmul.f32 %v424, %v429
        %v433 = vlaneseq
        %v434 = vshrl.u32 %v433, 7
        %v435 = vsub.s32 0, %v434
        %v436 = vrot.slane %v408, %v435
        %v438 = vadd.f32 %v431, %v436
        %v439 = vld [vmem:[%s4] sm:$0xff]
        %v440 = vld [vmem:[%s4 + $0x8] sm:$0xff]
        %v441 = vld [vmem:[%s4 + $0x10] sm:$0xff]
        %v442 = vld [vmem:[%s4 + $0x18] sm:$0xff]
        %v443 = vld [vmem:[%s4 + $0x20] sm:$0xff]
        %v444 = vld [vmem:[%s4 + $0x28] sm:$0xff]
        %v445 = vld [vmem:[%s4 + $0x30] sm:$0xff]
        %v446 = vld [vmem:[%s4 + $0x38] sm:$0xff]
        %v447 = vld [vmem:[%s4 + $0x40] sm:$0xff]
        %v448 = vld [vmem:[%s4 + $0x48] sm:$0xff]
        %v449 = vld [vmem:[%s4 + $0x50] sm:$0xff]
        %v450 = vld [vmem:[%s4 + $0x58] sm:$0xff]
        %v451 = vld [vmem:[%s4 + $0x60] sm:$0xff]
        %v452 = vld [vmem:[%s4 + $0x68] sm:$0xff]
        %v453 = vld [vmem:[%s4 + $0x70] sm:$0xff]
        %v454 = vld [vmem:[%s4 + $0x78] sm:$0xff]
        %455 = vmatprep.subr.mxu0 0.0
        %456 = vmatpush1.msra.mxu0 %v439
        %457 = vmatprep.subr.mxu0 0.0
        %458 = vmatpush1.msra.mxu0 %v440
        %459 = vmatprep.subr.mxu0 0.0
        %460 = vmatpush1.msra.mxu0 %v441
        %461 = vmatprep.subr.mxu0 0.0
        %462 = vmatpush1.msra.mxu0 %v442
        %463 = vmatprep.subr.mxu0 0.0
        %464 = vmatpush1.msra.mxu0 %v443
        %465 = vmatprep.subr.mxu0 0.0
        %466 = vmatpush1.msra.mxu0 %v444
        %467 = vmatprep.subr.mxu0 0.0
        %468 = vmatpush1.msra.mxu0 %v445
        %469 = vmatprep.subr.mxu0 0.0
        %470 = vmatpush1.msra.mxu0 %v446
        %471 = vmatprep.subr.mxu0 0.0
        %472 = vmatpush1.msra.mxu0 %v447
        %473 = vmatprep.subr.mxu0 0.0
        %474 = vmatpush1.msra.mxu0 %v448
        %475 = vmatprep.subr.mxu0 0.0
        %476 = vmatpush1.msra.mxu0 %v449
        %477 = vmatprep.subr.mxu0 0.0
        %478 = vmatpush1.msra.mxu0 %v450
        %479 = vmatprep.subr.mxu0 0.0
        %480 = vmatpush1.msra.mxu0 %v451
        %481 = vmatprep.subr.mxu0 0.0
        %482 = vmatpush1.msra.mxu0 %v452
        %483 = vmatprep.subr.mxu0 0.0
        %484 = vmatpush1.msra.mxu0 %v453
        %485 = vmatprep.subr.mxu0 0.0
        %486 = vmatpush1.msra.mxu0 %v454
        %487 = vmatprep.subr.mxu0 0.0
        %488 = vmatpush1.msra.mxu0 0.0
        %489 = vmatprep.subr.mxu0 0.0
        %490 = vmatpush1.msra.mxu0 0.0
        %491 = vmatprep.subr.mxu0 0.0
        %492 = vmatpush1.msra.mxu0 0.0
        %493 = vmatprep.subr.mxu0 0.0
        %494 = vmatpush1.msra.mxu0 0.0
        %495 = vmatprep.subr.mxu0 0.0
        %496 = vmatpush1.msra.mxu0 0.0
        %497 = vmatprep.subr.mxu0 0.0
        %498 = vmatpush1.msra.mxu0 0.0
        %499 = vmatprep.subr.mxu0 0.0
        %500 = vmatpush1.msra.mxu0 0.0
        %501 = vmatprep.subr.mxu0 0.0
        %502 = vmatpush1.msra.mxu0 0.0
        %503 = vmatprep.subr.mxu0 0.0
        %504 = vmatpush1.msra.mxu0 0.0
        %505 = vmatprep.subr.mxu0 0.0
        %506 = vmatpush1.msra.mxu0 0.0
        %507 = vmatprep.subr.mxu0 0.0
        %508 = vmatpush1.msra.mxu0 0.0
        %509 = vmatprep.subr.mxu0 0.0
        %510 = vmatpush1.msra.mxu0 0.0
        %511 = vmatprep.subr.mxu0 0.0
        %512 = vmatpush1.msra.mxu0 0.0
        %513 = vmatprep.subr.mxu0 0.0
        %514 = vmatpush1.msra.mxu0 0.0
        %515 = vmatprep.subr.mxu0 0.0
        %516 = vmatpush1.msra.mxu0 0.0
        %517 = vmatprep.subr.mxu0 0.0
        %518 = vmatpush1.msra.mxu0 0.0
        %519 = vmatprep.mubr.f32.mxu0 0.0
        %520 = vmatmul.mubr.f32.gmra.mrb[0].mxu0 %v438
        %v521 = vpop.f32.mrb[0].mxu0
        %v522 = vadd.f32 0.0, %v521
        %v523 = vpop.f32.mrb[0].mxu0
        %524 = vdwg.mxu0
        %525 = vst [vmem:[#allocation2] sm:$0xff] %v522
        %vm526 = vcmask 7168
        %527 = vst.msk [vmem:[#allocation3] sm:$0xff] %vm526, -inf
        %528 = vst.msk [vmem:[#allocation3 + $0x8] sm:$0xff] %vm526, -inf
        %529 = vst.msk [vmem:[#allocation3 + $0x10] sm:$0xff] %vm526, -inf
        %530 = vst.msk [vmem:[#allocation3 + $0x18] sm:$0xff] %vm526, -inf
        %531 = vst.msk [vmem:[#allocation4] sm:$0xff] %vm526, 0.0
        %532 = vst.msk [vmem:[#allocation4 + $0x8] sm:$0xff] %vm526, 0.0
        %533 = vst.msk [vmem:[#allocation4 + $0x10] sm:$0xff] %vm526, 0.0
        %534 = vst.msk [vmem:[#allocation4 + $0x18] sm:$0xff] %vm526, 0.0
        %vm535 = vcmask 64512
        %536 = vst.msk [vmem:[#allocation5] sm:$0xff] %vm535, 0.0
        %537 = vst.msk [vmem:[#allocation5 + $0x8] sm:$0xff] %vm535, 0.0
        %538 = vst.msk [vmem:[#allocation5 + $0x10] sm:$0xff] %vm535, 0.0
        %539 = vst.msk [vmem:[#allocation5 + $0x18] sm:$0xff] %vm535, 0.0
      $region60: #{block_forward.2} parent=55 // pred_fallthru
        _
      %s540 = smul.u32 %s27, 8
      %s541 = smul.u32 %s26, 8
      %s542 = sadd.s32 %s541, 7
      %p543 = scmp.le.s32.totalorder %s540, %s542
      // Predicated region
      $region61: #{block_forward.2} parent=55 // pred_check
        %p544 = pneg %p543
      $region62: #{block_forward.2} parent=55 // pred_check_branch
        %546 = sbr.rel (%p544) target = $region64
      $region63: #{block_forward.2} parent=55 // pred_region
        %v547 = vld [vmem:[%s393] sm:$0xff]
        %v548 = vld [vmem:[%s2] sm:$0x1]
        %v549 = vld [vmem:[%s3] sm:$0x1]
        %v550 = vlaneseq
        %v551 = vand.u32 %v550, 127
        %vm552 = vcmp.lt.s32.totalorder %v551, 32
        %v553 = vsel %vm552, %v547, 0.0
        %554 = vadd.xlane.f32.xlu0 %v553
        %v555 = vpop.xlane.xlu0 %554
        %v556 = vmul.f32 %v555, 0.03125
        %v557 = vsub.f32 %v547, %v556
        %v558 = vsel %vm552, %v557, 0.0
        %v559 = vmul.f32 %v558, %v558
        %560 = vadd.xlane.f32.xlu0 %v559
        %v561 = vpop.xlane.xlu0 %560
        %v562 = vmul.f32 %v561, 0.03125
        %v563 = vadd.f32 %v562, 1e-05
        %v564 = vrsqrt.pop %v563
        %v565 = vmul.f32 %v558, %v564
        %v567 = vlaneseq
        %v568 = vshrl.u32 %v567, 7
        %v569 = vsub.s32 0, %v568
        %v570 = vrot.slane %v548, %v569
        %v572 = vmul.f32 %v565, %v570
        %v574 = vlaneseq
        %v575 = vshrl.u32 %v574, 7
        %v576 = vsub.s32 0, %v575
        %v577 = vrot.slane %v549, %v576
        %v579 = vadd.f32 %v572, %v577
        %v580 = vld [vmem:[%s5] sm:$0xff]
        %v581 = vld [vmem:[%s5 + $0x8] sm:$0xff]
        %v582 = vld [vmem:[%s5 + $0x10] sm:$0xff]
        %v583 = vld [vmem:[%s5 + $0x18] sm:$0xff]
        %v584 = vld [vmem:[%s5 + $0x20] sm:$0xff]
        %v585 = vld [vmem:[%s5 + $0x28] sm:$0xff]
        %v586 = vld [vmem:[%s5 + $0x30] sm:$0xff]
        %v587 = vld [vmem:[%s5 + $0x38] sm:$0xff]
        %v588 = vld [vmem:[%s5 + $0x40] sm:$0xff]
        %v589 = vld [vmem:[%s5 + $0x48] sm:$0xff]
        %v590 = vld [vmem:[%s5 + $0x50] sm:$0xff]
        %v591 = vld [vmem:[%s5 + $0x58] sm:$0xff]
        %v592 = vld [vmem:[%s5 + $0x60] sm:$0xff]
        %v593 = vld [vmem:[%s5 + $0x68] sm:$0xff]
        %v594 = vld [vmem:[%s5 + $0x70] sm:$0xff]
        %v595 = vld [vmem:[%s5 + $0x78] sm:$0xff]
        %596 = vmatprep.subr.mxu0 0.0
        %597 = vmatpush1.msra.mxu0 %v580
        %598 = vmatprep.subr.mxu0 0.0
        %599 = vmatpush1.msra.mxu0 %v581
        %600 = vmatprep.subr.mxu0 0.0
        %601 = vmatpush1.msra.mxu0 %v582
        %602 = vmatprep.subr.mxu0 0.0
        %603 = vmatpush1.msra.mxu0 %v583
        %604 = vmatprep.subr.mxu0 0.0
        %605 = vmatpush1.msra.mxu0 %v584
        %606 = vmatprep.subr.mxu0 0.0
        %607 = vmatpush1.msra.mxu0 %v585
        %608 = vmatprep.subr.mxu0 0.0
        %609 = vmatpush1.msra.mxu0 %v586
        %610 = vmatprep.subr.mxu0 0.0
        %611 = vmatpush1.msra.mxu0 %v587
        %612 = vmatprep.subr.mxu0 0.0
        %613 = vmatpush1.msra.mxu0 %v588
        %614 = vmatprep.subr.mxu0 0.0
        %615 = vmatpush1.msra.mxu0 %v589
        %616 = vmatprep.subr.mxu0 0.0
        %617 = vmatpush1.msra.mxu0 %v590
        %618 = vmatprep.subr.mxu0 0.0
        %619 = vmatpush1.msra.mxu0 %v591
        %620 = vmatprep.subr.mxu0 0.0
        %621 = vmatpush1.msra.mxu0 %v592
        %622 = vmatprep.subr.mxu0 0.0
        %623 = vmatpush1.msra.mxu0 %v593
        %624 = vmatprep.subr.mxu0 0.0
        %625 = vmatpush1.msra.mxu0 %v594
        %626 = vmatprep.subr.mxu0 0.0
        %627 = vmatpush1.msra.mxu0 %v595
        %628 = vmatprep.subr.mxu0 0.0
        %629 = vmatpush1.msra.mxu0 0.0
        %630 = vmatprep.subr.mxu0 0.0
        %631 = vmatpush1.msra.mxu0 0.0
        %632 = vmatprep.subr.mxu0 0.0
        %633 = vmatpush1.msra.mxu0 0.0
        %634 = vmatprep.subr.mxu0 0.0
        %635 = vmatpush1.msra.mxu0 0.0
        %636 = vmatprep.subr.mxu0 0.0
        %637 = vmatpush1.msra.mxu0 0.0
        %638 = vmatprep.subr.mxu0 0.0
        %639 = vmatpush1.msra.mxu0 0.0
        %640 = vmatprep.subr.mxu0 0.0
        %641 = vmatpush1.msra.mxu0 0.0
        %642 = vmatprep.subr.mxu0 0.0
        %643 = vmatpush1.msra.mxu0 0.0
        %644 = vmatprep.subr.mxu0 0.0
        %645 = vmatpush1.msra.mxu0 0.0
        %646 = vmatprep.subr.mxu0 0.0
        %647 = vmatpush1.msra.mxu0 0.0
        %648 = vmatprep.subr.mxu0 0.0
        %649 = vmatpush1.msra.mxu0 0.0
        %650 = vmatprep.subr.mxu0 0.0
        %651 = vmatpush1.msra.mxu0 0.0
        %652 = vmatprep.subr.mxu0 0.0
        %653 = vmatpush1.msra.mxu0 0.0
        %654 = vmatprep.subr.mxu0 0.0
        %655 = vmatpush1.msra.mxu0 0.0
        %656 = vmatprep.subr.mxu0 0.0
        %657 = vmatpush1.msra.mxu0 0.0
        %658 = vmatprep.subr.mxu0 0.0
        %659 = vmatpush1.msra.mxu0 0.0
        %660 = vmatprep.mubr.f32.mxu0 0.0
        %661 = vmatmul.mubr.f32.gmra.mrb[0].mxu0 %v579
        %v662 = vpop.f32.mrb[0].mxu0
        %v663 = vadd.f32 0.0, %v662
        %v664 = vpop.f32.mrb[0].mxu0
        %665 = vdwg.mxu0
        %v666 = vld [vmem:[%s6] sm:$0xff]
        %v667 = vld [vmem:[%s6 + $0x8] sm:$0xff]
        %v668 = vld [vmem:[%s6 + $0x10] sm:$0xff]
        %v669 = vld [vmem:[%s6 + $0x18] sm:$0xff]
        %v670 = vld [vmem:[%s6 + $0x20] sm:$0xff]
        %v671 = vld [vmem:[%s6 + $0x28] sm:$0xff]
        %v672 = vld [vmem:[%s6 + $0x30] sm:$0xff]
        %v673 = vld [vmem:[%s6 + $0x38] sm:$0xff]
        %v674 = vld [vmem:[%s6 + $0x40] sm:$0xff]
        %v675 = vld [vmem:[%s6 + $0x48] sm:$0xff]
        %v676 = vld [vmem:[%s6 + $0x50] sm:$0xff]
        %v677 = vld [vmem:[%s6 + $0x58] sm:$0xff]
        %v678 = vld [vmem:[%s6 + $0x60] sm:$0xff]
        %v679 = vld [vmem:[%s6 + $0x68] sm:$0xff]
        %v680 = vld [vmem:[%s6 + $0x70] sm:$0xff]
        %v681 = vld [vmem:[%s6 + $0x78] sm:$0xff]
        %682 = vmatprep.subr.mxu0 0.0
        %683 = vmatpush1.msra.mxu0 %v666
        %684 = vmatprep.subr.mxu0 0.0
        %685 = vmatpush1.msra.mxu0 %v667
        %686 = vmatprep.subr.mxu0 0.0
        %687 = vmatpush1.msra.mxu0 %v668
        %688 = vmatprep.subr.mxu0 0.0
        %689 = vmatpush1.msra.mxu0 %v669
        %690 = vmatprep.subr.mxu0 0.0
        %691 = vmatpush1.msra.mxu0 %v670
        %692 = vmatprep.subr.mxu0 0.0
        %693 = vmatpush1.msra.mxu0 %v671
        %694 = vmatprep.subr.mxu0 0.0
        %695 = vmatpush1.msra.mxu0 %v672
        %696 = vmatprep.subr.mxu0 0.0
        %697 = vmatpush1.msra.mxu0 %v673
        %698 = vmatprep.subr.mxu0 0.0
        %699 = vmatpush1.msra.mxu0 %v674
        %700 = vmatprep.subr.mxu0 0.0
        %701 = vmatpush1.msra.mxu0 %v675
        %702 = vmatprep.subr.mxu0 0.0
        %703 = vmatpush1.msra.mxu0 %v676
        %704 = vmatprep.subr.mxu0 0.0
        %705 = vmatpush1.msra.mxu0 %v677
        %706 = vmatprep.subr.mxu0 0.0
        %707 = vmatpush1.msra.mxu0 %v678
        %708 = vmatprep.subr.mxu0 0.0
        %709 = vmatpush1.msra.mxu0 %v679
        %710 = vmatprep.subr.mxu0 0.0
        %711 = vmatpush1.msra.mxu0 %v680
        %712 = vmatprep.subr.mxu0 0.0
        %713 = vmatpush1.msra.mxu0 %v681
        %714 = vmatprep.subr.mxu0 0.0
        %715 = vmatpush1.msra.mxu0 0.0
        %716 = vmatprep.subr.mxu0 0.0
        %717 = vmatpush1.msra.mxu0 0.0
        %718 = vmatprep.subr.mxu0 0.0
        %719 = vmatpush1.msra.mxu0 0.0
        %720 = vmatprep.subr.mxu0 0.0
        %721 = vmatpush1.msra.mxu0 0.0
        %722 = vmatprep.subr.mxu0 0.0
        %723 = vmatpush1.msra.mxu0 0.0
        %724 = vmatprep.subr.mxu0 0.0
        %725 = vmatpush1.msra.mxu0 0.0
        %726 = vmatprep.subr.mxu0 0.0
        %727 = vmatpush1.msra.mxu0 0.0
        %728 = vmatprep.subr.mxu0 0.0
        %729 = vmatpush1.msra.mxu0 0.0
        %730 = vmatprep.subr.mxu0 0.0
        %731 = vmatpush1.msra.mxu0 0.0
        %732 = vmatprep.subr.mxu0 0.0
        %733 = vmatpush1.msra.mxu0 0.0
        %734 = vmatprep.subr.mxu0 0.0
        %735 = vmatpush1.msra.mxu0 0.0
        %736 = vmatprep.subr.mxu0 0.0
        %737 = vmatpush1.msra.mxu0 0.0
        %738 = vmatprep.subr.mxu0 0.0
        %739 = vmatpush1.msra.mxu0 0.0
        %740 = vmatprep.subr.mxu0 0.0
        %741 = vmatpush1.msra.mxu0 0.0
        %742 = vmatprep.subr.mxu0 0.0
        %743 = vmatpush1.msra.mxu0 0.0
        %744 = vmatprep.subr.mxu0 0.0
        %745 = vmatpush1.msra.mxu0 0.0
        %746 = vmatprep.mubr.f32.mxu0 0.0
        %747 = vmatmul.mubr.f32.gmra.mrb[0].mxu0 %v579
        %v748 = vpop.f32.mrb[0].mxu0
        %v749 = vadd.f32 0.0, %v748
        %v750 = vpop.f32.mrb[0].mxu0
        %751 = vdwg.mxu0
        %v752 = vld [vmem:[#allocation2] sm:$0xff]
        %v753 = vlaneseq
        %v754 = vshrl.u32 %v753, 7
        %v755 = vstv %s541
        %v756 = vadd.s32 %v755, %v754
        %v757 = vstv %s540
        %v758 = vadd.s32 %v757, %v551
        %vm759 = vcmp.ge.s32.totalorder %v756, %v758
        %vm760 = vcmask 64512
        %v762 = vsel %vm760, %v752, 0
        %v765 = vsel %vm760, %v663, 0
        %767 = vmatprep.subr.mxu0 0.0
        %768 = vmatpush1.xpose.msra.mxu0 %v765
        %769 = vmatprep.subr.mxu0 0.0
        %770 = vmatpush1.xpose.msra.mxu0 0.0
        %771 = vmatprep.subr.mxu0 0.0
        %772 = vmatpush1.xpose.msra.mxu0 0.0
        %773 = vmatprep.subr.mxu0 0.0
        %774 = vmatpush1.xpose.msra.mxu0 0.0
        %775 = vmatprep.subr.mxu0 0.0
        %776 = vmatpush1.xpose.msra.mxu0 0.0
        %777 = vmatprep.subr.mxu0 0.0
        %778 = vmatpush1.xpose.msra.mxu0 0.0
        %779 = vmatprep.subr.mxu0 0.0
        %780 = vmatpush1.xpose.msra.mxu0 0.0
        %781 = vmatprep.subr.mxu0 0.0
        %782 = vmatpush1.xpose.msra.mxu0 0.0
        %783 = vmatprep.subr.mxu0 0.0
        %784 = vmatpush1.xpose.msra.mxu0 0.0
        %785 = vmatprep.subr.mxu0 0.0
        %786 = vmatpush1.xpose.msra.mxu0 0.0
        %787 = vmatprep.subr.mxu0 0.0
        %788 = vmatpush1.xpose.msra.mxu0 0.0
        %789 = vmatprep.subr.mxu0 0.0
        %790 = vmatpush1.xpose.msra.mxu0 0.0
        %791 = vmatprep.subr.mxu0 0.0
        %792 = vmatpush1.xpose.msra.mxu0 0.0
        %793 = vmatprep.subr.mxu0 0.0
        %794 = vmatpush1.xpose.msra.mxu0 0.0
        %795 = vmatprep.subr.mxu0 0.0
        %796 = vmatpush1.xpose.msra.mxu0 0.0
        %797 = vmatprep.subr.mxu0 0.0
        %798 = vmatpush1.xpose.msra.mxu0 0.0
        %799 = vmatprep.subr.mxu0 0.0
        %800 = vmatpush1.xpose.msra.mxu0 0.0
        %801 = vmatprep.subr.mxu0 0.0
        %802 = vmatpush1.xpose.msra.mxu0 0.0
        %803 = vmatprep.subr.mxu0 0.0
        %804 = vmatpush1.xpose.msra.mxu0 0.0
        %805 = vmatprep.subr.mxu0 0.0
        %806 = vmatpush1.xpose.msra.mxu0 0.0
        %807 = vmatprep.subr.mxu0 0.0
        %808 = vmatpush1.xpose.msra.mxu0 0.0
        %809 = vmatprep.subr.mxu0 0.0
        %810 = vmatpush1.xpose.msra.mxu0 0.0
        %811 = vmatprep.subr.mxu0 0.0
        %812 = vmatpush1.xpose.msra.mxu0 0.0
        %813 = vmatprep.subr.mxu0 0.0
        %814 = vmatpush1.xpose.msra.mxu0 0.0
        %815 = vmatprep.subr.mxu0 0.0
        %816 = vmatpush1.xpose.msra.mxu0 0.0
        %817 = vmatprep.subr.mxu0 0.0
        %818 = vmatpush1.xpose.msra.mxu0 0.0
        %819 = vmatprep.subr.mxu0 0.0
        %820 = vmatpush1.xpose.msra.mxu0 0.0
        %821 = vmatprep.subr.mxu0 0.0
        %822 = vmatpush1.xpose.msra.mxu0 0.0
        %823 = vmatprep.subr.mxu0 0.0
        %824 = vmatpush1.xpose.msra.mxu0 0.0
        %825 = vmatprep.subr.mxu0 0.0
        %826 = vmatpush1.xpose.msra.mxu0 0.0
        %827 = vmatprep.subr.mxu0 0.0
        %828 = vmatpush1.xpose.msra.mxu0 0.0
        %829 = vmatprep.subr.mxu0 0.0
        %830 = vmatpush1.xpose.msra.mxu0 0.0
        %831 = vmatprep.mubr.f32.mxu0 0.0
        %832 = vmatmul.mubr.f32.gmra.mrb[0].mxu0 %v762
        %v833 = vpop.f32.mrb[0].mxu0
        %v834 = vadd.f32 0.0, %v833
        %v835 = vpop.f32.mrb[0].mxu0
        %836 = vdwg.mxu0
        %v837 = vmul.f32 %v834, 0.35355338
        %v838 = vsel %vm759, %v837, -1e+30
        %v839 = vld [vmem:[#allocation3] sm:$0xff]
        %v840 = vsel %vm760, %v838, -inf
        %841 = vmax.xlane.f32.xlu0 %v840
        %v842 = vpop.xlane.xlu0 %841
        %v843 = vmax.f32 %v839, %v842
        %v844 = vsub.f32 %v839, %v843
        %v845 = vmul.f32 %v844, 1.442695
        %v846 = vpow.pop %v845
        %848 = vset.pattern.permute.xlu0 0
        %849 = vperm.xlu0 %848, %v843
        %v850 = vpop.permute.xlu0 %849
        %v852 = vsub.f32 %v838, %v850
        %v853 = vmul.f32 %v852, 1.442695
        %v854 = vpow.pop %v853
        %v855 = vld [vmem:[#allocation4] sm:$0xff]
        %v856 = vmul.f32 %v846, %v855
        %v857 = vsel %vm760, %v854, 0.0
        %858 = vadd.xlane.f32.xlu0 %v857
        %v859 = vpop.xlane.xlu0 %858
        %v860 = vadd.f32 %v856, %v859
        %vm861 = vcmask 7168
        %862 = vst.msk [vmem:[#allocation4] sm:$0xff] %vm861, %v860
        %v863 = vld [vmem:[#allocation5] sm:$0xff]
        %865 = vset.pattern.permute.xlu0 0
        %866 = vperm.xlu0 %865, %v846
        %v867 = vpop.permute.xlu0 %866
        %v869 = vmul.f32 %v867, %v863
        %v871 = vsel %vm760, %v854, 0
        %873 = vmatprep.subr.mxu0 0.0
        %874 = vmatpush1.msra.mxu0 %v749
        %875 = vmatprep.subr.mxu0 0.0
        %876 = vmatpush1.msra.mxu0 0.0
        %877 = vmatprep.subr.mxu0 0.0
        %878 = vmatpush1.msra.mxu0 0.0
        %879 = vmatprep.subr.mxu0 0.0
        %880 = vmatpush1.msra.mxu0 0.0
        %881 = vmatprep.subr.mxu0 0.0
        %882 = vmatpush1.msra.mxu0 0.0
        %883 = vmatprep.subr.mxu0 0.0
        %884 = vmatpush1.msra.mxu0 0.0
        %885 = vmatprep.subr.mxu0 0.0
        %886 = vmatpush1.msra.mxu0 0.0
        %887 = vmatprep.subr.mxu0 0.0
        %888 = vmatpush1.msra.mxu0 0.0
        %889 = vmatprep.subr.mxu0 0.0
        %890 = vmatpush1.msra.mxu0 0.0
        %891 = vmatprep.subr.mxu0 0.0
        %892 = vmatpush1.msra.mxu0 0.0
        %893 = vmatprep.subr.mxu0 0.0
        %894 = vmatpush1.msra.mxu0 0.0
        %895 = vmatprep.subr.mxu0 0.0
        %896 = vmatpush1.msra.mxu0 0.0
        %897 = vmatprep.subr.mxu0 0.0
        %898 = vmatpush1.msra.mxu0 0.0
        %899 = vmatprep.subr.mxu0 0.0
        %900 = vmatpush1.msra.mxu0 0.0
        %901 = vmatprep.subr.mxu0 0.0
        %902 = vmatpush1.msra.mxu0 0.0
        %903 = vmatprep.subr.mxu0 0.0
        %904 = vmatpush1.msra.mxu0 0.0
        %905 = vmatprep.subr.mxu0 0.0
        %906 = vmatpush1.msra.mxu0 0.0
        %907 = vmatprep.subr.mxu0 0.0
        %908 = vmatpush1.msra.mxu0 0.0
        %909 = vmatprep.subr.mxu0 0.0
        %910 = vmatpush1.msra.mxu0 0.0
        %911 = vmatprep.subr.mxu0 0.0
        %912 = vmatpush1.msra.mxu0 0.0
        %913 = vmatprep.subr.mxu0 0.0
        %914 = vmatpush1.msra.mxu0 0.0
        %915 = vmatprep.subr.mxu0 0.0
        %916 = vmatpush1.msra.mxu0 0.0
        %917 = vmatprep.subr.mxu0 0.0
        %918 = vmatpush1.msra.mxu0 0.0
        %919 = vmatprep.subr.mxu0 0.0
        %920 = vmatpush1.msra.mxu0 0.0
        %921 = vmatprep.subr.mxu0 0.0
        %922 = vmatpush1.msra.mxu0 0.0
        %923 = vmatprep.subr.mxu0 0.0
        %924 = vmatpush1.msra.mxu0 0.0
        %925 = vmatprep.subr.mxu0 0.0
        %926 = vmatpush1.msra.mxu0 0.0
        %927 = vmatprep.subr.mxu0 0.0
        %928 = vmatpush1.msra.mxu0 0.0
        %929 = vmatprep.subr.mxu0 0.0
        %930 = vmatpush1.msra.mxu0 0.0
        %931 = vmatprep.subr.mxu0 0.0
        %932 = vmatpush1.msra.mxu0 0.0
        %933 = vmatprep.subr.mxu0 0.0
        %934 = vmatpush1.msra.mxu0 0.0
        %935 = vmatprep.subr.mxu0 0.0
        %936 = vmatpush1.msra.mxu0 0.0
        %937 = vmatprep.mubr.f32.mxu0 0.0
        %938 = vmatmul.mubr.f32.gmra.mrb[0].mxu0 %v871
        %v939 = vpop.f32.mrb[0].mxu0
        %v940 = vadd.f32 0.0, %v939
        %v941 = vpop.f32.mrb[0].mxu0
        %942 = vdwg.mxu0
        %v943 = vadd.f32 %v869, %v940
        %944 = vst.msk [vmem:[#allocation5] sm:$0xff] %vm760, %v943
        %945 = vst.msk [vmem:[#allocation3] sm:$0xff] %vm861, %v843
        %946 = vrot.lane.b32.xlu0 %v752, 120
        %v947 = vpop.permute.xlu0 %946
        %948 = vrot.lane.b32.xlu0 %v663, 120
        %v949 = vpop.permute.xlu0 %948
        %v950 = vsel %vm760, %v947, 0
        %v952 = vsel %vm760, %v949, 0
        %954 = vmatprep.subr.mxu0 0.0
        %955 = vmatpush1.xpose.msra.mxu0 %v952
        %956 = vmatprep.subr.mxu0 0.0
        %957 = vmatpush1.xpose.msra.mxu0 0.0
        %958 = vmatprep.subr.mxu0 0.0
        %959 = vmatpush1.xpose.msra.mxu0 0.0
        %960 = vmatprep.subr.mxu0 0.0
        %961 = vmatpush1.xpose.msra.mxu0 0.0
        %962 = vmatprep.subr.mxu0 0.0
        %963 = vmatpush1.xpose.msra.mxu0 0.0
        %964 = vmatprep.subr.mxu0 0.0
        %965 = vmatpush1.xpose.msra.mxu0 0.0
        %966 = vmatprep.subr.mxu0 0.0
        %967 = vmatpush1.xpose.msra.mxu0 0.0
        %968 = vmatprep.subr.mxu0 0.0
        %969 = vmatpush1.xpose.msra.mxu0 0.0
        %970 = vmatprep.subr.mxu0 0.0
        %971 = vmatpush1.xpose.msra.mxu0 0.0
        %972 = vmatprep.subr.mxu0 0.0
        %973 = vmatpush1.xpose.msra.mxu0 0.0
        %974 = vmatprep.subr.mxu0 0.0
        %975 = vmatpush1.xpose.msra.mxu0 0.0
        %976 = vmatprep.subr.mxu0 0.0
        %977 = vmatpush1.xpose.msra.mxu0 0.0
        %978 = vmatprep.subr.mxu0 0.0
        %979 = vmatpush1.xpose.msra.mxu0 0.0
        %980 = vmatprep.subr.mxu0 0.0
        %981 = vmatpush1.xpose.msra.mxu0 0.0
        %982 = vmatprep.subr.mxu0 0.0
        %983 = vmatpush1.xpose.msra.mxu0 0.0
        %984 = vmatprep.subr.mxu0 0.0
        %985 = vmatpush1.xpose.msra.mxu0 0.0
        %986 = vmatprep.subr.mxu0 0.0
        %987 = vmatpush1.xpose.msra.mxu0 0.0
        %988 = vmatprep.subr.mxu0 0.0
        %989 = vmatpush1.xpose.msra.mxu0 0.0
        %990 = vmatprep.subr.mxu0 0.0
        %991 = vmatpush1.xpose.msra.mxu0 0.0
        %992 = vmatprep.subr.mxu0 0.0
        %993 = vmatpush1.xpose.msra.mxu0 0.0
        %994 = vmatprep.subr.mxu0 0.0
        %995 = vmatpush1.xpose.msra.mxu0 0.0
        %996 = vmatprep.subr.mxu0 0.0
        %997 = vmatpush1.xpose.msra.mxu0 0.0
        %998 = vmatprep.subr.mxu0 0.0
        %999 = vmatpush1.xpose.msra.mxu0 0.0
        %1000 = vmatprep.subr.mxu0 0.0
        %1001 = vmatpush1.xpose.msra.mxu0 0.0
        %1002 = vmatprep.subr.mxu0 0.0
        %1003 = vmatpush1.xpose.msra.mxu0 0.0
        %1004 = vmatprep.subr.mxu0 0.0
        %1005 = vmatpush1.xpose.msra.mxu0 0.0
        %1006 = vmatprep.subr.mxu0 0.0
        %1007 = vmatpush1.xpose.msra.mxu0 0.0
        %1008 = vmatprep.subr.mxu0 0.0
        %1009 = vmatpush1.xpose.msra.mxu0 0.0
        %1010 = vmatprep.subr.mxu0 0.0
        %1011 = vmatpush1.xpose.msra.mxu0 0.0
        %1012 = vmatprep.subr.mxu0 0.0
        %1013 = vmatpush1.xpose.msra.mxu0 0.0
        %1014 = vmatprep.subr.mxu0 0.0
        %1015 = vmatpush1.xpose.msra.mxu0 0.0
        %1016 = vmatprep.subr.mxu0 0.0
        %1017 = vmatpush1.xpose.msra.mxu0 0.0
        %1018 = vmatprep.mubr.f32.mxu0 0.0
        %1019 = vmatmul.mubr.f32.gmra.mrb[0].mxu0 %v950
        %v1020 = vpop.f32.mrb[0].mxu0
        %v1021 = vadd.f32 0.0, %v1020
        %v1022 = vpop.f32.mrb[0].mxu0
        %1023 = vdwg.mxu0
        %v1024 = vmul.f32 %v1021, 0.35355338
        %v1025 = vsel %vm759, %v1024, -1e+30
        %s1026 = scalar_lea.vmem [#allocation3], 8
        %v1027 = vld [vmem:[%s1026] sm:$0xff]
        %v1028 = vsel %vm760, %v1025, -inf
        %1029 = vmax.xlane.f32.xlu0 %v1028
        %v1030 = vpop.xlane.xlu0 %1029
        %v1031 = vmax.f32 %v1027, %v1030
        %v1032 = vsub.f32 %v1027, %v1031
        %v1033 = vmul.f32 %v1032, 1.442695
        %v1034 = vpow.pop %v1033
        %1036 = vset.pattern.permute.xlu0 0
        %1037 = vperm.xlu0 %1036, %v1031
        %v1038 = vpop.permute.xlu0 %1037
        %v1040 = vsub.f32 %v1025, %v1038
        %v1041 = vmul.f32 %v1040, 1.442695
        %v1042 = vpow.pop %v1041
        %s1043 = scalar_lea.vmem [#allocation4], 8
        %v1044 = vld [vmem:[%s1043] sm:$0xff]
        %v1045 = vmul.f32 %v1034, %v1044
        %v1046 = vsel %vm760, %v1042, 0.0
        %1047 = vadd.xlane.f32.xlu0 %v1046
        %v1048 = vpop.xlane.xlu0 %1047
        %v1049 = vadd.f32 %v1045, %v1048
        %1050 = vst.msk [vmem:[%s1043] sm:$0xff] %vm861, %v1049
        %s1051 = scalar_lea.vmem [#allocation5], 8
        %v1052 = vld [vmem:[%s1051] sm:$0xff]
        %1054 = vset.pattern.permute.xlu0 0
        %1055 = vperm.xlu0 %1054, %v1034
        %v1056 = vpop.permute.xlu0 %1055
        %v1058 = vmul.f32 %v1056, %v1052
        %1060 = vrot.lane.b32.xlu0 %v749, 120
        %v1061 = vpop.permute.xlu0 %1060
        %v1064 = vsel %vm760, %v1042, 0
        %1066 = vmatprep.subr.mxu0 0.0
        %1067 = vmatpush1.msra.mxu0 %v1061
        %1068 = vmatprep.subr.mxu0 0.0
        %1069 = vmatpush1.msra.mxu0 0.0
        %1070 = vmatprep.subr.mxu0 0.0
        %1071 = vmatpush1.msra.mxu0 0.0
        %1072 = vmatprep.subr.mxu0 0.0
        %1073 = vmatpush1.msra.mxu0 0.0
        %1074 = vmatprep.subr.mxu0 0.0
        %1075 = vmatpush1.msra.mxu0 0.0
        %1076 = vmatprep.subr.mxu0 0.0
        %1077 = vmatpush1.msra.mxu0 0.0
        %1078 = vmatprep.subr.mxu0 0.0
        %1079 = vmatpush1.msra.mxu0 0.0
        %1080 = vmatprep.subr.mxu0 0.0
        %1081 = vmatpush1.msra.mxu0 0.0
        %1082 = vmatprep.subr.mxu0 0.0
        %1083 = vmatpush1.msra.mxu0 0.0
        %1084 = vmatprep.subr.mxu0 0.0
        %1085 = vmatpush1.msra.mxu0 0.0
        %1086 = vmatprep.subr.mxu0 0.0
        %1087 = vmatpush1.msra.mxu0 0.0
        %1088 = vmatprep.subr.mxu0 0.0
        %1089 = vmatpush1.msra.mxu0 0.0
        %1090 = vmatprep.subr.mxu0 0.0
        %1091 = vmatpush1.msra.mxu0 0.0
        %1092 = vmatprep.subr.mxu0 0.0
        %1093 = vmatpush1.msra.mxu0 0.0
        %1094 = vmatprep.subr.mxu0 0.0
        %1095 = vmatpush1.msra.mxu0 0.0
        %1096 = vmatprep.subr.mxu0 0.0
        %1097 = vmatpush1.msra.mxu0 0.0
        %1098 = vmatprep.subr.mxu0 0.0
        %1099 = vmatpush1.msra.mxu0 0.0
        %1100 = vmatprep.subr.mxu0 0.0
        %1101 = vmatpush1.msra.mxu0 0.0
        %1102 = vmatprep.subr.mxu0 0.0
        %1103 = vmatpush1.msra.mxu0 0.0
        %1104 = vmatprep.subr.mxu0 0.0
        %1105 = vmatpush1.msra.mxu0 0.0
        %1106 = vmatprep.subr.mxu0 0.0
        %1107 = vmatpush1.msra.mxu0 0.0
        %1108 = vmatprep.subr.mxu0 0.0
        %1109 = vmatpush1.msra.mxu0 0.0
        %1110 = vmatprep.subr.mxu0 0.0
        %1111 = vmatpush1.msra.mxu0 0.0
        %1112 = vmatprep.subr.mxu0 0.0
        %1113 = vmatpush1.msra.mxu0 0.0
        %1114 = vmatprep.subr.mxu0 0.0
        %1115 = vmatpush1.msra.mxu0 0.0
        %1116 = vmatprep.subr.mxu0 0.0
        %1117 = vmatpush1.msra.mxu0 0.0
        %1118 = vmatprep.subr.mxu0 0.0
        %1119 = vmatpush1.msra.mxu0 0.0
        %1120 = vmatprep.subr.mxu0 0.0
        %1121 = vmatpush1.msra.mxu0 0.0
        %1122 = vmatprep.subr.mxu0 0.0
        %1123 = vmatpush1.msra.mxu0 0.0
        %1124 = vmatprep.subr.mxu0 0.0
        %1125 = vmatpush1.msra.mxu0 0.0
        %1126 = vmatprep.subr.mxu0 0.0
        %1127 = vmatpush1.msra.mxu0 0.0
        %1128 = vmatprep.subr.mxu0 0.0
        %1129 = vmatpush1.msra.mxu0 0.0
        %1130 = vmatprep.mubr.f32.mxu0 0.0
        %1131 = vmatmul.mubr.f32.gmra.mrb[0].mxu0 %v1064
        %v1132 = vpop.f32.mrb[0].mxu0
        %v1133 = vadd.f32 0.0, %v1132
        %v1134 = vpop.f32.mrb[0].mxu0
        %1135 = vdwg.mxu0
        %v1136 = vadd.f32 %v1058, %v1133
        %1137 = vst.msk [vmem:[%s1051] sm:$0xff] %vm760, %v1136
        %1138 = vst.msk [vmem:[%s1026] sm:$0xff] %vm861, %v1031
        %1139 = vrot.lane.b32.xlu0 %v752, 112
        %v1140 = vpop.permute.xlu0 %1139
        %1141 = vrot.lane.b32.xlu0 %v663, 112
        %v1142 = vpop.permute.xlu0 %1141
        %v1143 = vsel %vm760, %v1140, 0
        %v1145 = vsel %vm760, %v1142, 0
        %1147 = vmatprep.subr.mxu0 0.0
        %1148 = vmatpush1.xpose.msra.mxu0 %v1145
        %1149 = vmatprep.subr.mxu0 0.0
        %1150 = vmatpush1.xpose.msra.mxu0 0.0
        %1151 = vmatprep.subr.mxu0 0.0
        %1152 = vmatpush1.xpose.msra.mxu0 0.0
        %1153 = vmatprep.subr.mxu0 0.0
        %1154 = vmatpush1.xpose.msra.mxu0 0.0
        %1155 = vmatprep.subr.mxu0 0.0
        %1156 = vmatpush1.xpose.msra.mxu0 0.0
        %1157 = vmatprep.subr.mxu0 0.0
        %1158 = vmatpush1.xpose.msra.mxu0 0.0
        %1159 = vmatprep.subr.mxu0 0.0
        %1160 = vmatpush1.xpose.msra.mxu0 0.0
        %1161 = vmatprep.subr.mxu0 0.0
        %1162 = vmatpush1.xpose.msra.mxu0 0.0
        %1163 = vmatprep.subr.mxu0 0.0
        %1164 = vmatpush1.xpose.msra.mxu0 0.0
        %1165 = vmatprep.subr.mxu0 0.0
        %1166 = vmatpush1.xpose.msra.mxu0 0.0
        %1167 = vmatprep.subr.mxu0 0.0
        %1168 = vmatpush1.xpose.msra.mxu0 0.0
        %1169 = vmatprep.subr.mxu0 0.0
        %1170 = vmatpush1.xpose.msra.mxu0 0.0
        %1171 = vmatprep.subr.mxu0 0.0
        %1172 = vmatpush1.xpose.msra.mxu0 0.0
        %1173 = vmatprep.subr.mxu0 0.0
        %1174 = vmatpush1.xpose.msra.mxu0 0.0
        %1175 = vmatprep.subr.mxu0 0.0
        %1176 = vmatpush1.xpose.msra.mxu0 0.0
        %1177 = vmatprep.subr.mxu0 0.0
        %1178 = vmatpush1.xpose.msra.mxu0 0.0
        %1179 = vmatprep.subr.mxu0 0.0
        %1180 = vmatpush1.xpose.msra.mxu0 0.0
        %1181 = vmatprep.subr.mxu0 0.0
        %1182 = vmatpush1.xpose.msra.mxu0 0.0
        %1183 = vmatprep.subr.mxu0 0.0
        %1184 = vmatpush1.xpose.msra.mxu0 0.0
        %1185 = vmatprep.subr.mxu0 0.0
        %1186 = vmatpush1.xpose.msra.mxu0 0.0
        %1187 = vmatprep.subr.mxu0 0.0
        %1188 = vmatpush1.xpose.msra.mxu0 0.0
        %1189 = vmatprep.subr.mxu0 0.0
        %1190 = vmatpush1.xpose.msra.mxu0 0.0
        %1191 = vmatprep.subr.mxu0 0.0
        %1192 = vmatpush1.xpose.msra.mxu0 0.0
        %1193 = vmatprep.subr.mxu0 0.0
        %1194 = vmatpush1.xpose.msra.mxu0 0.0
        %1195 = vmatprep.subr.mxu0 0.0
        %1196 = vmatpush1.xpose.msra.mxu0 0.0
        %1197 = vmatprep.subr.mxu0 0.0
        %1198 = vmatpush1.xpose.msra.mxu0 0.0
        %1199 = vmatprep.subr.mxu0 0.0
        %1200 = vmatpush1.xpose.msra.mxu0 0.0
        %1201 = vmatprep.subr.mxu0 0.0
        %1202 = vmatpush1.xpose.msra.mxu0 0.0
        %1203 = vmatprep.subr.mxu0 0.0
        %1204 = vmatpush1.xpose.msra.mxu0 0.0
        %1205 = vmatprep.subr.mxu0 0.0
        %1206 = vmatpush1.xpose.msra.mxu0 0.0
        %1207 = vmatprep.subr.mxu0 0.0
        %1208 = vmatpush1.xpose.msra.mxu0 0.0
        %1209 = vmatprep.subr.mxu0 0.0
        %1210 = vmatpush1.xpose.msra.mxu0 0.0
        %1211 = vmatprep.mubr.f32.mxu0 0.0
        %1212 = vmatmul.mubr.f32.gmra.mrb[0].mxu0 %v1143
        %v1213 = vpop.f32.mrb[0].mxu0
        %v1214 = vadd.f32 0.0, %v1213
        %v1215 = vpop.f32.mrb[0].mxu0
        %1216 = vdwg.mxu0
        %v1217 = vmul.f32 %v1214, 0.35355338
        %v1218 = vsel %vm759, %v1217, -1e+30
        %s1219 = scalar_lea.vmem [#allocation3], 16
        %v1220 = vld [vmem:[%s1219] sm:$0xff]
        %v1221 = vsel %vm760, %v1218, -inf
        %1222 = vmax.xlane.f32.xlu0 %v1221
        %v1223 = vpop.xlane.xlu0 %1222
        %v1224 = vmax.f32 %v1220, %v1223
        %v1225 = vsub.f32 %v1220, %v1224
        %v1226 = vmul.f32 %v1225, 1.442695
        %v1227 = vpow.pop %v1226
        %1229 = vset.pattern.permute.xlu0 0
        %1230 = vperm.xlu0 %1229, %v1224
        %v1231 = vpop.permute.xlu0 %1230
        %v1233 = vsub.f32 %v1218, %v1231
        %v1234 = vmul.f32 %v1233, 1.442695
        %v1235 = vpow.pop %v1234
        %s1236 = scalar_lea.vmem [#allocation4], 16
        %v1237 = vld [vmem:[%s1236] sm:$0xff]
        %v1238 = vmul.f32 %v1227, %v1237
        %v1239 = vsel %vm760, %v1235, 0.0
        %1240 = vadd.xlane.f32.xlu0 %v1239
        %v1241 = vpop.xlane.xlu0 %1240
        %v1242 = vadd.f32 %v1238, %v1241
        %1243 = vst.msk [vmem:[%s1236] sm:$0xff] %vm861, %v1242
        %s1244 = scalar_lea.vmem [#allocation5], 16
        %v1245 = vld [vmem:[%s1244] sm:$0xff]
        %1247 = vset.pattern.permute.xlu0 0
        %1248 = vperm.xlu0 %1247, %v1227
        %v1249 = vpop.permute.xlu0 %1248
        %v1251 = vmul.f32 %v1249, %v1245
        %1252 = vrot.lane.b32.xlu0 %v749, 112
        %v1253 = vpop.permute.xlu0 %1252
        %v1256 = vsel %vm760, %v1235, 0
        %1258 = vmatprep.subr.mxu0 0.0
        %1259 = vmatpush1.msra.mxu0 %v1253
        %1260 = vmatprep.subr.mxu0 0.0
        %1261 = vmatpush1.msra.mxu0 0.0
        %1262 = vmatprep.subr.mxu0 0.0
        %1263 = vmatpush1.msra.mxu0 0.0
        %1264 = vmatprep.subr.mxu0 0.0
        %1265 = vmatpush1.msra.mxu0 0.0
        %1266 = vmatprep.subr.mxu0 0.0
        %1267 = vmatpush1.msra.mxu0 0.0
        %1268 = vmatprep.subr.mxu0 0.0
        %1269 = vmatpush1.msra.mxu0 0.0
        %1270 = vmatprep.subr.mxu0 0.0
        %1271 = vmatpush1.msra.mxu0 0.0
        %1272 = vmatprep.subr.mxu0 0.0
        %1273 = vmatpush1.msra.mxu0 0.0
        %1274 = vmatprep.subr.mxu0 0.0
        %1275 = vmatpush1.msra.mxu0 0.0
        %1276 = vmatprep.subr.mxu0 0.0
        %1277 = vmatpush1.msra.mxu0 0.0
        %1278 = vmatprep.subr.mxu0 0.0
        %1279 = vmatpush1.msra.mxu0 0.0
        %1280 = vmatprep.subr.mxu0 0.0
        %1281 = vmatpush1.msra.mxu0 0.0
        %1282 = vmatprep.subr.mxu0 0.0
        %1283 = vmatpush1.msra.mxu0 0.0
        %1284 = vmatprep.subr.mxu0 0.0
        %1285 = vmatpush1.msra.mxu0 0.0
        %1286 = vmatprep.subr.mxu0 0.0
        %1287 = vmatpush1.msra.mxu0 0.0
        %1288 = vmatprep.subr.mxu0 0.0
        %1289 = vmatpush1.msra.mxu0 0.0
        %1290 = vmatprep.subr.mxu0 0.0
        %1291 = vmatpush1.msra.mxu0 0.0
        %1292 = vmatprep.subr.mxu0 0.0
        %1293 = vmatpush1.msra.mxu0 0.0
        %1294 = vmatprep.subr.mxu0 0.0
        %1295 = vmatpush1.msra.mxu0 0.0
        %1296 = vmatprep.subr.mxu0 0.0
        %1297 = vmatpush1.msra.mxu0 0.0
        %1298 = vmatprep.subr.mxu0 0.0
        %1299 = vmatpush1.msra.mxu0 0.0
        %1300 = vmatprep.subr.mxu0 0.0
        %1301 = vmatpush1.msra.mxu0 0.0
        %1302 = vmatprep.subr.mxu0 0.0
        %1303 = vmatpush1.msra.mxu0 0.0
        %1304 = vmatprep.subr.mxu0 0.0
        %1305 = vmatpush1.msra.mxu0 0.0
        %1306 = vmatprep.subr.mxu0 0.0
        %1307 = vmatpush1.msra.mxu0 0.0
        %1308 = vmatprep.subr.mxu0 0.0
        %1309 = vmatpush1.msra.mxu0 0.0
        %1310 = vmatprep.subr.mxu0 0.0
        %1311 = vmatpush1.msra.mxu0 0.0
        %1312 = vmatprep.subr.mxu0 0.0
        %1313 = vmatpush1.msra.mxu0 0.0
        %1314 = vmatprep.subr.mxu0 0.0
        %1315 = vmatpush1.msra.mxu0 0.0
        %1316 = vmatprep.subr.mxu0 0.0
        %1317 = vmatpush1.msra.mxu0 0.0
        %1318 = vmatprep.subr.mxu0 0.0
        %1319 = vmatpush1.msra.mxu0 0.0
        %1320 = vmatprep.subr.mxu0 0.0
        %1321 = vmatpush1.msra.mxu0 0.0
        %1322 = vmatprep.mubr.f32.mxu0 0.0
        %1323 = vmatmul.mubr.f32.gmra.mrb[0].mxu0 %v1256
        %v1324 = vpop.f32.mrb[0].mxu0
        %v1325 = vadd.f32 0.0, %v1324
        %v1326 = vpop.f32.mrb[0].mxu0
        %1327 = vdwg.mxu0
        %v1328 = vadd.f32 %v1251, %v1325
        %1329 = vst.msk [vmem:[%s1244] sm:$0xff] %vm760, %v1328
        %1330 = vst.msk [vmem:[%s1219] sm:$0xff] %vm861, %v1224
        %1331 = vrot.lane.b32.xlu0 %v752, 104
        %v1332 = vpop.permute.xlu0 %1331
        %1333 = vrot.lane.b32.xlu0 %v663, 104
        %v1334 = vpop.permute.xlu0 %1333
        %v1335 = vsel %vm760, %v1332, 0
        %v1337 = vsel %vm760, %v1334, 0
        %1339 = vmatprep.subr.mxu0 0.0
        %1340 = vmatpush1.xpose.msra.mxu0 %v1337
        %1341 = vmatprep.subr.mxu0 0.0
        %1342 = vmatpush1.xpose.msra.mxu0 0.0
        %1343 = vmatprep.subr.mxu0 0.0
        %1344 = vmatpush1.xpose.msra.mxu0 0.0
        %1345 = vmatprep.subr.mxu0 0.0
        %1346 = vmatpush1.xpose.msra.mxu0 0.0
        %1347 = vmatprep.subr.mxu0 0.0
        %1348 = vmatpush1.xpose.msra.mxu0 0.0
        %1349 = vmatprep.subr.mxu0 0.0
        %1350 = vmatpush1.xpose.msra.mxu0 0.0
        %1351 = vmatprep.subr.mxu0 0.0
        %1352 = vmatpush1.xpose.msra.mxu0 0.0
        %1353 = vmatprep.subr.mxu0 0.0
        %1354 = vmatpush1.xpose.msra.mxu0 0.0
        %1355 = vmatprep.subr.mxu0 0.0
        %1356 = vmatpush1.xpose.msra.mxu0 0.0
        %1357 = vmatprep.subr.mxu0 0.0
        %1358 = vmatpush1.xpose.msra.mxu0 0.0
        %1359 = vmatprep.subr.mxu0 0.0
        %1360 = vmatpush1.xpose.msra.mxu0 0.0
        %1361 = vmatprep.subr.mxu0 0.0
        %1362 = vmatpush1.xpose.msra.mxu0 0.0
        %1363 = vmatprep.subr.mxu0 0.0
        %1364 = vmatpush1.xpose.msra.mxu0 0.0
        %1365 = vmatprep.subr.mxu0 0.0
        %1366 = vmatpush1.xpose.msra.mxu0 0.0
        %1367 = vmatprep.subr.mxu0 0.0
        %1368 = vmatpush1.xpose.msra.mxu0 0.0
        %1369 = vmatprep.subr.mxu0 0.0
        %1370 = vmatpush1.xpose.msra.mxu0 0.0
        %1371 = vmatprep.subr.mxu0 0.0
        %1372 = vmatpush1.xpose.msra.mxu0 0.0
        %1373 = vmatprep.subr.mxu0 0.0
        %1374 = vmatpush1.xpose.msra.mxu0 0.0
        %1375 = vmatprep.subr.mxu0 0.0
        %1376 = vmatpush1.xpose.msra.mxu0 0.0
        %1377 = vmatprep.subr.mxu0 0.0
        %1378 = vmatpush1.xpose.msra.mxu0 0.0
        %1379 = vmatprep.subr.mxu0 0.0
        %1380 = vmatpush1.xpose.msra.mxu0 0.0
        %1381 = vmatprep.subr.mxu0 0.0
        %1382 = vmatpush1.xpose.msra.mxu0 0.0
        %1383 = vmatprep.subr.mxu0 0.0
        %1384 = vmatpush1.xpose.msra.mxu0 0.0
        %1385 = vmatprep.subr.mxu0 0.0
        %1386 = vmatpush1.xpose.msra.mxu0 0.0
        %1387 = vmatprep.subr.mxu0 0.0
        %1388 = vmatpush1.xpose.msra.mxu0 0.0
        %1389 = vmatprep.subr.mxu0 0.0
        %1390 = vmatpush1.xpose.msra.mxu0 0.0
        %1391 = vmatprep.subr.mxu0 0.0
        %1392 = vmatpush1.xpose.msra.mxu0 0.0
        %1393 = vmatprep.subr.mxu0 0.0
        %1394 = vmatpush1.xpose.msra.mxu0 0.0
        %1395 = vmatprep.subr.mxu0 0.0
        %1396 = vmatpush1.xpose.msra.mxu0 0.0
        %1397 = vmatprep.subr.mxu0 0.0
        %1398 = vmatpush1.xpose.msra.mxu0 0.0
        %1399 = vmatprep.subr.mxu0 0.0
        %1400 = vmatpush1.xpose.msra.mxu0 0.0
        %1401 = vmatprep.subr.mxu0 0.0
        %1402 = vmatpush1.xpose.msra.mxu0 0.0
        %1403 = vmatprep.mubr.f32.mxu0 0.0
        %1404 = vmatmul.mubr.f32.gmra.mrb[0].mxu0 %v1335
        %v1405 = vpop.f32.mrb[0].mxu0
        %v1406 = vadd.f32 0.0, %v1405
        %v1407 = vpop.f32.mrb[0].mxu0
        %1408 = vdwg.mxu0
        %v1409 = vmul.f32 %v1406, 0.35355338
        %v1410 = vsel %vm759, %v1409, -1e+30
        %s1411 = scalar_lea.vmem [#allocation3], 24
        %v1412 = vld [vmem:[%s1411] sm:$0xff]
        %v1413 = vsel %vm760, %v1410, -inf
        %1414 = vmax.xlane.f32.xlu0 %v1413
        %v1415 = vpop.xlane.xlu0 %1414
        %v1416 = vmax.f32 %v1412, %v1415
        %v1417 = vsub.f32 %v1412, %v1416
        %v1418 = vmul.f32 %v1417, 1.442695
        %v1419 = vpow.pop %v1418
        %1421 = vset.pattern.permute.xlu0 0
        %1422 = vperm.xlu0 %1421, %v1416
        %v1423 = vpop.permute.xlu0 %1422
        %v1425 = vsub.f32 %v1410, %v1423
        %v1426 = vmul.f32 %v1425, 1.442695
        %v1427 = vpow.pop %v1426
        %s1428 = scalar_lea.vmem [#allocation4], 24
        %v1429 = vld [vmem:[%s1428] sm:$0xff]
        %v1430 = vmul.f32 %v1419, %v1429
        %v1431 = vsel %vm760, %v1427, 0.0
        %1432 = vadd.xlane.f32.xlu0 %v1431
        %v1433 = vpop.xlane.xlu0 %1432
        %v1434 = vadd.f32 %v1430, %v1433
        %1435 = vst.msk [vmem:[%s1428] sm:$0xff] %vm861, %v1434
        %s1436 = scalar_lea.vmem [#allocation5], 24
        %v1437 = vld [vmem:[%s1436] sm:$0xff]
        %1439 = vset.pattern.permute.xlu0 0
        %1440 = vperm.xlu0 %1439, %v1419
        %v1441 = vpop.permute.xlu0 %1440
        %v1443 = vmul.f32 %v1441, %v1437
        %1444 = vrot.lane.b32.xlu0 %v749, 104
        %v1445 = vpop.permute.xlu0 %1444
        %v1448 = vsel %vm760, %v1427, 0
        %1450 = vmatprep.subr.mxu0 0.0
        %1451 = vmatpush1.msra.mxu0 %v1445
        %1452 = vmatprep.subr.mxu0 0.0
        %1453 = vmatpush1.msra.mxu0 0.0
        %1454 = vmatprep.subr.mxu0 0.0
        %1455 = vmatpush1.msra.mxu0 0.0
        %1456 = vmatprep.subr.mxu0 0.0
        %1457 = vmatpush1.msra.mxu0 0.0
        %1458 = vmatprep.subr.mxu0 0.0
        %1459 = vmatpush1.msra.mxu0 0.0
        %1460 = vmatprep.subr.mxu0 0.0
        %1461 = vmatpush1.msra.mxu0 0.0
        %1462 = vmatprep.subr.mxu0 0.0
        %1463 = vmatpush1.msra.mxu0 0.0
        %1464 = vmatprep.subr.mxu0 0.0
        %1465 = vmatpush1.msra.mxu0 0.0
        %1466 = vmatprep.subr.mxu0 0.0
        %1467 = vmatpush1.msra.mxu0 0.0
        %1468 = vmatprep.subr.mxu0 0.0
        %1469 = vmatpush1.msra.mxu0 0.0
        %1470 = vmatprep.subr.mxu0 0.0
        %1471 = vmatpush1.msra.mxu0 0.0
        %1472 = vmatprep.subr.mxu0 0.0
        %1473 = vmatpush1.msra.mxu0 0.0
        %1474 = vmatprep.subr.mxu0 0.0
        %1475 = vmatpush1.msra.mxu0 0.0
        %1476 = vmatprep.subr.mxu0 0.0
        %1477 = vmatpush1.msra.mxu0 0.0
        %1478 = vmatprep.subr.mxu0 0.0
        %1479 = vmatpush1.msra.mxu0 0.0
        %1480 = vmatprep.subr.mxu0 0.0
        %1481 = vmatpush1.msra.mxu0 0.0
        %1482 = vmatprep.subr.mxu0 0.0
        %1483 = vmatpush1.msra.mxu0 0.0
        %1484 = vmatprep.subr.mxu0 0.0
        %1485 = vmatpush1.msra.mxu0 0.0
        %1486 = vmatprep.subr.mxu0 0.0
        %1487 = vmatpush1.msra.mxu0 0.0
        %1488 = vmatprep.subr.mxu0 0.0
        %1489 = vmatpush1.msra.mxu0 0.0
        %1490 = vmatprep.subr.mxu0 0.0
        %1491 = vmatpush1.msra.mxu0 0.0
        %1492 = vmatprep.subr.mxu0 0.0
        %1493 = vmatpush1.msra.mxu0 0.0
        %1494 = vmatprep.subr.mxu0 0.0
        %1495 = vmatpush1.msra.mxu0 0.0
        %1496 = vmatprep.subr.mxu0 0.0
        %1497 = vmatpush1.msra.mxu0 0.0
        %1498 = vmatprep.subr.mxu0 0.0
        %1499 = vmatpush1.msra.mxu0 0.0
        %1500 = vmatprep.subr.mxu0 0.0
        %1501 = vmatpush1.msra.mxu0 0.0
        %1502 = vmatprep.subr.mxu0 0.0
        %1503 = vmatpush1.msra.mxu0 0.0
        %1504 = vmatprep.subr.mxu0 0.0
        %1505 = vmatpush1.msra.mxu0 0.0
        %1506 = vmatprep.subr.mxu0 0.0
        %1507 = vmatpush1.msra.mxu0 0.0
        %1508 = vmatprep.subr.mxu0 0.0
        %1509 = vmatpush1.msra.mxu0 0.0
        %1510 = vmatprep.subr.mxu0 0.0
        %1511 = vmatpush1.msra.mxu0 0.0
        %1512 = vmatprep.subr.mxu0 0.0
        %1513 = vmatpush1.msra.mxu0 0.0
        %1514 = vmatprep.mubr.f32.mxu0 0.0
        %1515 = vmatmul.mubr.f32.gmra.mrb[0].mxu0 %v1448
        %v1516 = vpop.f32.mrb[0].mxu0
        %v1517 = vadd.f32 0.0, %v1516
        %v1518 = vpop.f32.mrb[0].mxu0
        %1519 = vdwg.mxu0
        %v1520 = vadd.f32 %v1443, %v1517
        %1521 = vst.msk [vmem:[%s1436] sm:$0xff] %vm760, %v1520
        %1522 = vst.msk [vmem:[%s1411] sm:$0xff] %vm861, %v1416
      $region64: #{block_forward.2} parent=55 // pred_fallthru
        _
      %p1523 = scmp.eq.s32.totalorder %s27, 1
      // Predicated region
      $region65: #{block_forward.2} parent=55 // pred_check
        %p1524 = pneg %p1523
      $region66: #{block_forward.2} parent=55 // pred_check_branch
        %1526 = sbr.rel (%p1524) target = $region68
      $region67: #{block_forward.2} parent=55 // pred_region
        %v1527 = vld [vmem:[#allocation4] sm:$0xff]
        %v1528 = vrcp.pop %v1527
        %v1529 = vld [vmem:[#allocation5] sm:$0xff]
        %1531 = vset.pattern.permute.xlu0 0
        %1532 = vperm.xlu0 %1531, %v1528
        %v1533 = vpop.permute.xlu0 %1532
        %v1535 = vmul.f32 %v1529, %v1533
        %v1536 = vld [vmem:[%s7] sm:$0xff]
        %s1537 = scalar_lea.vmem [#allocation4], 8
        %v1538 = vld [vmem:[%s1537] sm:$0xff]
        %v1539 = vrcp.pop %v1538
        %s1540 = scalar_lea.vmem [#allocation5], 8
        %v1541 = vld [vmem:[%s1540] sm:$0xff]
        %1543 = vset.pattern.permute.xlu0 0
        %1544 = vperm.xlu0 %1543, %v1539
        %v1545 = vpop.permute.xlu0 %1544
        %v1547 = vmul.f32 %v1541, %v1545
        %s1548 = scalar_lea.vmem %s7, 8
        %v1549 = vld [vmem:[%s1548] sm:$0xff]
        %vm1550 = vcmask 64512
        %v1552 = vsel %vm1550, %v1547, 0
        %1554 = vmatprep.subr.mxu0 0.0
        %1555 = vmatpush1.msra.mxu0 %v1549
        %1556 = vmatprep.subr.mxu0 0.0
        %1557 = vmatpush1.msra.mxu0 0.0
        %1558 = vmatprep.subr.mxu0 0.0
        %1559 = vmatpush1.msra.mxu0 0.0
        %1560 = vmatprep.subr.mxu0 0.0
        %1561 = vmatpush1.msra.mxu0 0.0
        %1562 = vmatprep.subr.mxu0 0.0
        %1563 = vmatpush1.msra.mxu0 0.0
        %1564 = vmatprep.subr.mxu0 0.0
        %1565 = vmatpush1.msra.mxu0 0.0
        %1566 = vmatprep.subr.mxu0 0.0
        %1567 = vmatpush1.msra.mxu0 0.0
        %1568 = vmatprep.subr.mxu0 0.0
        %1569 = vmatpush1.msra.mxu0 0.0
        %1570 = vmatprep.subr.mxu0 0.0
        %1571 = vmatpush1.msra.mxu0 0.0
        %1572 = vmatprep.subr.mxu0 0.0
        %1573 = vmatpush1.msra.mxu0 0.0
        %1574 = vmatprep.subr.mxu0 0.0
        %1575 = vmatpush1.msra.mxu0 0.0
        %1576 = vmatprep.subr.mxu0 0.0
        %1577 = vmatpush1.msra.mxu0 0.0
        %1578 = vmatprep.subr.mxu0 0.0
        %1579 = vmatpush1.msra.mxu0 0.0
        %1580 = vmatprep.subr.mxu0 0.0
        %1581 = vmatpush1.msra.mxu0 0.0
        %1582 = vmatprep.subr.mxu0 0.0
        %1583 = vmatpush1.msra.mxu0 0.0
        %1584 = vmatprep.subr.mxu0 0.0
        %1585 = vmatpush1.msra.mxu0 0.0
        %1586 = vmatprep.subr.mxu0 0.0
        %1587 = vmatpush1.msra.mxu0 0.0
        %1588 = vmatprep.subr.mxu0 0.0
        %1589 = vmatpush1.msra.mxu0 0.0
        %1590 = vmatprep.subr.mxu0 0.0
        %1591 = vmatpush1.msra.mxu0 0.0
        %1592 = vmatprep.subr.mxu0 0.0
        %1593 = vmatpush1.msra.mxu0 0.0
        %1594 = vmatprep.subr.mxu0 0.0
        %1595 = vmatpush1.msra.mxu0 0.0
        %1596 = vmatprep.subr.mxu0 0.0
        %1597 = vmatpush1.msra.mxu0 0.0
        %1598 = vmatprep.subr.mxu0 0.0
        %1599 = vmatpush1.msra.mxu0 0.0
        %1600 = vmatprep.subr.mxu0 0.0
        %1601 = vmatpush1.msra.mxu0 0.0
        %1602 = vmatprep.subr.mxu0 0.0
        %1603 = vmatpush1.msra.mxu0 0.0
        %1604 = vmatprep.subr.mxu0 0.0
        %1605 = vmatpush1.msra.mxu0 0.0
        %1606 = vmatprep.subr.mxu0 0.0
        %1607 = vmatpush1.msra.mxu0 0.0
        %1608 = vmatprep.subr.mxu0 0.0
        %1609 = vmatpush1.msra.mxu0 0.0
        %1610 = vmatprep.subr.mxu0 0.0
        %1611 = vmatpush1.msra.mxu0 0.0
        %1612 = vmatprep.subr.mxu0 0.0
        %1613 = vmatpush1.msra.mxu0 0.0
        %1614 = vmatprep.subr.mxu0 0.0
        %1615 = vmatpush1.msra.mxu0 0.0
        %1616 = vmatprep.subr.mxu0 0.0
        %1617 = vmatpush1.msra.mxu0 0.0
        %1618 = vmatprep.mubr.f32.mxu0 0.0
        %1619 = vmatmul.mubr.f32.gmra.mrb[0].mxu0 %v1552
        %v1620 = vpop.f32.mrb[0].mxu0
        %v1621 = vadd.f32 0.0, %v1620
        %v1622 = vpop.f32.mrb[0].mxu0
        %1623 = vdwg.mxu0
        %v1625 = vsel %vm1550, %v1535, 0
        %1627 = vmatprep.subr.mxu0 0.0
        %1628 = vmatpush1.msra.mxu0 %v1536
        %1629 = vmatprep.subr.mxu0 0.0
        %1630 = vmatpush1.msra.mxu0 0.0
        %1631 = vmatprep.subr.mxu0 0.0
        %1632 = vmatpush1.msra.mxu0 0.0
        %1633 = vmatprep.subr.mxu0 0.0
        %1634 = vmatpush1.msra.mxu0 0.0
        %1635 = vmatprep.subr.mxu0 0.0
        %1636 = vmatpush1.msra.mxu0 0.0
        %1637 = vmatprep.subr.mxu0 0.0
        %1638 = vmatpush1.msra.mxu0 0.0
        %1639 = vmatprep.subr.mxu0 0.0
        %1640 = vmatpush1.msra.mxu0 0.0
        %1641 = vmatprep.subr.mxu0 0.0
        %1642 = vmatpush1.msra.mxu0 0.0
        %1643 = vmatprep.subr.mxu0 0.0
        %1644 = vmatpush1.msra.mxu0 0.0
        %1645 = vmatprep.subr.mxu0 0.0
        %1646 = vmatpush1.msra.mxu0 0.0
        %1647 = vmatprep.subr.mxu0 0.0
        %1648 = vmatpush1.msra.mxu0 0.0
        %1649 = vmatprep.subr.mxu0 0.0
        %1650 = vmatpush1.msra.mxu0 0.0
        %1651 = vmatprep.subr.mxu0 0.0
        %1652 = vmatpush1.msra.mxu0 0.0
        %1653 = vmatprep.subr.mxu0 0.0
        %1654 = vmatpush1.msra.mxu0 0.0
        %1655 = vmatprep.subr.mxu0 0.0
        %1656 = vmatpush1.msra.mxu0 0.0
        %1657 = vmatprep.subr.mxu0 0.0
        %1658 = vmatpush1.msra.mxu0 0.0
        %1659 = vmatprep.subr.mxu0 0.0
        %1660 = vmatpush1.msra.mxu0 0.0
        %1661 = vmatprep.subr.mxu0 0.0
        %1662 = vmatpush1.msra.mxu0 0.0
        %1663 = vmatprep.subr.mxu0 0.0
        %1664 = vmatpush1.msra.mxu0 0.0
        %1665 = vmatprep.subr.mxu0 0.0
        %1666 = vmatpush1.msra.mxu0 0.0
        %1667 = vmatprep.subr.mxu0 0.0
        %1668 = vmatpush1.msra.mxu0 0.0
        %1669 = vmatprep.subr.mxu0 0.0
        %1670 = vmatpush1.msra.mxu0 0.0
        %1671 = vmatprep.subr.mxu0 0.0
        %1672 = vmatpush1.msra.mxu0 0.0
        %1673 = vmatprep.subr.mxu0 0.0
        %1674 = vmatpush1.msra.mxu0 0.0
        %1675 = vmatprep.subr.mxu0 0.0
        %1676 = vmatpush1.msra.mxu0 0.0
        %1677 = vmatprep.subr.mxu0 0.0
        %1678 = vmatpush1.msra.mxu0 0.0
        %1679 = vmatprep.subr.mxu0 0.0
        %1680 = vmatpush1.msra.mxu0 0.0
        %1681 = vmatprep.subr.mxu0 0.0
        %1682 = vmatpush1.msra.mxu0 0.0
        %1683 = vmatprep.subr.mxu0 0.0
        %1684 = vmatpush1.msra.mxu0 0.0
        %1685 = vmatprep.subr.mxu0 0.0
        %1686 = vmatpush1.msra.mxu0 0.0
        %1687 = vmatprep.subr.mxu0 0.0
        %1688 = vmatpush1.msra.mxu0 0.0
        %1689 = vmatprep.subr.mxu0 0.0
        %1690 = vmatpush1.msra.mxu0 0.0
        %1691 = vmatprep.mubr.f32.mxu0 0.0
        %1692 = vmatmul.mubr.f32.gmra.mrb[0].mxu0 %v1625
        %v1693 = vpop.f32.mrb[0].mxu0
        %v1694 = vadd.f32 %v1621, %v1693
        %v1695 = vpop.f32.mrb[0].mxu0
        %1696 = vdwg.mxu0
        %s1697 = scalar_lea.vmem [#allocation4], 16
        %v1698 = vld [vmem:[%s1697] sm:$0xff]
        %v1699 = vrcp.pop %v1698
        %s1700 = scalar_lea.vmem [#allocation5], 16
        %v1701 = vld [vmem:[%s1700] sm:$0xff]
        %1703 = vset.pattern.permute.xlu0 0
        %1704 = vperm.xlu0 %1703, %v1699
        %v1705 = vpop.permute.xlu0 %1704
        %v1707 = vmul.f32 %v1701, %v1705
        %s1708 = scalar_lea.vmem %s7, 16
        %v1709 = vld [vmem:[%s1708] sm:$0xff]
        %v1711 = vsel %vm1550, %v1707, 0
        %1713 = vmatprep.subr.mxu0 0.0
        %1714 = vmatpush1.msra.mxu0 %v1709
        %1715 = vmatprep.subr.mxu0 0.0
        %1716 = vmatpush1.msra.mxu0 0.0
        %1717 = vmatprep.subr.mxu0 0.0
        %1718 = vmatpush1.msra.mxu0 0.0
        %1719 = vmatprep.subr.mxu0 0.0
        %1720 = vmatpush1.msra.mxu0 0.0
        %1721 = vmatprep.subr.mxu0 0.0
        %1722 = vmatpush1.msra.mxu0 0.0
        %1723 = vmatprep.subr.mxu0 0.0
        %1724 = vmatpush1.msra.mxu0 0.0
        %1725 = vmatprep.subr.mxu0 0.0
        %1726 = vmatpush1.msra.mxu0 0.0
        %1727 = vmatprep.subr.mxu0 0.0
        %1728 = vmatpush1.msra.mxu0 0.0
        %1729 = vmatprep.subr.mxu0 0.0
        %1730 = vmatpush1.msra.mxu0 0.0
        %1731 = vmatprep.subr.mxu0 0.0
        %1732 = vmatpush1.msra.mxu0 0.0
        %1733 = vmatprep.subr.mxu0 0.0
        %1734 = vmatpush1.msra.mxu0 0.0
        %1735 = vmatprep.subr.mxu0 0.0
        %1736 = vmatpush1.msra.mxu0 0.0
        %1737 = vmatprep.subr.mxu0 0.0
        %1738 = vmatpush1.msra.mxu0 0.0
        %1739 = vmatprep.subr.mxu0 0.0
        %1740 = vmatpush1.msra.mxu0 0.0
        %1741 = vmatprep.subr.mxu0 0.0
        %1742 = vmatpush1.msra.mxu0 0.0
        %1743 = vmatprep.subr.mxu0 0.0
        %1744 = vmatpush1.msra.mxu0 0.0
        %1745 = vmatprep.subr.mxu0 0.0
        %1746 = vmatpush1.msra.mxu0 0.0
        %1747 = vmatprep.subr.mxu0 0.0
        %1748 = vmatpush1.msra.mxu0 0.0
        %1749 = vmatprep.subr.mxu0 0.0
        %1750 = vmatpush1.msra.mxu0 0.0
        %1751 = vmatprep.subr.mxu0 0.0
        %1752 = vmatpush1.msra.mxu0 0.0
        %1753 = vmatprep.subr.mxu0 0.0
        %1754 = vmatpush1.msra.mxu0 0.0
        %1755 = vmatprep.subr.mxu0 0.0
        %1756 = vmatpush1.msra.mxu0 0.0
        %1757 = vmatprep.subr.mxu0 0.0
        %1758 = vmatpush1.msra.mxu0 0.0
        %1759 = vmatprep.subr.mxu0 0.0
        %1760 = vmatpush1.msra.mxu0 0.0
        %1761 = vmatprep.subr.mxu0 0.0
        %1762 = vmatpush1.msra.mxu0 0.0
        %1763 = vmatprep.subr.mxu0 0.0
        %1764 = vmatpush1.msra.mxu0 0.0
        %1765 = vmatprep.subr.mxu0 0.0
        %1766 = vmatpush1.msra.mxu0 0.0
        %1767 = vmatprep.subr.mxu0 0.0
        %1768 = vmatpush1.msra.mxu0 0.0
        %1769 = vmatprep.subr.mxu0 0.0
        %1770 = vmatpush1.msra.mxu0 0.0
        %1771 = vmatprep.subr.mxu0 0.0
        %1772 = vmatpush1.msra.mxu0 0.0
        %1773 = vmatprep.subr.mxu0 0.0
        %1774 = vmatpush1.msra.mxu0 0.0
        %1775 = vmatprep.subr.mxu0 0.0
        %1776 = vmatpush1.msra.mxu0 0.0
        %1777 = vmatprep.mubr.f32.mxu0 0.0
        %1778 = vmatmul.mubr.f32.gmra.mrb[0].mxu0 %v1711
        %v1779 = vpop.f32.mrb[0].mxu0
        %v1780 = vadd.f32 0.0, %v1779
        %v1781 = vpop.f32.mrb[0].mxu0
        %1782 = vdwg.mxu0
        %v1783 = vadd.f32 %v1694, %v1780
        %s1784 = scalar_lea.vmem [#allocation4], 24
        %v1785 = vld [vmem:[%s1784] sm:$0xff]
        %v1786 = vrcp.pop %v1785
        %s1787 = scalar_lea.vmem [#allocation5], 24
        %v1788 = vld [vmem:[%s1787] sm:$0xff]
        %1790 = vset.pattern.permute.xlu0 0
        %1791 = vperm.xlu0 %1790, %v1786
        %v1792 = vpop.permute.xlu0 %1791
        %v1794 = vmul.f32 %v1788, %v1792
        %s1795 = scalar_lea.vmem %s7, 24
        %v1796 = vld [vmem:[%s1795] sm:$0xff]
        %v1798 = vsel %vm1550, %v1794, 0
        %1800 = vmatprep.subr.mxu0 0.0
        %1801 = vmatpush1.msra.mxu0 %v1796
        %1802 = vmatprep.subr.mxu0 0.0
        %1803 = vmatpush1.msra.mxu0 0.0
        %1804 = vmatprep.subr.mxu0 0.0
        %1805 = vmatpush1.msra.mxu0 0.0
        %1806 = vmatprep.subr.mxu0 0.0
        %1807 = vmatpush1.msra.mxu0 0.0
        %1808 = vmatprep.subr.mxu0 0.0
        %1809 = vmatpush1.msra.mxu0 0.0
        %1810 = vmatprep.subr.mxu0 0.0
        %1811 = vmatpush1.msra.mxu0 0.0
        %1812 = vmatprep.subr.mxu0 0.0
        %1813 = vmatpush1.msra.mxu0 0.0
        %1814 = vmatprep.subr.mxu0 0.0
        %1815 = vmatpush1.msra.mxu0 0.0
        %1816 = vmatprep.subr.mxu0 0.0
        %1817 = vmatpush1.msra.mxu0 0.0
        %1818 = vmatprep.subr.mxu0 0.0
        %1819 = vmatpush1.msra.mxu0 0.0
        %1820 = vmatprep.subr.mxu0 0.0
        %1821 = vmatpush1.msra.mxu0 0.0
        %1822 = vmatprep.subr.mxu0 0.0
        %1823 = vmatpush1.msra.mxu0 0.0
        %1824 = vmatprep.subr.mxu0 0.0
        %1825 = vmatpush1.msra.mxu0 0.0
        %1826 = vmatprep.subr.mxu0 0.0
        %1827 = vmatpush1.msra.mxu0 0.0
        %1828 = vmatprep.subr.mxu0 0.0
        %1829 = vmatpush1.msra.mxu0 0.0
        %1830 = vmatprep.subr.mxu0 0.0
        %1831 = vmatpush1.msra.mxu0 0.0
        %1832 = vmatprep.subr.mxu0 0.0
        %1833 = vmatpush1.msra.mxu0 0.0
        %1834 = vmatprep.subr.mxu0 0.0
        %1835 = vmatpush1.msra.mxu0 0.0
        %1836 = vmatprep.subr.mxu0 0.0
        %1837 = vmatpush1.msra.mxu0 0.0
        %1838 = vmatprep.subr.mxu0 0.0
        %1839 = vmatpush1.msra.mxu0 0.0
        %1840 = vmatprep.subr.mxu0 0.0
        %1841 = vmatpush1.msra.mxu0 0.0
        %1842 = vmatprep.subr.mxu0 0.0
        %1843 = vmatpush1.msra.mxu0 0.0
        %1844 = vmatprep.subr.mxu0 0.0
        %1845 = vmatpush1.msra.mxu0 0.0
        %1846 = vmatprep.subr.mxu0 0.0
        %1847 = vmatpush1.msra.mxu0 0.0
        %1848 = vmatprep.subr.mxu0 0.0
        %1849 = vmatpush1.msra.mxu0 0.0
        %1850 = vmatprep.subr.mxu0 0.0
        %1851 = vmatpush1.msra.mxu0 0.0
        %1852 = vmatprep.subr.mxu0 0.0
        %1853 = vmatpush1.msra.mxu0 0.0
        %1854 = vmatprep.subr.mxu0 0.0
        %1855 = vmatpush1.msra.mxu0 0.0
        %1856 = vmatprep.subr.mxu0 0.0
        %1857 = vmatpush1.msra.mxu0 0.0
        %1858 = vmatprep.subr.mxu0 0.0
        %1859 = vmatpush1.msra.mxu0 0.0
        %1860 = vmatprep.subr.mxu0 0.0
        %1861 = vmatpush1.msra.mxu0 0.0
        %1862 = vmatprep.subr.mxu0 0.0
        %1863 = vmatpush1.msra.mxu0 0.0
        %1864 = vmatprep.mubr.f32.mxu0 0.0
        %1865 = vmatmul.mubr.f32.gmra.mrb[0].mxu0 %v1798
        %v1866 = vpop.f32.mrb[0].mxu0
        %v1867 = vadd.f32 0.0, %v1866
        %v1868 = vpop.f32.mrb[0].mxu0
        %1869 = vdwg.mxu0
        %v1870 = vadd.f32 %v1783, %v1867
        %v1871 = vld [vmem:[%s385] sm:$0xff]
        %v1872 = vadd.f32 %v1871, %v1870
        %v1873 = vld [vmem:[%s8] sm:$0x1]
        %v1875 = vlaneseq
        %v1876 = vshrl.u32 %v1875, 7
        %v1877 = vsub.s32 0, %v1876
        %v1878 = vrot.slane %v1873, %v1877
        %v1880 = vadd.f32 %v1872, %v1878
        %1881 = vst [vmem:[%s401] sm:$0xff] %v1880
      $region68: #{block_forward.2} parent=55 // pred_fallthru
        _
      %p1882 = scmp.lt.s32.totalorder %s25, 1
      %s1883 = scalar_select %p1882, %s25, 1
      %p1884 = scmp.lt.s32.totalorder %s26, 1
      %s1885 = scalar_select %p1884, %s26, 1
      %s1886 = smul.addr %s1883, 2
      %s1887 = sadd.s32 %s1885, %s1886
      %s1888 = smul.addr %s1887, 8
      %s1889 = scalar_lea.vmem %s9, %s1888
      // Predicated region
      $region69: #{block_forward.2} parent=55 // pred_check
        %p1890 = pneg %p262
      $region70: #{block_forward.2} parent=55 // pred_check_branch
        %1892 = sbr.rel (%p1890) target = $region72
      $region71: #{block_forward.2} parent=55 // pred_region
        _
      $region72: #{block_forward.2} parent=55 // pred_fallthru
        _
    $region56: #{block_forward.2} parent=5 // pred_fallthru
      _
    %p1893 = scmp.le.s32.totalorder 2, %s15
    // Predicated region
    $region73: #{block_forward.2} parent=5 // pred_check
      %p1894 = pneg %p1893
    $region74: #{block_forward.2} parent=5 // pred_check_branch
      %1896 = sbr.rel (%p1894) target = $region76
    $region75: #{block_forward.2} parent=5 // pred_region
      %s1897 = ssub.s32 %s15, 2
      // Predicated region
      $region77: #{block_forward.2} parent=75 // pred_check
        %p1898 = pneg %p268
      $region78: #{block_forward.2} parent=75 // pred_check_branch
        %1900 = sbr.rel (%p1898) target = $region80
      $region79: #{block_forward.2} parent=75 // pred_region
        %p1901 = scmp.lt.s32.totalorder %s28, 1
        %s1902 = scalar_select %p1901, %s28, 1
        %p1903 = scmp.lt.s32.totalorder %s29, 1
        %s1904 = scalar_select %p1903, %s29, 1
        %s1905 = smul.addr %s1902, 2
        %s1906 = sadd.s32 %s1904, %s1905
        %s1907 = smul.addr %s1906, 8
        %s1908 = scalar_lea.vmem %s9, %s1907
      $region80: #{block_forward.2} parent=75 // pred_fallthru
        _
    $region76: #{block_forward.2} parent=5 // pred_fallthru
      _
  $region6: #{block_forward.2} parent=0 // loop_footer
    %s19 = sadd.s32 1, %s15
  $region7: #{block_forward.2} parent=0 // loop_footer_branch
    %14 = sbr.rel target = $region3
  $region8: #{block_forward.2} parent=0 // loop_exit
    _

</llo_original>
